<compile_context>
chip_gen: v7x
topology: tpu7x:2x2x1
jax: 0.10.0
libtpu: 0.0.40
codegen_flags: <defaults>
</compile_context>

<pallas_src>
import math
from functools import partial

import numpy as np
import jax
import jax.numpy as jnp
from jax.experimental import pallas as pl
from jax.experimental.pallas import tpu as pltpu

# ---------------- configuration (small, consistent with the module) ----------
D_MODEL = 32          # hidden dim
N_HEADS = 4           # attention heads  -> head_dim = 8
N_LEVELS = 2          # feature levels
N_POINTS = 2          # sampling points per head per level
RATIO = 1.0           # deformable ratio
SPATIAL_SHAPES = ((8, 8), (4, 4))   # (H_l, W_l) per level
BATCH = 2
LEN_Q = 8


# ------------------------------ Pallas kernel --------------------------------
def _msda_kernel(qr_ref, x_ref, cf_ref, ci_ref, cm_ref, out_ref, *,
                 n_heads, n_levels, n_points, d_model, d_v):
    f32 = jnp.float32
    LP = n_levels * n_points
    HLP = n_heads * LP
    head_dim = d_v // n_heads
    NLq, K1p = qr_ref.shape            # fused batch*query rows
    NLin, K2p = x_ref.shape            # fused batch*spatial rows
    BIG = HLP * NLin                   # (sample, location)-blocked column axis

    qr = qr_ref[...]                   # (NLq, K1p)   [q | ref_pts | 1 | pad]
    x_aug = x_ref[...]                 # (NLin, K2p)  [x | 1 | keep | pad]
    cf = cf_ref[...]                   # packed f32 constants
    ci = ci_ref[...]                   # packed int32 tables

    # ---- packed-constant views (static, 8-aligned row offsets) --------------
    a1 = cf[0:K1p, 0:3 * HLP]                                   # fused projection
    wv_aug = cf[K1p:K1p + K2p, 0:d_v]                           # value proj (+bias row)
    w_out = cf[K1p + K2p:K1p + K2p + d_v, 0:d_model]            # output proj
    b_out = cf[K1p + K2p + d_v:K1p + K2p + d_v + 1, 0:d_model]  # output bias

    st_tab = ci[0:NLq, :]              # (NLq, HLP) level_start + batch*Lin
    w_tab = ci[NLq:2 * NLq, :]         # (NLq, HLP) W per sample
    h_tab = ci[2 * NLq:3 * NLq, :]     # (NLq, HLP) H per sample

    # ---- one matmul: sampling x/y pixel coords AND attention logits ---------
    proj = jnp.dot(qr, a1, preferred_element_type=f32)          # (NLq, 3*HLP)
    px = proj[:, 0:HLP]                # = ref_x*W + off_x - 0.5
    py = proj[:, HLP:2 * HLP]
    logits = proj[:, 2 * HLP:3 * HLP]

    # ---- exact per-head softmax over (level, point) --------------------------
    aw_parts = []
    for h in range(n_heads):
        lg = logits[:, h * LP:(h + 1) * LP]
        lg = lg - jnp.max(lg, axis=1, keepdims=True)
        e = jnp.exp(lg)
        aw_parts.append(e / jnp.sum(e, axis=1, keepdims=True))
    aw = jnp.concatenate(aw_parts, axis=1)                      # (NLq, HLP)

    # ---- masked value projection (one matmul) --------------------------------
    keep = x_aug[:, d_model + 1:d_model + 2]                    # (NLin, 1)
    value = jnp.dot(x_aug, wv_aug, preferred_element_type=f32) * keep   # (NLin, d_v)

    # ---- bilinear corners: indices + combined weights, all samples at once ---
    x0f = jnp.floor(px)
    y0f = jnp.floor(py)
    lx = px - x0f
    ly = py - y0f
    x0 = x0f.astype(jnp.int32)
    y0 = y0f.astype(jnp.int32)

    idx_parts = []
    w_parts = []
    for dx, dy, bw in ((0, 0, (1.0 - lx) * (1.0 - ly)),
                       (1, 0, lx * (1.0 - ly)),
                       (0, 1, (1.0 - lx) * ly),
                       (1, 1, lx * ly)):
        xi = x0 + dx
        yi = y0 + dy
        # out-of-range corners contribute 0 (zeros padding_mode); keeping the
        # validity folded into the weight also makes index aliasing harmless.
        valid = (xi >= 0) & (xi < w_tab) & (yi >= 0) & (yi < h_tab)
        idx_parts.append((st_tab + yi * w_tab + xi).astype(f32))    # flat value row
        w_parts.append(jnp.where(valid, bw * aw, 0.0))              # bilinear*attn*valid
    stacked = jnp.concatenate(idx_parts + w_parts, axis=0)          # (8*NLq, HLP)

    # ---- expand per-sample values onto the blocked column axis (ONE matmul) --
    col_i = jax.lax.broadcasted_iota(jnp.int32, (HLP, BIG), 1)
    row_i = jax.lax.broadcasted_iota(jnp.int32, (HLP, BIG), 0)
    expand = ((col_i >= row_i * NLin) &
              (col_i < (row_i + 1) * NLin)).astype(f32)             # (HLP, BIG) 0/1
    expd = jnp.dot(stacked, expand, preferred_element_type=f32)     # (8*NLq, BIG)

    # weighted one-hot gather matrix: one compare + one select per corner
    colf = cm_ref[...].astype(f32)                                  # (1, BIG): bigcol % NLin
    g = jnp.zeros((NLq, BIG), f32)
    for c in range(4):
        idx_e = expd[c * NLq:(c + 1) * NLq, :]
        w_e = expd[(4 + c) * NLq:(5 + c) * NLq, :]
        g = g + jnp.where(idx_e == colf, w_e, 0.0)

    # ---- per-head gather matmuls + head-channel select via lane mask ---------
    v_lp = jnp.concatenate([value] * LP, axis=0)                    # (LP*NLin, d_v)
    lane = jax.lax.broadcasted_iota(jnp.int32, (1, d_v), 1)
    sampled = jnp.zeros((NLq, d_v), f32)
    for h in range(n_heads):
        g_h = g[:, h * LP * NLin:(h + 1) * LP * NLin]               # 128-aligned lane slice
        res_h = jnp.dot(g_h, v_lp, preferred_element_type=f32)      # (NLq, d_v)
        hmask = ((lane >= h * head_dim) &
                 (lane < (h + 1) * head_dim)).astype(f32)
        sampled = sampled + res_h * hmask

    # ---- output projection ----------------------------------------------------
    out = jnp.dot(sampled, w_out, preferred_element_type=f32) + b_out
    out_ref[...] = out.astype(out_ref.dtype)


# ------------------------------ wrapper ---------------------------------------
def ms_deform_attn_forward(query, reference_points, input_flatten,
                           spatial_shapes, params, input_padding_mask=None):
    if reference_points.shape[-1] != 2:
        # TODO(synk): reference_points with last dim 4 (box form) not implemented.
        raise NotImplementedError("box-form reference points (last dim 4) "
                                  "are not supported")

    wv, bv, woff, boff, wattn, battn, wout, bout = params
    N, Lq, D = query.shape
    _, Lin, _ = input_flatten.shape
    L = len(spatial_shapes)
    Hh, P = N_HEADS, N_POINTS
    LP = L * P
    HLP = Hh * LP
    d_v = wv.shape[1]
    NLq, NLin = N * Lq, N * Lin
    f32 = jnp.float32

    level_start = [0]
    for (hh, ww) in spatial_shapes[:-1]:
        level_start.append(level_start[-1] + hh * ww)

    rup8 = lambda n: ((n + 7) // 8) * 8
    K1 = D + 2 * L + 1          # q | ref points | ones
    K1p = rup8(K1)
    K2 = D + 2                  # x | ones | keep
    K2p = rup8(K2)

    # ---- query / reference-point operand (batch fused into rows) -------------
    q2 = query.reshape(NLq, D).astype(f32)
    rp2 = reference_points.reshape(NLq, 2 * L).astype(f32)
    qr_parts = [q2, rp2, jnp.ones((NLq, 1), f32)]
    if K1p > K1:
        qr_parts.append(jnp.zeros((NLq, K1p - K1), f32))
    qr = jnp.concatenate(qr_parts, axis=1)                          # (NLq, K1p)

    # ---- value operand: [x | ones | keep | pad] -------------------------------
    x2 = input_flatten.reshape(NLin, D).astype(f32)
    if input_padding_mask is None:
        keep = jnp.ones((NLin, 1), f32)
    else:
        keep = 1.0 - input_padding_mask.reshape(NLin, 1).astype(f32)
    x_parts = [x2, jnp.ones((NLin, 1), f32), keep]
    if K2p > K2:
        x_parts.append(jnp.zeros((NLin, K2p - K2), f32))
    x_aug = jnp.concatenate(x_parts, axis=1)                        # (NLin, K2p)

    # ---- static per-sample tables (sample order = (head, level, point)) ------
    sample_level = [(s % LP) // P for s in range(HLP)]
    wvec = np.array([spatial_shapes[l][1] for l in sample_level], np.int32)
    hvec = np.array([spatial_shapes[l][0] for l in sample_level], np.int32)
    svec = np.array([level_start[l] for l in sample_level], np.int32)

    wx = np.zeros((2 * L, HLP), np.float32)
    hy = np.zeros((2 * L, HLP), np.float32)
    for s, l in enumerate(sample_level):
        wx[2 * l, s] = float(spatial_shapes[l][1])       # ref_x * W
        hy[2 * l + 1, s] = float(spatial_shapes[l][0])   # ref_y * H

    # ---- fused projection table A1 (K1p, 3*HLP): [px | py | logits] ----------
    woff_x = woff[:, 0::2]
    woff_y = woff[:, 1::2]
    boff_flat = boff.reshape(-1)
    boff_x = boff_flat[0::2]
    boff_y = boff_flat[1::2]
    zrows = K1p - K1

    def _col_block(wmat, mid, bias_row):
        parts = [wmat, mid, bias_row]
        if zrows:
            parts.append(jnp.zeros((zrows, HLP), f32))
        return jnp.concatenate(parts, axis=0)

    a1 = jnp.concatenate([
        _col_block(woff_x, jnp.asarray(wx), (boff_x - 0.5)[None, :]),
        _col_block(woff_y, jnp.asarray(hy), (boff_y - 0.5)[None, :]),
        _col_block(wattn, jnp.zeros((2 * L, HLP), f32), battn.reshape(1, HLP)),
    ], axis=1)                                                      # (K1p, 3*HLP)

    # ---- packed float constant slab [A1; Wv_aug; Wout; bout] ------------------
    CW = max(3 * HLP, d_v, D)

    def _padw(m):
        if m.shape[1] < CW:
            m = jnp.concatenate(
                [m, jnp.zeros((m.shape[0], CW - m.shape[1]), f32)], axis=1)
        return m

    wv_aug = jnp.concatenate(
        [wv, bv.reshape(1, d_v), jnp.zeros((K2p - D - 1, d_v), f32)], axis=0)
    cf = jnp.concatenate([_padw(a1), _padw(wv_aug), _padw(wout),
                          _padw(bout.reshape(1, D))], axis=0)
    pad_rows = rup8(cf.shape[0]) - cf.shape[0]
    if pad_rows:
        cf = jnp.concatenate([cf, jnp.zeros((pad_rows, CW), f32)], axis=0)

    # ---- packed int tables ----------------------------------------------------
    batch_off = (np.arange(NLq, dtype=np.int32) // Lq) * Lin
    st_tab = svec[None, :] + batch_off[:, None]                     # (NLq, HLP)
    ci = jnp.asarray(np.concatenate(
        [st_tab,
         np.tile(wvec[None, :], (NLq, 1)),
         np.tile(hvec[None, :], (NLq, 1))], axis=0).astype(np.int32))   # (3*NLq, HLP)

    colmod = jnp.asarray(
        np.tile(np.arange(NLin, dtype=np.int32), HLP)[None, :])     # (1, HLP*NLin)

    kernel = partial(_msda_kernel, n_heads=Hh, n_levels=L, n_points=P,
                     d_model=D, d_v=d_v)

    # Single grid step: batch/levels/heads fused (best for single-TC v5e/v6e;
    # on v7x the per-step work is sub-microsecond so the fixed prologue of a
    # second core would not pay off at these shapes).
    out = pl.pallas_call(
        kernel,
        out_shape=jax.ShapeDtypeStruct((NLq, D), f32),
        grid=(1,),
        in_specs=[
            pl.BlockSpec(qr.shape, lambda i: (0, 0)),
            pl.BlockSpec(x_aug.shape, lambda i: (0, 0)),
            pl.BlockSpec(cf.shape, lambda i: (0, 0)),
            pl.BlockSpec(ci.shape, lambda i: (0, 0)),
            pl.BlockSpec(colmod.shape, lambda i: (0, 0)),
        ],
        out_specs=pl.BlockSpec((NLq, D), lambda i: (0, 0)),
        compiler_params=pltpu.CompilerParams(
            dimension_semantics=("arbitrary",)),
    )(qr, x_aug, cf, ci, colmod)
    return out.reshape(N, Lq, D)


# ---------------- deterministic parameter init (mirrors _reset_parameters) ----
def make_params(key):
    d_v = int(D_MODEL * RATIO)
    k1, k2 = jax.random.split(key)

    # sampling_offsets: weight = 0, bias = directional grid pattern
    woff = jnp.zeros((D_MODEL, N_HEADS * N_LEVELS * N_POINTS * 2), jnp.float32)
    thetas = jnp.arange(N_HEADS, dtype=jnp.float32) * (2.0 * math.pi / N_HEADS)
    grid_init = jnp.stack([jnp.cos(thetas), jnp.sin(thetas)], -1)      # (H, 2)
    grid_init = grid_init / jnp.max(jnp.abs(grid_init), -1, keepdims=True)
    grid_init = jnp.tile(grid_init[:, None, None, :], (1, N_LEVELS, N_POINTS, 1))
    grid_init = grid_init * jnp.arange(1, N_POINTS + 1,
                                       dtype=jnp.float32)[None, None, :, None]
    boff = grid_init.reshape(1, -1)

    # attention_weights: weight = 0, bias = 0
    wattn = jnp.zeros((D_MODEL, N_HEADS * N_LEVELS * N_POINTS), jnp.float32)
    battn = jnp.zeros((1, N_HEADS * N_LEVELS * N_POINTS), jnp.float32)

    def xavier(k, fan_in, fan_out):
        bound = math.sqrt(6.0 / (fan_in + fan_out))
        return jax.random.uniform(k, (fan_in, fan_out), jnp.float32,
                                  -bound, bound)

    wv = xavier(k1, D_MODEL, d_v)
    bv = jnp.zeros((1, d_v), jnp.float32)
    wout = xavier(k2, d_v, D_MODEL)
    bout = jnp.zeros((1, D_MODEL), jnp.float32)
    return (wv, bv, woff, boff, wattn, battn, wout, bout)


# ---------------- pure-JAX reference (same semantics as the torch fallback) ---
def ref_forward(query, reference_points, input_flatten, spatial_shapes, params):
    wv, bv, woff, boff, wattn, battn, wout, bout = params
    N, Lq, _ = query.shape
    Lin = input_flatten.shape[1]
    L, Hh, P = len(spatial_shapes), N_HEADS, N_POINTS
    d_v = wv.shape[1]
    c = d_v // Hh

    value = (input_flatten @ wv + bv).reshape(N, Lin, Hh, c)
    off = (query @ woff + boff).reshape(N, Lq, Hh, L, P, 2)
    attn = (query @ wattn + battn).reshape(N, Lq, Hh, L * P)
    attn = jax.nn.softmax(attn, axis=-1).reshape(N, Lq, Hh, L, P)
    normalizer = jnp.array([[w, h] for (h, w) in spatial_shapes], jnp.float32)
    loc = (reference_points[:, :, None, :, None, :]
           + off / normalizer[None, None, None, :, None, :])

    out = jnp.zeros((N, Lq, Hh, c), jnp.float32)
    start = 0
    for l, (h, w) in enumerate(spatial_shapes):
        v_l = value[:, start:start + h * w]            # (N, hw, Hh, c)
        start += h * w
        px = loc[:, :, :, l, :, 0] * w - 0.5           # (N, Lq, Hh, P)
        py = loc[:, :, :, l, :, 1] * h - 0.5
        x0 = jnp.floor(px); y0 = jnp.floor(py)
        lx = px - x0; ly = py - y0
        x0i = x0.astype(jnp.int32); y0i = y0.astype(jnp.int32)

        samp = jnp.zeros((N, Lq, Hh, P, c), jnp.float32)
        for dy, dx, wgt in ((0, 0, (1 - lx) * (1 - ly)),
                            (0, 1, lx * (1 - ly)),
                            (1, 0, (1 - lx) * ly),
                            (1, 1, lx * ly)):
            xi = x0i + dx; yi = y0i + dy
            valid = ((xi >= 0) & (xi < w) &
                     (yi >= 0) & (yi < h)).astype(jnp.float32)
            idx = jnp.clip(yi, 0, h - 1) * w + jnp.clip(xi, 0, w - 1)
            idx_t = jnp.transpose(idx, (0, 2, 1, 3))   # (N, Hh, Lq, P)
            g = jax.vmap(                              # batch
                jax.vmap(lambda v, i: v[i],            # head
                         in_axes=(1, 0), out_axes=0),
                in_axes=(0, 0), out_axes=0
            )(v_l, idx_t)                              # (N, Hh, Lq, P, c)
            g = jnp.transpose(g, (0, 2, 1, 3, 4))      # (N, Lq, Hh, P, c)
            samp = samp + g * (wgt * valid)[..., None]
        out = out + jnp.sum(attn[:, :, :, l, :, None] * samp, axis=3)

    out = out.reshape(N, Lq, d_v)
    return out @ wout + bout


# ------------------------------ main -------------------------------------------
if __name__ == "__main__":
    key = jax.random.PRNGKey(0)
    kq, kx, kr, kp = jax.random.split(key, 4)

    Lin = sum(h * w for h, w in SPATIAL_SHAPES)
    query = jax.random.normal(kq, (BATCH, LEN_Q, D_MODEL), jnp.float32)
    input_flatten = jax.random.normal(kx, (BATCH, Lin, D_MODEL), jnp.float32)
    reference_points = jax.random.uniform(
        kr, (BATCH, LEN_Q, N_LEVELS, 2), jnp.float32)
    params = make_params(kp)

    out = ms_deform_attn_forward(query, reference_points, input_flatten,
                                 SPATIAL_SHAPES, params)
    out = jax.block_until_ready(out)

    ref = ref_forward(query, reference_points, input_flatten,
                      SPATIAL_SHAPES, params)
    assert out.shape == (BATCH, LEN_Q, D_MODEL), out.shape
    max_err = float(jnp.max(jnp.abs(out - ref)))
    assert jnp.allclose(out, ref, atol=1e-4, rtol=1e-4), max_err
    print("KERNEL_OK")
</pallas_src>

<mosaic_0001>
module attributes {stable_mosaic.version = 11 : i64} {
  func.func @_msda_kernel(%arg0: i32, %arg1: memref<16x40xf32, #tpu.memory_space<vmem>>, %arg2: memref<160x40xf32, #tpu.memory_space<vmem>>, %arg3: memref<120x48xf32, #tpu.memory_space<vmem>>, %arg4: memref<48x16xi32, #tpu.memory_space<vmem>>, %arg5: memref<1x2560xi32, #tpu.memory_space<vmem>>, %arg6: memref<16x32xf32, #tpu.memory_space<vmem>>) attributes {dimension_semantics = [#tpu.dimension_semantics<arbitrary>], iteration_bounds = array<i64: 1>, scalar_prefetch = 0 : i64, scratch_operands = 0 : i64, tpu.core_type = #tpu.core_type<tc>, window_params = [{pipeline_mode = #tpu.pipeline_mode<synchronous>, transform_indices = @transform_0, window_bounds = array<i64: 16, 40>}, {pipeline_mode = #tpu.pipeline_mode<synchronous>, transform_indices = @transform_1, window_bounds = array<i64: 160, 40>}, {pipeline_mode = #tpu.pipeline_mode<synchronous>, transform_indices = @transform_2, window_bounds = array<i64: 120, 48>}, {pipeline_mode = #tpu.pipeline_mode<synchronous>, transform_indices = @transform_3, window_bounds = array<i64: 48, 16>}, {pipeline_mode = #tpu.pipeline_mode<synchronous>, transform_indices = @transform_4, window_bounds = array<i64: 1, 2560>}, {pipeline_mode = #tpu.pipeline_mode<synchronous>, transform_indices = @transform_5, window_bounds = array<i64: 16, 32>}]} {
    %c0 = arith.constant 0 : index
    %c0_0 = arith.constant 0 : index
    %0 = vector.load %arg1[%c0, %c0_0] : memref<16x40xf32, #tpu.memory_space<vmem>>, vector<16x40xf32>
    %c0_1 = arith.constant 0 : index
    %c0_2 = arith.constant 0 : index
    %1 = vector.load %arg2[%c0_1, %c0_2] : memref<160x40xf32, #tpu.memory_space<vmem>>, vector<160x40xf32>
    %c0_3 = arith.constant 0 : index
    %c0_4 = arith.constant 0 : index
    %2 = vector.load %arg3[%c0_3, %c0_4] : memref<120x48xf32, #tpu.memory_space<vmem>>, vector<120x48xf32>
    %c0_5 = arith.constant 0 : index
    %c0_6 = arith.constant 0 : index
    %3 = vector.load %arg4[%c0_5, %c0_6] : memref<48x16xi32, #tpu.memory_space<vmem>>, vector<48x16xi32>
    %4 = vector.extract_strided_slice %2 {offsets = [0, 0], sizes = [40, 48], strides = [1, 1]} : vector<120x48xf32> to vector<40x48xf32>
    %5 = vector.extract_strided_slice %2 {offsets = [40, 0], sizes = [40, 32], strides = [1, 1]} : vector<120x48xf32> to vector<40x32xf32>
    %6 = vector.extract_strided_slice %2 {offsets = [80, 0], sizes = [32, 32], strides = [1, 1]} : vector<120x48xf32> to vector<32x32xf32>
    %7 = vector.extract_strided_slice %2 {offsets = [112, 0], sizes = [1, 32], strides = [1, 1]} : vector<120x48xf32> to vector<1x32xf32>
    %8 = vector.extract_strided_slice %3 {offsets = [0, 0], sizes = [16, 16], strides = [1, 1]} : vector<48x16xi32> to vector<16x16xi32>
    %9 = vector.extract_strided_slice %3 {offsets = [16, 0], sizes = [16, 16], strides = [1, 1]} : vector<48x16xi32> to vector<16x16xi32>
    %10 = vector.extract_strided_slice %3 {offsets = [32, 0], sizes = [16, 16], strides = [1, 1]} : vector<48x16xi32> to vector<16x16xi32>
    %cst = arith.constant dense<0.000000e+00> : vector<16x48xf32>
    %11 = tpu.matmul %0, %4, %cst {dimension_numbers = #tpu.dot_dimension_numbers<[1], [0], [0], [1], [0, 0, 1, 1], [], []>} : vector<16x40xf32>, vector<40x48xf32>, vector<16x48xf32> -> vector<16x48xf32>
    %12 = vector.extract_strided_slice %11 {offsets = [0, 0], sizes = [16, 16], strides = [1, 1]} : vector<16x48xf32> to vector<16x16xf32>
    %13 = vector.extract_strided_slice %11 {offsets = [0, 16], sizes = [16, 16], strides = [1, 1]} : vector<16x48xf32> to vector<16x16xf32>
    %14 = vector.extract_strided_slice %11 {offsets = [0, 32], sizes = [16, 16], strides = [1, 1]} : vector<16x48xf32> to vector<16x16xf32>
    %15 = vector.extract_strided_slice %14 {offsets = [0, 0], sizes = [16, 4], strides = [1, 1]} : vector<16x16xf32> to vector<16x4xf32>
    %cst_7 = arith.constant dense<0xFF800000> : vector<16xf32>
    %16 = vector.multi_reduction <maximumf>, %15, %cst_7 [1] : vector<16x4xf32> to vector<16xf32>
    %17 = vector.shape_cast %16 : vector<16xf32> to vector<16x1xf32>
    %18 = vector.broadcast %17 : vector<16x1xf32> to vector<16x4xf32>
    %19 = arith.subf %15, %18 : vector<16x4xf32>
    %20 = math.exp %19 : vector<16x4xf32>
    %cst_8 = arith.constant dense<0.000000e+00> : vector<16xf32>
    %21 = vector.multi_reduction <add>, %20, %cst_8 [1] : vector<16x4xf32> to vector<16xf32>
    %22 = vector.shape_cast %21 : vector<16xf32> to vector<16x1xf32>
    %23 = vector.broadcast %22 : vector<16x1xf32> to vector<16x4xf32>
    %24 = arith.divf %20, %23 : vector<16x4xf32>
    %25 = vector.extract_strided_slice %14 {offsets = [0, 4], sizes = [16, 4], strides = [1, 1]} : vector<16x16xf32> to vector<16x4xf32>
    %cst_9 = arith.constant dense<0xFF800000> : vector<16xf32>
    %26 = vector.multi_reduction <maximumf>, %25, %cst_9 [1] : vector<16x4xf32> to vector<16xf32>
    %27 = vector.shape_cast %26 : vector<16xf32> to vector<16x1xf32>
    %28 = vector.broadcast %27 : vector<16x1xf32> to vector<16x4xf32>
    %29 = arith.subf %25, %28 : vector<16x4xf32>
    %30 = math.exp %29 : vector<16x4xf32>
    %cst_10 = arith.constant dense<0.000000e+00> : vector<16xf32>
    %31 = vector.multi_reduction <add>, %30, %cst_10 [1] : vector<16x4xf32> to vector<16xf32>
    %32 = vector.shape_cast %31 : vector<16xf32> to vector<16x1xf32>
    %33 = vector.broadcast %32 : vector<16x1xf32> to vector<16x4xf32>
    %34 = arith.divf %30, %33 : vector<16x4xf32>
    %35 = vector.extract_strided_slice %14 {offsets = [0, 8], sizes = [16, 4], strides = [1, 1]} : vector<16x16xf32> to vector<16x4xf32>
    %cst_11 = arith.constant dense<0xFF800000> : vector<16xf32>
    %36 = vector.multi_reduction <maximumf>, %35, %cst_11 [1] : vector<16x4xf32> to vector<16xf32>
    %37 = vector.shape_cast %36 : vector<16xf32> to vector<16x1xf32>
    %38 = vector.broadcast %37 : vector<16x1xf32> to vector<16x4xf32>
    %39 = arith.subf %35, %38 : vector<16x4xf32>
    %40 = math.exp %39 : vector<16x4xf32>
    %cst_12 = arith.constant dense<0.000000e+00> : vector<16xf32>
    %41 = vector.multi_reduction <add>, %40, %cst_12 [1] : vector<16x4xf32> to vector<16xf32>
    %42 = vector.shape_cast %41 : vector<16xf32> to vector<16x1xf32>
    %43 = vector.broadcast %42 : vector<16x1xf32> to vector<16x4xf32>
    %44 = arith.divf %40, %43 : vector<16x4xf32>
    %45 = vector.extract_strided_slice %14 {offsets = [0, 12], sizes = [16, 4], strides = [1, 1]} : vector<16x16xf32> to vector<16x4xf32>
    %cst_13 = arith.constant dense<0xFF800000> : vector<16xf32>
    %46 = vector.multi_reduction <maximumf>, %45, %cst_13 [1] : vector<16x4xf32> to vector<16xf32>
    %47 = vector.shape_cast %46 : vector<16xf32> to vector<16x1xf32>
    %48 = vector.broadcast %47 : vector<16x1xf32> to vector<16x4xf32>
    %49 = arith.subf %45, %48 : vector<16x4xf32>
    %50 = math.exp %49 : vector<16x4xf32>
    %cst_14 = arith.constant dense<0.000000e+00> : vector<16xf32>
    %51 = vector.multi_reduction <add>, %50, %cst_14 [1] : vector<16x4xf32> to vector<16xf32>
    %52 = vector.shape_cast %51 : vector<16xf32> to vector<16x1xf32>
    %53 = vector.broadcast %52 : vector<16x1xf32> to vector<16x4xf32>
    %54 = arith.divf %50, %53 : vector<16x4xf32>
    %55 = tpu.concatenate %24, %34, %44, %54 in 1 : vector<16x4xf32>, vector<16x4xf32>, vector<16x4xf32>, vector<16x4xf32> -> vector<16x16xf32>
    %56 = vector.extract_strided_slice %1 {offsets = [0, 33], sizes = [160, 1], strides = [1, 1]} : vector<160x40xf32> to vector<160x1xf32>
    %cst_15 = arith.constant dense<0.000000e+00> : vector<160x32xf32>
    %57 = tpu.matmul %1, %5, %cst_15 {dimension_numbers = #tpu.dot_dimension_numbers<[1], [0], [0], [1], [0, 0, 1, 1], [], []>} : vector<160x40xf32>, vector<40x32xf32>, vector<160x32xf32> -> vector<160x32xf32>
    %58 = vector.broadcast %56 : vector<160x1xf32> to vector<160x32xf32>
    %59 = arith.mulf %57, %58 : vector<160x32xf32>
    %60 = math.floor %12 : vector<16x16xf32>
    %61 = math.floor %13 : vector<16x16xf32>
    %62 = arith.subf %12, %60 : vector<16x16xf32>
    %63 = arith.subf %13, %61 : vector<16x16xf32>
    %64 = arith.fptosi %60 : vector<16x16xf32> to vector<16x16xi32>
    %65 = arith.fptosi %61 : vector<16x16xf32> to vector<16x16xi32>
    %cst_16 = arith.constant 1.000000e+00 : f32
    %66 = vector.broadcast %cst_16 : f32 to vector<16x16xf32>
    %67 = arith.subf %66, %62 : vector<16x16xf32>
    %cst_17 = arith.constant 1.000000e+00 : f32
    %68 = vector.broadcast %cst_17 : f32 to vector<16x16xf32>
    %69 = arith.subf %68, %63 : vector<16x16xf32>
    %70 = arith.mulf %67, %69 : vector<16x16xf32>
    %cst_18 = arith.constant 1.000000e+00 : f32
    %71 = vector.broadcast %cst_18 : f32 to vector<16x16xf32>
    %72 = arith.subf %71, %63 : vector<16x16xf32>
    %73 = arith.mulf %62, %72 : vector<16x16xf32>
    %cst_19 = arith.constant 1.000000e+00 : f32
    %74 = vector.broadcast %cst_19 : f32 to vector<16x16xf32>
    %75 = arith.subf %74, %62 : vector<16x16xf32>
    %76 = arith.mulf %75, %63 : vector<16x16xf32>
    %77 = arith.mulf %62, %63 : vector<16x16xf32>
    %c0_i32 = arith.constant 0 : i32
    %78 = vector.broadcast %c0_i32 : i32 to vector<16x16xi32>
    %79 = arith.addi %64, %78 : vector<16x16xi32>
    %c0_i32_20 = arith.constant 0 : i32
    %80 = vector.broadcast %c0_i32_20 : i32 to vector<16x16xi32>
    %81 = arith.addi %65, %80 : vector<16x16xi32>
    %c0_i32_21 = arith.constant 0 : i32
    %82 = vector.broadcast %c0_i32_21 : i32 to vector<16x16xi32>
    %83 = arith.cmpi sge, %79, %82 : vector<16x16xi32>
    %84 = arith.cmpi slt, %79, %9 : vector<16x16xi32>
    %85 = arith.andi %83, %84 : vector<16x16xi1>
    %c0_i32_22 = arith.constant 0 : i32
    %86 = vector.broadcast %c0_i32_22 : i32 to vector<16x16xi32>
    %87 = arith.cmpi sge, %81, %86 : vector<16x16xi32>
    %88 = arith.andi %85, %87 : vector<16x16xi1>
    %89 = arith.cmpi slt, %81, %10 : vector<16x16xi32>
    %90 = arith.andi %88, %89 : vector<16x16xi1>
    %91 = arith.muli %81, %9 : vector<16x16xi32>
    %92 = arith.addi %8, %91 : vector<16x16xi32>
    %93 = arith.addi %92, %79 : vector<16x16xi32>
    %94 = arith.sitofp %93 : vector<16x16xi32> to vector<16x16xf32>
    %95 = arith.mulf %70, %55 : vector<16x16xf32>
    %cst_23 = arith.constant 0.000000e+00 : f32
    %96 = vector.broadcast %cst_23 : f32 to vector<16x16xf32>
    %97 = arith.select %90, %95, %96 : vector<16x16xi1>, vector<16x16xf32>
    %c1_i32 = arith.constant 1 : i32
    %98 = vector.broadcast %c1_i32 : i32 to vector<16x16xi32>
    %99 = arith.addi %64, %98 : vector<16x16xi32>
    %c0_i32_24 = arith.constant 0 : i32
    %100 = vector.broadcast %c0_i32_24 : i32 to vector<16x16xi32>
    %101 = arith.addi %65, %100 : vector<16x16xi32>
    %c0_i32_25 = arith.constant 0 : i32
    %102 = vector.broadcast %c0_i32_25 : i32 to vector<16x16xi32>
    %103 = arith.cmpi sge, %99, %102 : vector<16x16xi32>
    %104 = arith.cmpi slt, %99, %9 : vector<16x16xi32>
    %105 = arith.andi %103, %104 : vector<16x16xi1>
    %c0_i32_26 = arith.constant 0 : i32
    %106 = vector.broadcast %c0_i32_26 : i32 to vector<16x16xi32>
    %107 = arith.cmpi sge, %101, %106 : vector<16x16xi32>
    %108 = arith.andi %105, %107 : vector<16x16xi1>
    %109 = arith.cmpi slt, %101, %10 : vector<16x16xi32>
    %110 = arith.andi %108, %109 : vector<16x16xi1>
    %111 = arith.muli %101, %9 : vector<16x16xi32>
    %112 = arith.addi %8, %111 : vector<16x16xi32>
    %113 = arith.addi %112, %99 : vector<16x16xi32>
    %114 = arith.sitofp %113 : vector<16x16xi32> to vector<16x16xf32>
    %115 = arith.mulf %73, %55 : vector<16x16xf32>
    %cst_27 = arith.constant 0.000000e+00 : f32
    %116 = vector.broadcast %cst_27 : f32 to vector<16x16xf32>
    %117 = arith.select %110, %115, %116 : vector<16x16xi1>, vector<16x16xf32>
    %c0_i32_28 = arith.constant 0 : i32
    %118 = vector.broadcast %c0_i32_28 : i32 to vector<16x16xi32>
    %119 = arith.addi %64, %118 : vector<16x16xi32>
    %c1_i32_29 = arith.constant 1 : i32
    %120 = vector.broadcast %c1_i32_29 : i32 to vector<16x16xi32>
    %121 = arith.addi %65, %120 : vector<16x16xi32>
    %c0_i32_30 = arith.constant 0 : i32
    %122 = vector.broadcast %c0_i32_30 : i32 to vector<16x16xi32>
    %123 = arith.cmpi sge, %119, %122 : vector<16x16xi32>
    %124 = arith.cmpi slt, %119, %9 : vector<16x16xi32>
    %125 = arith.andi %123, %124 : vector<16x16xi1>
    %c0_i32_31 = arith.constant 0 : i32
    %126 = vector.broadcast %c0_i32_31 : i32 to vector<16x16xi32>
    %127 = arith.cmpi sge, %121, %126 : vector<16x16xi32>
    %128 = arith.andi %125, %127 : vector<16x16xi1>
    %129 = arith.cmpi slt, %121, %10 : vector<16x16xi32>
    %130 = arith.andi %128, %129 : vector<16x16xi1>
    %131 = arith.muli %121, %9 : vector<16x16xi32>
    %132 = arith.addi %8, %131 : vector<16x16xi32>
    %133 = arith.addi %132, %119 : vector<16x16xi32>
    %134 = arith.sitofp %133 : vector<16x16xi32> to vector<16x16xf32>
    %135 = arith.mulf %76, %55 : vector<16x16xf32>
    %cst_32 = arith.constant 0.000000e+00 : f32
    %136 = vector.broadcast %cst_32 : f32 to vector<16x16xf32>
    %137 = arith.select %130, %135, %136 : vector<16x16xi1>, vector<16x16xf32>
    %c1_i32_33 = arith.constant 1 : i32
    %138 = vector.broadcast %c1_i32_33 : i32 to vector<16x16xi32>
    %139 = arith.addi %64, %138 : vector<16x16xi32>
    %c1_i32_34 = arith.constant 1 : i32
    %140 = vector.broadcast %c1_i32_34 : i32 to vector<16x16xi32>
    %141 = arith.addi %65, %140 : vector<16x16xi32>
    %c0_i32_35 = arith.constant 0 : i32
    %142 = vector.broadcast %c0_i32_35 : i32 to vector<16x16xi32>
    %143 = arith.cmpi sge, %139, %142 : vector<16x16xi32>
    %144 = arith.cmpi slt, %139, %9 : vector<16x16xi32>
    %145 = arith.andi %143, %144 : vector<16x16xi1>
    %c0_i32_36 = arith.constant 0 : i32
    %146 = vector.broadcast %c0_i32_36 : i32 to vector<16x16xi32>
    %147 = arith.cmpi sge, %141, %146 : vector<16x16xi32>
    %148 = arith.andi %145, %147 : vector<16x16xi1>
    %149 = arith.cmpi slt, %141, %10 : vector<16x16xi32>
    %150 = arith.andi %148, %149 : vector<16x16xi1>
    %151 = arith.muli %141, %9 : vector<16x16xi32>
    %152 = arith.addi %8, %151 : vector<16x16xi32>
    %153 = arith.addi %152, %139 : vector<16x16xi32>
    %154 = arith.sitofp %153 : vector<16x16xi32> to vector<16x16xf32>
    %155 = arith.mulf %77, %55 : vector<16x16xf32>
    %cst_37 = arith.constant 0.000000e+00 : f32
    %156 = vector.broadcast %cst_37 : f32 to vector<16x16xf32>
    %157 = arith.select %150, %155, %156 : vector<16x16xi1>, vector<16x16xf32>
    %158 = tpu.concatenate %94, %114, %134, %154, %97, %117, %137, %157 in 0 : vector<16x16xf32>, vector<16x16xf32>, vector<16x16xf32>, vector<16x16xf32>, vector<16x16xf32>, vector<16x16xf32>, vector<16x16xf32>, vector<16x16xf32> -> vector<128x16xf32>
    %159 = tpu.iota {dimensions = array<i32: 1>} : vector<16x2560xi32>
    %160 = tpu.iota {dimensions = array<i32: 0>} : vector<16x2560xi32>
    %c160_i32 = arith.constant 160 : i32
    %161 = vector.broadcast %c160_i32 : i32 to vector<16x2560xi32>
    %162 = arith.muli %160, %161 : vector<16x2560xi32>
    %163 = arith.cmpi sge, %159, %162 : vector<16x2560xi32>
    %c1_i32_38 = arith.constant 1 : i32
    %164 = vector.broadcast %c1_i32_38 : i32 to vector<16x2560xi32>
    %165 = arith.addi %160, %164 : vector<16x2560xi32>
    %c160_i32_39 = arith.constant 160 : i32
    %166 = vector.broadcast %c160_i32_39 : i32 to vector<16x2560xi32>
    %167 = arith.muli %165, %166 : vector<16x2560xi32>
    %168 = arith.cmpi slt, %159, %167 : vector<16x2560xi32>
    %169 = arith.andi %163, %168 : vector<16x2560xi1>
    %170 = arith.extui %169 : vector<16x2560xi1> to vector<16x2560xi32>
    %171 = arith.sitofp %170 : vector<16x2560xi32> to vector<16x2560xf32>
    %cst_40 = arith.constant dense<0.000000e+00> : vector<128x2560xf32>
    %172 = tpu.matmul %158, %171, %cst_40 {dimension_numbers = #tpu.dot_dimension_numbers<[1], [0], [0], [1], [0, 0, 1, 1], [], []>} : vector<128x16xf32>, vector<16x2560xf32>, vector<128x2560xf32> -> vector<128x2560xf32>
    %c0_41 = arith.constant 0 : index
    %c0_42 = arith.constant 0 : index
    %173 = vector.load %arg5[%c0_41, %c0_42] : memref<1x2560xi32, #tpu.memory_space<vmem>>, vector<1x2560xi32>
    %174 = arith.sitofp %173 : vector<1x2560xi32> to vector<1x2560xf32>
    %cst_43 = arith.constant 0.000000e+00 : f32
    %175 = vector.broadcast %cst_43 : f32 to vector<16x2560xf32>
    %176 = vector.extract_strided_slice %172 {offsets = [0, 0], sizes = [16, 2560], strides = [1, 1]} : vector<128x2560xf32> to vector<16x2560xf32>
    %177 = vector.extract_strided_slice %172 {offsets = [64, 0], sizes = [16, 2560], strides = [1, 1]} : vector<128x2560xf32> to vector<16x2560xf32>
    %178 = vector.broadcast %174 : vector<1x2560xf32> to vector<16x2560xf32>
    %179 = arith.cmpf oeq, %176, %178 : vector<16x2560xf32>
    %cst_44 = arith.constant 0.000000e+00 : f32
    %180 = vector.broadcast %cst_44 : f32 to vector<16x2560xf32>
    %181 = arith.select %179, %177, %180 : vector<16x2560xi1>, vector<16x2560xf32>
    %182 = arith.addf %175, %181 : vector<16x2560xf32>
    %183 = vector.extract_strided_slice %172 {offsets = [16, 0], sizes = [16, 2560], strides = [1, 1]} : vector<128x2560xf32> to vector<16x2560xf32>
    %184 = vector.extract_strided_slice %172 {offsets = [80, 0], sizes = [16, 2560], strides = [1, 1]} : vector<128x2560xf32> to vector<16x2560xf32>
    %185 = vector.broadcast %174 : vector<1x2560xf32> to vector<16x2560xf32>
    %186 = arith.cmpf oeq, %183, %185 : vector<16x2560xf32>
    %cst_45 = arith.constant 0.000000e+00 : f32
    %187 = vector.broadcast %cst_45 : f32 to vector<16x2560xf32>
    %188 = arith.select %186, %184, %187 : vector<16x2560xi1>, vector<16x2560xf32>
    %189 = arith.addf %182, %188 : vector<16x2560xf32>
    %190 = vector.extract_strided_slice %172 {offsets = [32, 0], sizes = [16, 2560], strides = [1, 1]} : vector<128x2560xf32> to vector<16x2560xf32>
    %191 = vector.extract_strided_slice %172 {offsets = [96, 0], sizes = [16, 2560], strides = [1, 1]} : vector<128x2560xf32> to vector<16x2560xf32>
    %192 = vector.broadcast %174 : vector<1x2560xf32> to vector<16x2560xf32>
    %193 = arith.cmpf oeq, %190, %192 : vector<16x2560xf32>
    %cst_46 = arith.constant 0.000000e+00 : f32
    %194 = vector.broadcast %cst_46 : f32 to vector<16x2560xf32>
    %195 = arith.select %193, %191, %194 : vector<16x2560xi1>, vector<16x2560xf32>
    %196 = arith.addf %189, %195 : vector<16x2560xf32>
    %197 = vector.extract_strided_slice %172 {offsets = [48, 0], sizes = [16, 2560], strides = [1, 1]} : vector<128x2560xf32> to vector<16x2560xf32>
    %198 = vector.extract_strided_slice %172 {offsets = [112, 0], sizes = [16, 2560], strides = [1, 1]} : vector<128x2560xf32> to vector<16x2560xf32>
    %199 = vector.broadcast %174 : vector<1x2560xf32> to vector<16x2560xf32>
    %200 = arith.cmpf oeq, %197, %199 : vector<16x2560xf32>
    %cst_47 = arith.constant 0.000000e+00 : f32
    %201 = vector.broadcast %cst_47 : f32 to vector<16x2560xf32>
    %202 = arith.select %200, %198, %201 : vector<16x2560xi1>, vector<16x2560xf32>
    %203 = arith.addf %196, %202 : vector<16x2560xf32>
    %204 = tpu.concatenate %59, %59, %59, %59 in 0 : vector<160x32xf32>, vector<160x32xf32>, vector<160x32xf32>, vector<160x32xf32> -> vector<640x32xf32>
    %205 = tpu.iota {dimensions = array<i32: 1>} : vector<1x32xi32>
    %cst_48 = arith.constant 0.000000e+00 : f32
    %206 = vector.broadcast %cst_48 : f32 to vector<16x32xf32>
    %207 = vector.extract_strided_slice %203 {offsets = [0, 0], sizes = [16, 640], strides = [1, 1]} : vector<16x2560xf32> to vector<16x640xf32>
    %cst_49 = arith.constant dense<0.000000e+00> : vector<16x32xf32>
    %208 = tpu.matmul %207, %204, %cst_49 {dimension_numbers = #tpu.dot_dimension_numbers<[1], [0], [0], [1], [0, 0, 1, 1], [], []>} : vector<16x640xf32>, vector<640x32xf32>, vector<16x32xf32> -> vector<16x32xf32>
    %c0_i32_50 = arith.constant 0 : i32
    %209 = vector.broadcast %c0_i32_50 : i32 to vector<1x32xi32>
    %210 = arith.cmpi sge, %205, %209 : vector<1x32xi32>
    %c8_i32 = arith.constant 8 : i32
    %211 = vector.broadcast %c8_i32 : i32 to vector<1x32xi32>
    %212 = arith.cmpi slt, %205, %211 : vector<1x32xi32>
    %213 = arith.andi %210, %212 : vector<1x32xi1>
    %214 = arith.extui %213 : vector<1x32xi1> to vector<1x32xi32>
    %215 = arith.sitofp %214 : vector<1x32xi32> to vector<1x32xf32>
    %216 = vector.broadcast %215 : vector<1x32xf32> to vector<16x32xf32>
    %217 = arith.mulf %208, %216 : vector<16x32xf32>
    %218 = arith.addf %206, %217 : vector<16x32xf32>
    %219 = vector.extract_strided_slice %203 {offsets = [0, 640], sizes = [16, 640], strides = [1, 1]} : vector<16x2560xf32> to vector<16x640xf32>
    %cst_51 = arith.constant dense<0.000000e+00> : vector<16x32xf32>
    %220 = tpu.matmul %219, %204, %cst_51 {dimension_numbers = #tpu.dot_dimension_numbers<[1], [0], [0], [1], [0, 0, 1, 1], [], []>} : vector<16x640xf32>, vector<640x32xf32>, vector<16x32xf32> -> vector<16x32xf32>
    %c8_i32_52 = arith.constant 8 : i32
    %221 = vector.broadcast %c8_i32_52 : i32 to vector<1x32xi32>
    %222 = arith.cmpi sge, %205, %221 : vector<1x32xi32>
    %c16_i32 = arith.constant 16 : i32
    %223 = vector.broadcast %c16_i32 : i32 to vector<1x32xi32>
    %224 = arith.cmpi slt, %205, %223 : vector<1x32xi32>
    %225 = arith.andi %222, %224 : vector<1x32xi1>
    %226 = arith.extui %225 : vector<1x32xi1> to vector<1x32xi32>
    %227 = arith.sitofp %226 : vector<1x32xi32> to vector<1x32xf32>
    %228 = vector.broadcast %227 : vector<1x32xf32> to vector<16x32xf32>
    %229 = arith.mulf %220, %228 : vector<16x32xf32>
    %230 = arith.addf %218, %229 : vector<16x32xf32>
    %231 = vector.extract_strided_slice %203 {offsets = [0, 1280], sizes = [16, 640], strides = [1, 1]} : vector<16x2560xf32> to vector<16x640xf32>
    %cst_53 = arith.constant dense<0.000000e+00> : vector<16x32xf32>
    %232 = tpu.matmul %231, %204, %cst_53 {dimension_numbers = #tpu.dot_dimension_numbers<[1], [0], [0], [1], [0, 0, 1, 1], [], []>} : vector<16x640xf32>, vector<640x32xf32>, vector<16x32xf32> -> vector<16x32xf32>
    %c16_i32_54 = arith.constant 16 : i32
    %233 = vector.broadcast %c16_i32_54 : i32 to vector<1x32xi32>
    %234 = arith.cmpi sge, %205, %233 : vector<1x32xi32>
    %c24_i32 = arith.constant 24 : i32
    %235 = vector.broadcast %c24_i32 : i32 to vector<1x32xi32>
    %236 = arith.cmpi slt, %205, %235 : vector<1x32xi32>
    %237 = arith.andi %234, %236 : vector<1x32xi1>
    %238 = arith.extui %237 : vector<1x32xi1> to vector<1x32xi32>
    %239 = arith.sitofp %238 : vector<1x32xi32> to vector<1x32xf32>
    %240 = vector.broadcast %239 : vector<1x32xf32> to vector<16x32xf32>
    %241 = arith.mulf %232, %240 : vector<16x32xf32>
    %242 = arith.addf %230, %241 : vector<16x32xf32>
    %243 = vector.extract_strided_slice %203 {offsets = [0, 1920], sizes = [16, 640], strides = [1, 1]} : vector<16x2560xf32> to vector<16x640xf32>
    %cst_55 = arith.constant dense<0.000000e+00> : vector<16x32xf32>
    %244 = tpu.matmul %243, %204, %cst_55 {dimension_numbers = #tpu.dot_dimension_numbers<[1], [0], [0], [1], [0, 0, 1, 1], [], []>} : vector<16x640xf32>, vector<640x32xf32>, vector<16x32xf32> -> vector<16x32xf32>
    %c24_i32_56 = arith.constant 24 : i32
    %245 = vector.broadcast %c24_i32_56 : i32 to vector<1x32xi32>
    %246 = arith.cmpi sge, %205, %245 : vector<1x32xi32>
    %c32_i32 = arith.constant 32 : i32
    %247 = vector.broadcast %c32_i32 : i32 to vector<1x32xi32>
    %248 = arith.cmpi slt, %205, %247 : vector<1x32xi32>
    %249 = arith.andi %246, %248 : vector<1x32xi1>
    %250 = arith.extui %249 : vector<1x32xi1> to vector<1x32xi32>
    %251 = arith.sitofp %250 : vector<1x32xi32> to vector<1x32xf32>
    %252 = vector.broadcast %251 : vector<1x32xf32> to vector<16x32xf32>
    %253 = arith.mulf %244, %252 : vector<16x32xf32>
    %254 = arith.addf %242, %253 : vector<16x32xf32>
    %cst_57 = arith.constant dense<0.000000e+00> : vector<16x32xf32>
    %255 = tpu.matmul %254, %6, %cst_57 {dimension_numbers = #tpu.dot_dimension_numbers<[1], [0], [0], [1], [0, 0, 1, 1], [], []>} : vector<16x32xf32>, vector<32x32xf32>, vector<16x32xf32> -> vector<16x32xf32>
    %256 = vector.broadcast %7 : vector<1x32xf32> to vector<16x32xf32>
    %257 = arith.addf %255, %256 : vector<16x32xf32>
    %c0_58 = arith.constant 0 : index
    %c0_59 = arith.constant 0 : index
    %258 = vector.load %arg6[%c0_58, %c0_59] : memref<16x32xf32, #tpu.memory_space<vmem>>, vector<16x32xf32>
    tpu.vector_store %arg6[%c0_58, %c0_59], %257 {strides = array<i32>} : memref<16x32xf32, #tpu.memory_space<vmem>>, vector<16x32xf32>,
    return
  }
  func.func @transform_0(%arg0: i32) -> (i32, i32) {
    %c0_i32 = arith.constant 0 : i32
    %c0_i32_0 = arith.constant 0 : i32
    %c0_i32_1 = arith.constant 0 : i32
    return %c0_i32, %c0_i32_0 : i32, i32
  }
  func.func @transform_1(%arg0: i32) -> (i32, i32) {
    %c0_i32 = arith.constant 0 : i32
    %c0_i32_0 = arith.constant 0 : i32
    %c0_i32_1 = arith.constant 0 : i32
    return %c0_i32, %c0_i32_0 : i32, i32
  }
  func.func @transform_2(%arg0: i32) -> (i32, i32) {
    %c0_i32 = arith.constant 0 : i32
    %c0_i32_0 = arith.constant 0 : i32
    %c0_i32_1 = arith.constant 0 : i32
    return %c0_i32, %c0_i32_0 : i32, i32
  }
  func.func @transform_3(%arg0: i32) -> (i32, i32) {
    %c0_i32 = arith.constant 0 : i32
    %c0_i32_0 = arith.constant 0 : i32
    %c0_i32_1 = arith.constant 0 : i32
    return %c0_i32, %c0_i32_0 : i32, i32
  }
  func.func @transform_4(%arg0: i32) -> (i32, i32) {
    %c0_i32 = arith.constant 0 : i32
    %c0_i32_0 = arith.constant 0 : i32
    %c0_i32_1 = arith.constant 0 : i32
    return %c0_i32, %c0_i32_0 : i32, i32
  }
  func.func @transform_5(%arg0: i32) -> (i32, i32) {
    %c0_i32 = arith.constant 0 : i32
    %c0_i32_0 = arith.constant 0 : i32
    %c0_i32_1 = arith.constant 0 : i32
    return %c0_i32, %c0_i32_0 : i32, i32
  }
}

</mosaic_0001>

<llo_original>
// kernel: tpu_custom_call.1
$region0: #{tpu_custom_call.1}
  #allocation0 [shape = 'u32[]', space=smem, size = 0x4, offset = 0x4, fixed_abs, tag = 'smem constant byte address 0x4 - core index']
  #allocation1 [shape = 'u32[144,128]{1,0:T(1,128)}', space=vmem, size = 0x12000, scoped, tag = 'internal scratch']
  %s0 = inlined_call_operand.vmem [shape: f32[16,40], index: 0, kind: input, shape index: {}]
  %s1 = inlined_call_operand.vmem [shape: f32[160,40], index: 1, kind: input, shape index: {}]
  %s2 = inlined_call_operand.vmem [shape: f32[120,48], index: 2, kind: input, shape index: {}]
  %s3 = inlined_call_operand.vmem [shape: s32[48,16], index: 3, kind: input, shape index: {}]
  %s4 = inlined_call_operand.vmem [shape: s32[1,2560], index: 4, kind: input, shape index: {}]
  %s5 = inlined_call_operand.hbm [shape: f32[16,32], index: 5, kind: output, shape index: {}]
  %s6 = sld [smem:[#allocation0]]
  $region30: #{tpu_custom_call.1} parent=0
    _
  %s8 = ssub.s32 1, %s6
  %s9 = scalar_select 0, %s8, %s6
  $region1: #{tpu_custom_call.1} parent=0
    #allocation2 [shape = 'u8[8192]{0}', space=vmem, size = 0x2000, scoped, tag = 'output window, operand 0, single buffered']
    #allocation3 [shape = 's32[1]{0}', space=sflag, size = 0x4, scoped, tag = 'scoped memory for tpu_custom_call.1']
    %10 = vsyncpa [#allocation3], 0
    // Predicated region
    $region2: #{tpu_custom_call.1} parent=1 // pred_check
      _
    $region3: #{tpu_custom_call.1} parent=1 // pred_check_branch
      %12 = sbr.rel (0) target = $region5
    $region4: #{tpu_custom_call.1} parent=1 // pred_region
      _
    $region5: #{tpu_custom_call.1} parent=1 // pred_fallthru
      _
    // Predicated region
    $region6: #{tpu_custom_call.1} parent=1 // pred_check
      _
    $region7: #{tpu_custom_call.1} parent=1 // pred_check_branch
      %14 = sbr.rel (0) target = $region9
    $region8: #{tpu_custom_call.1} parent=1 // pred_region
      _
    $region9: #{tpu_custom_call.1} parent=1 // pred_fallthru
      _
    // Predicated region
    $region10: #{tpu_custom_call.1} parent=1 // pred_check
      _
    $region11: #{tpu_custom_call.1} parent=1 // pred_check_branch
      %16 = sbr.rel (0) target = $region13
    $region12: #{tpu_custom_call.1} parent=1 // pred_region
      _
    $region13: #{tpu_custom_call.1} parent=1 // pred_fallthru
      _
    // Predicated region
    $region14: #{tpu_custom_call.1} parent=1 // pred_check
      _
    $region15: #{tpu_custom_call.1} parent=1 // pred_check_branch
      %18 = sbr.rel (0) target = $region17
    $region16: #{tpu_custom_call.1} parent=1 // pred_region
      _
    $region17: #{tpu_custom_call.1} parent=1 // pred_fallthru
      _
    // Predicated region
    $region18: #{tpu_custom_call.1} parent=1 // pred_check
      _
    $region19: #{tpu_custom_call.1} parent=1 // pred_check_branch
      %20 = sbr.rel (0) target = $region21
    $region20: #{tpu_custom_call.1} parent=1 // pred_region
      _
    $region21: #{tpu_custom_call.1} parent=1 // pred_fallthru
      _
    %v21 = vld [vmem:[%s0] sm:$0xff]
    %v22 = vld [vmem:[%s0 + $0x8] sm:$0xff]
    %v23 = vld [vmem:[%s1] sm:$0xff]
    %v24 = vld [vmem:[%s1 + $0x8] sm:$0xff]
    %v25 = vld [vmem:[%s1 + $0x10] sm:$0xff]
    %v26 = vld [vmem:[%s1 + $0x18] sm:$0xff]
    %v27 = vld [vmem:[%s1 + $0x20] sm:$0xff]
    %v28 = vld [vmem:[%s1 + $0x28] sm:$0xff]
    %v29 = vld [vmem:[%s1 + $0x30] sm:$0xff]
    %v30 = vld [vmem:[%s1 + $0x38] sm:$0xff]
    %v31 = vld [vmem:[%s1 + $0x40] sm:$0xff]
    %v32 = vld [vmem:[%s1 + $0x48] sm:$0xff]
    %v33 = vld [vmem:[%s1 + $0x50] sm:$0xff]
    %v34 = vld [vmem:[%s1 + $0x58] sm:$0xff]
    %v35 = vld [vmem:[%s1 + $0x60] sm:$0xff]
    %v36 = vld [vmem:[%s1 + $0x68] sm:$0xff]
    %v37 = vld [vmem:[%s1 + $0x70] sm:$0xff]
    %v38 = vld [vmem:[%s1 + $0x78] sm:$0xff]
    %v39 = vld [vmem:[%s1 + $0x80] sm:$0xff]
    %v40 = vld [vmem:[%s1 + $0x88] sm:$0xff]
    %v41 = vld [vmem:[%s1 + $0x90] sm:$0xff]
    %v42 = vld [vmem:[%s1 + $0x98] sm:$0xff]
    %v43 = vld [vmem:[%s2] sm:$0xff]
    %v44 = vld [vmem:[%s2 + $0x8] sm:$0xff]
    %v45 = vld [vmem:[%s2 + $0x10] sm:$0xff]
    %v46 = vld [vmem:[%s2 + $0x18] sm:$0xff]
    %v47 = vld [vmem:[%s2 + $0x20] sm:$0xff]
    %v48 = vld [vmem:[%s2 + $0x28] sm:$0xff]
    %v49 = vld [vmem:[%s2 + $0x30] sm:$0xff]
    %v50 = vld [vmem:[%s2 + $0x38] sm:$0xff]
    %v51 = vld [vmem:[%s2 + $0x40] sm:$0xff]
    %v52 = vld [vmem:[%s2 + $0x48] sm:$0xff]
    %v53 = vld [vmem:[%s2 + $0x50] sm:$0xff]
    %v54 = vld [vmem:[%s2 + $0x58] sm:$0xff]
    %v55 = vld [vmem:[%s2 + $0x60] sm:$0xff]
    %v56 = vld [vmem:[%s2 + $0x68] sm:$0xff]
    %v57 = vld [vmem:[%s2 + $0x70] sm:$0xff]
    %v58 = vld [vmem:[%s3] sm:$0xff]
    %v59 = vld [vmem:[%s3 + $0x8] sm:$0xff]
    %v60 = vld [vmem:[%s3 + $0x10] sm:$0xff]
    %v61 = vld [vmem:[%s3 + $0x18] sm:$0xff]
    %v62 = vld [vmem:[%s3 + $0x20] sm:$0xff]
    %v63 = vld [vmem:[%s3 + $0x28] sm:$0xff]
    %vm64 = vcmask 326656
    %v66 = vsel %vm64, %v21, 0
    %v69 = vsel %vm64, %v22, 0
    %71 = vmatprep.subr.mxu0 0.0
    %72 = vmatpush1.msra.mxu0 %v43
    %73 = vmatprep.subr.mxu0 0.0
    %74 = vmatpush1.msra.mxu0 %v44
    %75 = vmatprep.subr.mxu0 0.0
    %76 = vmatpush1.msra.mxu0 %v45
    %77 = vmatprep.subr.mxu0 0.0
    %78 = vmatpush1.msra.mxu0 %v46
    %79 = vmatprep.subr.mxu0 0.0
    %80 = vmatpush1.msra.mxu0 %v47
    %81 = vmatprep.subr.mxu0 0.0
    %82 = vmatpush1.msra.mxu0 0.0
    %83 = vmatprep.subr.mxu0 0.0
    %84 = vmatpush1.msra.mxu0 0.0
    %85 = vmatprep.subr.mxu0 0.0
    %86 = vmatpush1.msra.mxu0 0.0
    %87 = vmatprep.subr.mxu0 0.0
    %88 = vmatpush1.msra.mxu0 0.0
    %89 = vmatprep.subr.mxu0 0.0
    %90 = vmatpush1.msra.mxu0 0.0
    %91 = vmatprep.subr.mxu0 0.0
    %92 = vmatpush1.msra.mxu0 0.0
    %93 = vmatprep.subr.mxu0 0.0
    %94 = vmatpush1.msra.mxu0 0.0
    %95 = vmatprep.subr.mxu0 0.0
    %96 = vmatpush1.msra.mxu0 0.0
    %97 = vmatprep.subr.mxu0 0.0
    %98 = vmatpush1.msra.mxu0 0.0
    %99 = vmatprep.subr.mxu0 0.0
    %100 = vmatpush1.msra.mxu0 0.0
    %101 = vmatprep.subr.mxu0 0.0
    %102 = vmatpush1.msra.mxu0 0.0
    %103 = vmatprep.subr.mxu0 0.0
    %104 = vmatpush1.msra.mxu0 0.0
    %105 = vmatprep.subr.mxu0 0.0
    %106 = vmatpush1.msra.mxu0 0.0
    %107 = vmatprep.subr.mxu0 0.0
    %108 = vmatpush1.msra.mxu0 0.0
    %109 = vmatprep.subr.mxu0 0.0
    %110 = vmatpush1.msra.mxu0 0.0
    %111 = vmatprep.subr.mxu0 0.0
    %112 = vmatpush1.msra.mxu0 0.0
    %113 = vmatprep.subr.mxu0 0.0
    %114 = vmatpush1.msra.mxu0 0.0
    %115 = vmatprep.subr.mxu0 0.0
    %116 = vmatpush1.msra.mxu0 0.0
    %117 = vmatprep.subr.mxu0 0.0
    %118 = vmatpush1.msra.mxu0 0.0
    %119 = vmatprep.subr.mxu0 0.0
    %120 = vmatpush1.msra.mxu0 0.0
    %121 = vmatprep.subr.mxu0 0.0
    %122 = vmatpush1.msra.mxu0 0.0
    %123 = vmatprep.subr.mxu0 0.0
    %124 = vmatpush1.msra.mxu0 0.0
    %125 = vmatprep.subr.mxu0 0.0
    %126 = vmatpush1.msra.mxu0 0.0
    %127 = vmatprep.subr.mxu0 0.0
    %128 = vmatpush1.msra.mxu0 0.0
    %129 = vmatprep.subr.mxu0 0.0
    %130 = vmatpush1.msra.mxu0 0.0
    %131 = vmatprep.subr.mxu0 0.0
    %132 = vmatpush1.msra.mxu0 0.0
    %133 = vmatprep.subr.mxu0 0.0
    %134 = vmatpush1.msra.mxu0 0.0
    %135 = vmatprep.mubr.f32.mxu0 0.0
    %136 = vmatmul.mubr.f32.gmra.mrb[0].mxu0 %v66
    %v137 = vpop.f32.mrb[0].mxu0
    %v138 = vadd.f32 0.0, %v137
    %v139 = vpop.f32.mrb[0].mxu0
    %140 = vmatprep.mubr.f32.mxu0 0.0
    %141 = vmatmul.mubr.f32.gmra.mrb[0].mxu0 %v69
    %v142 = vpop.f32.mrb[0].mxu0
    %v143 = vadd.f32 0.0, %v142
    %v144 = vpop.f32.mrb[0].mxu0
    %145 = vdwg.mxu0
    %vm146 = vcmask 294144
    %v147 = vsel %vm146, %v138, -inf
    %148 = vmax.xlane.f32.xlu0 %v147
    %v149 = vpop.xlane.xlu0 %148
    %v150 = vsel %vm146, %v143, -inf
    %151 = vmax.xlane.f32.xlu0 %v150
    %v152 = vpop.xlane.xlu0 %151
    %v153 = vsub.f32 %v138, %v149
    %v154 = vsub.f32 %v143, %v152
    %v155 = vmul.f32 %v153, 1.442695
    %v156 = vpow.pop %v155
    %v157 = vmul.f32 %v154, 1.442695
    %v158 = vpow.pop %v157
    %161 = vrot.lane.b32.xlu0 %v156, 96
    %v162 = vpop.permute.xlu0 %161
    %163 = vrot.lane.b32.xlu0 %v158, 96
    %v164 = vpop.permute.xlu0 %163
    %vm167 = vcmask 31744
    %v168 = vsel %vm167, %v162, 0.0
    %169 = vadd.xlane.f32.xlu0 %v168
    %v170 = vpop.xlane.xlu0 %169
    %v171 = vsel %vm167, %v164, 0.0
    %172 = vadd.xlane.f32.xlu0 %v171
    %v173 = vpop.xlane.xlu0 %172
    %v174 = vrcp.pop %v170
    %v175 = vmul.f32 %v156, %v174
    %v176 = vrcp.pop %v173
    %v177 = vmul.f32 %v158, %v176
    %vm178 = vcmask 326944
    %v179 = vsel %vm178, %v138, -inf
    %180 = vmax.xlane.f32.xlu0 %v179
    %v181 = vpop.xlane.xlu0 %180
    %v182 = vsel %vm178, %v143, -inf
    %183 = vmax.xlane.f32.xlu0 %v182
    %v184 = vpop.xlane.xlu0 %183
    %v185 = vsub.f32 %v138, %v181
    %v186 = vsub.f32 %v143, %v184
    %v187 = vmul.f32 %v185, 1.442695
    %v188 = vpow.pop %v187
    %v189 = vmul.f32 %v186, 1.442695
    %v190 = vpow.pop %v189
    %193 = vrot.lane.b32.xlu0 %v188, 92
    %v194 = vpop.permute.xlu0 %193
    %195 = vrot.lane.b32.xlu0 %v190, 92
    %v196 = vpop.permute.xlu0 %195
    %v199 = vsel %vm167, %v194, 0.0
    %200 = vadd.xlane.f32.xlu0 %v199
    %v201 = vpop.xlane.xlu0 %200
    %v202 = vsel %vm167, %v196, 0.0
    %203 = vadd.xlane.f32.xlu0 %v202
    %v204 = vpop.xlane.xlu0 %203
    %v205 = vrcp.pop %v201
    %v206 = vmul.f32 %v188, %v205
    %v207 = vrcp.pop %v204
    %v208 = vmul.f32 %v190, %v207
    %vm209 = vcmask 359744
    %v210 = vsel %vm209, %v138, -inf
    %211 = vmax.xlane.f32.xlu0 %v210
    %v212 = vpop.xlane.xlu0 %211
    %v213 = vsel %vm209, %v143, -inf
    %214 = vmax.xlane.f32.xlu0 %v213
    %v215 = vpop.xlane.xlu0 %214
    %v216 = vsub.f32 %v138, %v212
    %v217 = vsub.f32 %v143, %v215
    %v218 = vmul.f32 %v216, 1.442695
    %v219 = vpow.pop %v218
    %v220 = vmul.f32 %v217, 1.442695
    %v221 = vpow.pop %v220
    %224 = vrot.lane.b32.xlu0 %v219, 88
    %v225 = vpop.permute.xlu0 %224
    %226 = vrot.lane.b32.xlu0 %v221, 88
    %v227 = vpop.permute.xlu0 %226
    %v230 = vsel %vm167, %v225, 0.0
    %231 = vadd.xlane.f32.xlu0 %v230
    %v232 = vpop.xlane.xlu0 %231
    %v233 = vsel %vm167, %v227, 0.0
    %234 = vadd.xlane.f32.xlu0 %v233
    %v235 = vpop.xlane.xlu0 %234
    %v236 = vrcp.pop %v232
    %v237 = vmul.f32 %v219, %v236
    %v238 = vrcp.pop %v235
    %v239 = vmul.f32 %v221, %v238
    %vm240 = vcmask 392544
    %v241 = vsel %vm240, %v138, -inf
    %242 = vmax.xlane.f32.xlu0 %v241
    %v243 = vpop.xlane.xlu0 %242
    %v244 = vsel %vm240, %v143, -inf
    %245 = vmax.xlane.f32.xlu0 %v244
    %v246 = vpop.xlane.xlu0 %245
    %v247 = vsub.f32 %v138, %v243
    %v248 = vsub.f32 %v143, %v246
    %v249 = vmul.f32 %v247, 1.442695
    %v250 = vpow.pop %v249
    %v251 = vmul.f32 %v248, 1.442695
    %v252 = vpow.pop %v251
    %255 = vrot.lane.b32.xlu0 %v250, 84
    %v256 = vpop.permute.xlu0 %255
    %257 = vrot.lane.b32.xlu0 %v252, 84
    %v258 = vpop.permute.xlu0 %257
    %v261 = vsel %vm167, %v256, 0.0
    %262 = vadd.xlane.f32.xlu0 %v261
    %v263 = vpop.xlane.xlu0 %262
    %v264 = vsel %vm167, %v258, 0.0
    %265 = vadd.xlane.f32.xlu0 %v264
    %v266 = vpop.xlane.xlu0 %265
    %v267 = vrcp.pop %v263
    %v268 = vmul.f32 %v250, %v267
    %v269 = vrcp.pop %v266
    %v270 = vmul.f32 %v252, %v269
    %273 = vrot.lane.b32.xlu0 %v175, 96
    %v274 = vpop.permute.xlu0 %273
    %275 = vrot.lane.b32.xlu0 %v177, 96
    %v276 = vpop.permute.xlu0 %275
    %281 = vrot.lane.b32.xlu0 %v206, 96
    %v282 = vpop.permute.xlu0 %281
    %283 = vrot.lane.b32.xlu0 %v208, 96
    %v284 = vpop.permute.xlu0 %283
    %289 = vrot.lane.b32.xlu0 %v237, 96
    %v290 = vpop.permute.xlu0 %289
    %291 = vrot.lane.b32.xlu0 %v239, 96
    %v292 = vpop.permute.xlu0 %291
    %297 = vrot.lane.b32.xlu0 %v268, 96
    %v298 = vpop.permute.xlu0 %297
    %299 = vrot.lane.b32.xlu0 %v270, 96
    %v300 = vpop.permute.xlu0 %299
    %v303 = vsel %vm167, %v274, %v282
    %v304 = vsel %vm167, %v276, %v284
    %vm305 = vcmask 64512
    %v306 = vsel %vm305, %v303, %v290
    %v307 = vsel %vm305, %v304, %v292
    %vm308 = vcmask 97280
    %v309 = vsel %vm308, %v306, %v298
    %v310 = vsel %vm308, %v307, %v300
    %v312 = vsel %vm64, %v23, 0
    %v315 = vsel %vm64, %v24, 0
    %v318 = vsel %vm64, %v25, 0
    %v321 = vsel %vm64, %v26, 0
    %v324 = vsel %vm64, %v27, 0
    %v327 = vsel %vm64, %v28, 0
    %v330 = vsel %vm64, %v29, 0
    %v333 = vsel %vm64, %v30, 0
    %v336 = vsel %vm64, %v31, 0
    %v339 = vsel %vm64, %v32, 0
    %v342 = vsel %vm64, %v33, 0
    %v345 = vsel %vm64, %v34, 0
    %v348 = vsel %vm64, %v35, 0
    %v351 = vsel %vm64, %v36, 0
    %v354 = vsel %vm64, %v37, 0
    %v357 = vsel %vm64, %v38, 0
    %v360 = vsel %vm64, %v39, 0
    %v363 = vsel %vm64, %v40, 0
    %v366 = vsel %vm64, %v41, 0
    %v369 = vsel %vm64, %v42, 0
    %371 = vmatprep.subr.mxu0 0.0
    %372 = vmatpush1.msra.mxu0 %v48
    %373 = vmatprep.subr.mxu0 0.0
    %374 = vmatpush1.msra.mxu0 %v49
    %375 = vmatprep.subr.mxu0 0.0
    %376 = vmatpush1.msra.mxu0 %v50
    %377 = vmatprep.subr.mxu0 0.0
    %378 = vmatpush1.msra.mxu0 %v51
    %379 = vmatprep.subr.mxu0 0.0
    %380 = vmatpush1.msra.mxu0 %v52
    %381 = vmatprep.subr.mxu0 0.0
    %382 = vmatpush1.msra.mxu0 0.0
    %383 = vmatprep.subr.mxu0 0.0
    %384 = vmatpush1.msra.mxu0 0.0
    %385 = vmatprep.subr.mxu0 0.0
    %386 = vmatpush1.msra.mxu0 0.0
    %387 = vmatprep.subr.mxu0 0.0
    %388 = vmatpush1.msra.mxu0 0.0
    %389 = vmatprep.subr.mxu0 0.0
    %390 = vmatpush1.msra.mxu0 0.0
    %391 = vmatprep.subr.mxu0 0.0
    %392 = vmatpush1.msra.mxu0 0.0
    %393 = vmatprep.subr.mxu0 0.0
    %394 = vmatpush1.msra.mxu0 0.0
    %395 = vmatprep.subr.mxu0 0.0
    %396 = vmatpush1.msra.mxu0 0.0
    %397 = vmatprep.subr.mxu0 0.0
    %398 = vmatpush1.msra.mxu0 0.0
    %399 = vmatprep.subr.mxu0 0.0
    %400 = vmatpush1.msra.mxu0 0.0
    %401 = vmatprep.subr.mxu0 0.0
    %402 = vmatpush1.msra.mxu0 0.0
    %403 = vmatprep.subr.mxu0 0.0
    %404 = vmatpush1.msra.mxu0 0.0
    %405 = vmatprep.subr.mxu0 0.0
    %406 = vmatpush1.msra.mxu0 0.0
    %407 = vmatprep.subr.mxu0 0.0
    %408 = vmatpush1.msra.mxu0 0.0
    %409 = vmatprep.subr.mxu0 0.0
    %410 = vmatpush1.msra.mxu0 0.0
    %411 = vmatprep.subr.mxu0 0.0
    %412 = vmatpush1.msra.mxu0 0.0
    %413 = vmatprep.subr.mxu0 0.0
    %414 = vmatpush1.msra.mxu0 0.0
    %415 = vmatprep.subr.mxu0 0.0
    %416 = vmatpush1.msra.mxu0 0.0
    %417 = vmatprep.subr.mxu0 0.0
    %418 = vmatpush1.msra.mxu0 0.0
    %419 = vmatprep.subr.mxu0 0.0
    %420 = vmatpush1.msra.mxu0 0.0
    %421 = vmatprep.subr.mxu0 0.0
    %422 = vmatpush1.msra.mxu0 0.0
    %423 = vmatprep.subr.mxu0 0.0
    %424 = vmatpush1.msra.mxu0 0.0
    %425 = vmatprep.subr.mxu0 0.0
    %426 = vmatpush1.msra.mxu0 0.0
    %427 = vmatprep.subr.mxu0 0.0
    %428 = vmatpush1.msra.mxu0 0.0
    %429 = vmatprep.subr.mxu0 0.0
    %430 = vmatpush1.msra.mxu0 0.0
    %431 = vmatprep.subr.mxu0 0.0
    %432 = vmatpush1.msra.mxu0 0.0
    %433 = vmatprep.subr.mxu0 0.0
    %434 = vmatpush1.msra.mxu0 0.0
    %435 = vmatprep.mubr.f32.mxu0 0.0
    %436 = vmatmul.mubr.f32.gmra.mrb[0].mxu0 %v312
    %v437 = vpop.f32.mrb[0].mxu0
    %v438 = vadd.f32 0.0, %v437
    %v439 = vpop.f32.mrb[0].mxu0
    %440 = vmatprep.mubr.f32.mxu0 0.0
    %441 = vmatmul.mubr.f32.gmra.mrb[0].mxu0 %v315
    %v442 = vpop.f32.mrb[0].mxu0
    %v443 = vadd.f32 0.0, %v442
    %v444 = vpop.f32.mrb[0].mxu0
    %445 = vmatprep.mubr.f32.mxu0 0.0
    %446 = vmatmul.mubr.f32.gmra.mrb[0].mxu0 %v318
    %v447 = vpop.f32.mrb[0].mxu0
    %v448 = vadd.f32 0.0, %v447
    %v449 = vpop.f32.mrb[0].mxu0
    %450 = vmatprep.mubr.f32.mxu0 0.0
    %451 = vmatmul.mubr.f32.gmra.mrb[0].mxu0 %v321
    %v452 = vpop.f32.mrb[0].mxu0
    %v453 = vadd.f32 0.0, %v452
    %v454 = vpop.f32.mrb[0].mxu0
    %455 = vmatprep.mubr.f32.mxu0 0.0
    %456 = vmatmul.mubr.f32.gmra.mrb[0].mxu0 %v324
    %v457 = vpop.f32.mrb[0].mxu0
    %v458 = vadd.f32 0.0, %v457
    %v459 = vpop.f32.mrb[0].mxu0
    %460 = vmatprep.mubr.f32.mxu0 0.0
    %461 = vmatmul.mubr.f32.gmra.mrb[0].mxu0 %v327
    %v462 = vpop.f32.mrb[0].mxu0
    %v463 = vadd.f32 0.0, %v462
    %v464 = vpop.f32.mrb[0].mxu0
    %465 = vmatprep.mubr.f32.mxu0 0.0
    %466 = vmatmul.mubr.f32.gmra.mrb[0].mxu0 %v330
    %v467 = vpop.f32.mrb[0].mxu0
    %v468 = vadd.f32 0.0, %v467
    %v469 = vpop.f32.mrb[0].mxu0
    %470 = vmatprep.mubr.f32.mxu0 0.0
    %471 = vmatmul.mubr.f32.gmra.mrb[0].mxu0 %v333
    %v472 = vpop.f32.mrb[0].mxu0
    %v473 = vadd.f32 0.0, %v472
    %v474 = vpop.f32.mrb[0].mxu0
    %475 = vmatprep.mubr.f32.mxu0 0.0
    %476 = vmatmul.mubr.f32.gmra.mrb[0].mxu0 %v336
    %v477 = vpop.f32.mrb[0].mxu0
    %v478 = vadd.f32 0.0, %v477
    %v479 = vpop.f32.mrb[0].mxu0
    %480 = vmatprep.mubr.f32.mxu0 0.0
    %481 = vmatmul.mubr.f32.gmra.mrb[0].mxu0 %v339
    %v482 = vpop.f32.mrb[0].mxu0
    %v483 = vadd.f32 0.0, %v482
    %v484 = vpop.f32.mrb[0].mxu0
    %485 = vmatprep.mubr.f32.mxu0 0.0
    %486 = vmatmul.mubr.f32.gmra.mrb[0].mxu0 %v342
    %v487 = vpop.f32.mrb[0].mxu0
    %v488 = vadd.f32 0.0, %v487
    %v489 = vpop.f32.mrb[0].mxu0
    %490 = vmatprep.mubr.f32.mxu0 0.0
    %491 = vmatmul.mubr.f32.gmra.mrb[0].mxu0 %v345
    %v492 = vpop.f32.mrb[0].mxu0
    %v493 = vadd.f32 0.0, %v492
    %v494 = vpop.f32.mrb[0].mxu0
    %495 = vmatprep.mubr.f32.mxu0 0.0
    %496 = vmatmul.mubr.f32.gmra.mrb[0].mxu0 %v348
    %v497 = vpop.f32.mrb[0].mxu0
    %v498 = vadd.f32 0.0, %v497
    %v499 = vpop.f32.mrb[0].mxu0
    %500 = vmatprep.mubr.f32.mxu0 0.0
    %501 = vmatmul.mubr.f32.gmra.mrb[0].mxu0 %v351
    %v502 = vpop.f32.mrb[0].mxu0
    %v503 = vadd.f32 0.0, %v502
    %v504 = vpop.f32.mrb[0].mxu0
    %505 = vmatprep.mubr.f32.mxu0 0.0
    %506 = vmatmul.mubr.f32.gmra.mrb[0].mxu0 %v354
    %v507 = vpop.f32.mrb[0].mxu0
    %v508 = vadd.f32 0.0, %v507
    %v509 = vpop.f32.mrb[0].mxu0
    %510 = vmatprep.mubr.f32.mxu0 0.0
    %511 = vmatmul.mubr.f32.gmra.mrb[0].mxu0 %v357
    %v512 = vpop.f32.mrb[0].mxu0
    %v513 = vadd.f32 0.0, %v512
    %v514 = vpop.f32.mrb[0].mxu0
    %515 = vmatprep.mubr.f32.mxu0 0.0
    %516 = vmatmul.mubr.f32.gmra.mrb[0].mxu0 %v360
    %v517 = vpop.f32.mrb[0].mxu0
    %v518 = vadd.f32 0.0, %v517
    %v519 = vpop.f32.mrb[0].mxu0
    %520 = vmatprep.mubr.f32.mxu0 0.0
    %521 = vmatmul.mubr.f32.gmra.mrb[0].mxu0 %v363
    %v522 = vpop.f32.mrb[0].mxu0
    %v523 = vadd.f32 0.0, %v522
    %v524 = vpop.f32.mrb[0].mxu0
    %525 = vmatprep.mubr.f32.mxu0 0.0
    %526 = vmatmul.mubr.f32.gmra.mrb[0].mxu0 %v366
    %v527 = vpop.f32.mrb[0].mxu0
    %v528 = vadd.f32 0.0, %v527
    %v529 = vpop.f32.mrb[0].mxu0
    %530 = vmatprep.mubr.f32.mxu0 0.0
    %531 = vmatmul.mubr.f32.gmra.mrb[0].mxu0 %v369
    %v532 = vpop.f32.mrb[0].mxu0
    %v533 = vadd.f32 0.0, %v532
    %v534 = vpop.f32.mrb[0].mxu0
    %535 = vdwg.mxu0
    %536 = vset.pattern.permute.xlu0 33
    %537 = vperm.xlu0 %536, %v23
    %v538 = vpop.permute.xlu0 %537
    %540 = vset.pattern.permute.xlu0 33
    %541 = vperm.xlu0 %540, %v24
    %v542 = vpop.permute.xlu0 %541
    %544 = vset.pattern.permute.xlu0 33
    %545 = vperm.xlu0 %544, %v25
    %v546 = vpop.permute.xlu0 %545
    %548 = vset.pattern.permute.xlu0 33
    %549 = vperm.xlu0 %548, %v26
    %v550 = vpop.permute.xlu0 %549
    %552 = vset.pattern.permute.xlu0 33
    %553 = vperm.xlu0 %552, %v27
    %v554 = vpop.permute.xlu0 %553
    %556 = vset.pattern.permute.xlu0 33
    %557 = vperm.xlu0 %556, %v28
    %v558 = vpop.permute.xlu0 %557
    %560 = vset.pattern.permute.xlu0 33
    %561 = vperm.xlu0 %560, %v29
    %v562 = vpop.permute.xlu0 %561
    %564 = vset.pattern.permute.xlu0 33
    %565 = vperm.xlu0 %564, %v30
    %v566 = vpop.permute.xlu0 %565
    %568 = vset.pattern.permute.xlu0 33
    %569 = vperm.xlu0 %568, %v31
    %v570 = vpop.permute.xlu0 %569
    %572 = vset.pattern.permute.xlu0 33
    %573 = vperm.xlu0 %572, %v32
    %v574 = vpop.permute.xlu0 %573
    %576 = vset.pattern.permute.xlu0 33
    %577 = vperm.xlu0 %576, %v33
    %v578 = vpop.permute.xlu0 %577
    %580 = vset.pattern.permute.xlu0 33
    %581 = vperm.xlu0 %580, %v34
    %v582 = vpop.permute.xlu0 %581
    %584 = vset.pattern.permute.xlu0 33
    %585 = vperm.xlu0 %584, %v35
    %v586 = vpop.permute.xlu0 %585
    %588 = vset.pattern.permute.xlu0 33
    %589 = vperm.xlu0 %588, %v36
    %v590 = vpop.permute.xlu0 %589
    %592 = vset.pattern.permute.xlu0 33
    %593 = vperm.xlu0 %592, %v37
    %v594 = vpop.permute.xlu0 %593
    %596 = vset.pattern.permute.xlu0 33
    %597 = vperm.xlu0 %596, %v38
    %v598 = vpop.permute.xlu0 %597
    %600 = vset.pattern.permute.xlu0 33
    %601 = vperm.xlu0 %600, %v39
    %v602 = vpop.permute.xlu0 %601
    %604 = vset.pattern.permute.xlu0 33
    %605 = vperm.xlu0 %604, %v40
    %v606 = vpop.permute.xlu0 %605
    %608 = vset.pattern.permute.xlu0 33
    %609 = vperm.xlu0 %608, %v41
    %v610 = vpop.permute.xlu0 %609
    %612 = vset.pattern.permute.xlu0 33
    %613 = vperm.xlu0 %612, %v42
    %v614 = vpop.permute.xlu0 %613
    %v616 = vmul.f32 %v438, %v538
    %v617 = vmul.f32 %v443, %v542
    %v618 = vmul.f32 %v448, %v546
    %v619 = vmul.f32 %v453, %v550
    %v620 = vmul.f32 %v458, %v554
    %v621 = vmul.f32 %v463, %v558
    %v622 = vmul.f32 %v468, %v562
    %v623 = vmul.f32 %v473, %v566
    %v624 = vmul.f32 %v478, %v570
    %v625 = vmul.f32 %v483, %v574
    %v626 = vmul.f32 %v488, %v578
    %v627 = vmul.f32 %v493, %v582
    %v628 = vmul.f32 %v498, %v586
    %v629 = vmul.f32 %v503, %v590
    %v630 = vmul.f32 %v508, %v594
    %v631 = vmul.f32 %v513, %v598
    %v632 = vmul.f32 %v518, %v602
    %v633 = vmul.f32 %v523, %v606
    %v634 = vmul.f32 %v528, %v610
    %v635 = vmul.f32 %v533, %v614
    %v636 = vfloor.f32 %v138
    %v637 = vfloor.f32 %v143
    %v638 = vsub.f32 %v138, %v636
    %v639 = vsub.f32 %v143, %v637
    %v640 = vcvt.f32.s32.to.zero.pseudo %v636
    %v641 = vcvt.f32.s32.to.zero.pseudo %v637
    %v642 = vsub.f32 1.0, %v638
    %v643 = vsub.f32 1.0, %v639
    %646 = vrot.lane.b32.xlu0 %v642, 112
    %v647 = vpop.permute.xlu0 %646
    %648 = vrot.lane.b32.xlu0 %v643, 112
    %v649 = vpop.permute.xlu0 %648
    %v652 = vmul.f32 %v642, %v647
    %v653 = vmul.f32 %v643, %v649
    %v654 = vmul.f32 %v638, %v647
    %v655 = vmul.f32 %v639, %v649
    %658 = vrot.lane.b32.xlu0 %v638, 112
    %v659 = vpop.permute.xlu0 %658
    %660 = vrot.lane.b32.xlu0 %v639, 112
    %v661 = vpop.permute.xlu0 %660
    %v664 = vmul.f32 %v642, %v659
    %v665 = vmul.f32 %v643, %v661
    %v666 = vmul.f32 %v638, %v659
    %v667 = vmul.f32 %v639, %v661
    %vm668 = vcmp.ge.s32.totalorder %v640, 0
    %vm669 = vcmp.ge.s32.totalorder %v641, 0
    %vm670 = vcmp.lt.s32.totalorder %v640, %v60
    %vm671 = vcmp.lt.s32.totalorder %v641, %v61
    %vm672 = vmand %vm668, %vm670
    %vm673 = vmand %vm669, %vm671
    %v674 = vsel %vm668, 1, 0
    %v675 = vsel %vm669, 1, 0
    %676 = vrot.lane.b32.xlu0 %v674, 112
    %v677 = vpop.permute.xlu0 %676
    %678 = vrot.lane.b32.xlu0 %v675, 112
    %v679 = vpop.permute.xlu0 %678
    %vm680 = vcmp.ne.s32.totalorder %v677, 0
    %vm681 = vcmp.ne.s32.totalorder %v679, 0
    %vm682 = vmand %vm672, %vm680
    %vm683 = vmand %vm673, %vm681
    %684 = vrot.lane.b32.xlu0 %v62, 16
    %v685 = vpop.permute.xlu0 %684
    %686 = vrot.lane.b32.xlu0 %v63, 16
    %v687 = vpop.permute.xlu0 %686
    %vm688 = vcmp.lt.s32.totalorder %v640, %v685
    %vm689 = vcmp.lt.s32.totalorder %v641, %v687
    %v690 = vsel %vm688, 1, 0
    %v691 = vsel %vm689, 1, 0
    %692 = vrot.lane.b32.xlu0 %v690, 112
    %v693 = vpop.permute.xlu0 %692
    %694 = vrot.lane.b32.xlu0 %v691, 112
    %v695 = vpop.permute.xlu0 %694
    %vm696 = vcmp.ne.s32.totalorder %v693, 0
    %vm697 = vcmp.ne.s32.totalorder %v695, 0
    %vm698 = vmand %vm682, %vm696
    %vm699 = vmand %vm683, %vm697
    %700 = vrot.lane.b32.xlu0 %v60, 16
    %v701 = vpop.permute.xlu0 %700
    %702 = vrot.lane.b32.xlu0 %v61, 16
    %v703 = vpop.permute.xlu0 %702
    %v704 = vmul.u32 %v640, %v701
    %v705 = vmul.u32 %v641, %v703
    %706 = vrot.lane.b32.xlu0 %v704, 112
    %v707 = vpop.permute.xlu0 %706
    %708 = vrot.lane.b32.xlu0 %v705, 112
    %v709 = vpop.permute.xlu0 %708
    %v710 = vadd.s32 %v58, %v707
    %v711 = vadd.s32 %v59, %v709
    %v712 = vadd.s32 %v710, %v640
    %v713 = vadd.s32 %v711, %v641
    %v714 = vcvt.s32.f32 %v712
    %v715 = vcvt.s32.f32 %v713
    %v716 = vmul.f32 %v652, %v309
    %v717 = vmul.f32 %v653, %v310
    %v718 = vsel %vm698, %v716, 0.0
    %v719 = vsel %vm699, %v717, 0.0
    %v720 = vadd.s32 %v640, 1
    %v721 = vadd.s32 %v641, 1
    %vm722 = vcmp.ge.s32.totalorder %v720, 0
    %vm723 = vcmp.ge.s32.totalorder %v721, 0
    %vm724 = vcmp.lt.s32.totalorder %v720, %v60
    %vm725 = vcmp.lt.s32.totalorder %v721, %v61
    %vm726 = vmand %vm722, %vm724
    %vm727 = vmand %vm723, %vm725
    %vm728 = vmand %vm726, %vm680
    %vm729 = vmand %vm727, %vm681
    %vm730 = vmand %vm728, %vm696
    %vm731 = vmand %vm729, %vm697
    %v732 = vadd.s32 %v710, %v720
    %v733 = vadd.s32 %v711, %v721
    %v734 = vcvt.s32.f32 %v732
    %v735 = vcvt.s32.f32 %v733
    %v736 = vmul.f32 %v654, %v309
    %v737 = vmul.f32 %v655, %v310
    %v738 = vsel %vm730, %v736, 0.0
    %v739 = vsel %vm731, %v737, 0.0
    %v740 = vsel %vm722, 1, 0
    %v741 = vsel %vm723, 1, 0
    %742 = vrot.lane.b32.xlu0 %v740, 112
    %v743 = vpop.permute.xlu0 %742
    %744 = vrot.lane.b32.xlu0 %v741, 112
    %v745 = vpop.permute.xlu0 %744
    %vm746 = vcmp.ne.s32.totalorder %v743, 0
    %vm747 = vcmp.ne.s32.totalorder %v745, 0
    %vm748 = vmand %vm672, %vm746
    %vm749 = vmand %vm673, %vm747
    %vm750 = vcmp.lt.s32.totalorder %v720, %v685
    %vm751 = vcmp.lt.s32.totalorder %v721, %v687
    %v752 = vsel %vm750, 1, 0
    %v753 = vsel %vm751, 1, 0
    %754 = vrot.lane.b32.xlu0 %v752, 112
    %v755 = vpop.permute.xlu0 %754
    %756 = vrot.lane.b32.xlu0 %v753, 112
    %v757 = vpop.permute.xlu0 %756
    %vm758 = vcmp.ne.s32.totalorder %v755, 0
    %vm759 = vcmp.ne.s32.totalorder %v757, 0
    %vm760 = vmand %vm748, %vm758
    %vm761 = vmand %vm749, %vm759
    %v762 = vmul.u32 %v720, %v701
    %v763 = vmul.u32 %v721, %v703
    %764 = vrot.lane.b32.xlu0 %v762, 112
    %v765 = vpop.permute.xlu0 %764
    %766 = vrot.lane.b32.xlu0 %v763, 112
    %v767 = vpop.permute.xlu0 %766
    %v768 = vadd.s32 %v58, %v765
    %v769 = vadd.s32 %v59, %v767
    %v770 = vadd.s32 %v768, %v640
    %v771 = vadd.s32 %v769, %v641
    %v772 = vcvt.s32.f32 %v770
    %v773 = vcvt.s32.f32 %v771
    %v774 = vmul.f32 %v664, %v309
    %v775 = vmul.f32 %v665, %v310
    %v776 = vsel %vm760, %v774, 0.0
    %v777 = vsel %vm761, %v775, 0.0
    %vm778 = vmand %vm726, %vm746
    %vm779 = vmand %vm727, %vm747
    %vm780 = vmand %vm778, %vm758
    %vm781 = vmand %vm779, %vm759
    %v782 = vadd.s32 %v768, %v720
    %v783 = vadd.s32 %v769, %v721
    %v784 = vcvt.s32.f32 %v782
    %v785 = vcvt.s32.f32 %v783
    %v786 = vmul.f32 %v666, %v309
    %v787 = vmul.f32 %v667, %v310
    %v788 = vsel %vm780, %v786, 0.0
    %v789 = vsel %vm781, %v787, 0.0
    %v790 = vlaneseq
    %v791 = vand.u32 %v790, 127
    %v792 = vadd.s32 %v791, 128
    %v793 = vadd.s32 %v791, 256
    %v794 = vadd.s32 %v791, 384
    %v795 = vadd.s32 %v791, 512
    %v796 = vadd.s32 %v791, 640
    %v797 = vadd.s32 %v791, 768
    %v798 = vadd.s32 %v791, 896
    %v799 = vadd.s32 %v791, 1024
    %v800 = vadd.s32 %v791, 1152
    %v801 = vadd.s32 %v791, 1280
    %v802 = vadd.s32 %v791, 1408
    %v803 = vadd.s32 %v791, 1536
    %v804 = vadd.s32 %v791, 1664
    %v805 = vadd.s32 %v791, 1792
    %v806 = vadd.s32 %v791, 1920
    %v807 = vadd.s32 %v791, 2048
    %v808 = vadd.s32 %v791, 2176
    %v809 = vadd.s32 %v791, 2304
    %v810 = vadd.s32 %v791, 2432
    %v811 = vlaneseq
    %v812 = vshrl.u32 %v811, 7
    %v813 = vadd.s32 %v812, 8
    %v814 = vmul.u32 %v812, 160
    %v815 = vmul.u32 %v813, 160
    %vm816 = vcmp.ge.s32.totalorder %v791, %v814
    %vm817 = vcmp.ge.s32.totalorder %v792, %v814
    %vm818 = vcmp.ge.s32.totalorder %v793, %v814
    %vm819 = vcmp.ge.s32.totalorder %v794, %v814
    %vm820 = vcmp.ge.s32.totalorder %v795, %v814
    %vm821 = vcmp.ge.s32.totalorder %v796, %v814
    %vm822 = vcmp.ge.s32.totalorder %v797, %v814
    %vm823 = vcmp.ge.s32.totalorder %v798, %v814
    %vm824 = vcmp.ge.s32.totalorder %v799, %v814
    %vm825 = vcmp.ge.s32.totalorder %v800, %v814
    %vm826 = vcmp.ge.s32.totalorder %v801, %v814
    %vm827 = vcmp.ge.s32.totalorder %v802, %v814
    %vm828 = vcmp.ge.s32.totalorder %v803, %v814
    %vm829 = vcmp.ge.s32.totalorder %v804, %v814
    %vm830 = vcmp.ge.s32.totalorder %v805, %v814
    %vm831 = vcmp.ge.s32.totalorder %v806, %v814
    %vm832 = vcmp.ge.s32.totalorder %v807, %v814
    %vm833 = vcmp.ge.s32.totalorder %v808, %v814
    %vm834 = vcmp.ge.s32.totalorder %v809, %v814
    %vm835 = vcmp.ge.s32.totalorder %v810, %v814
    %vm836 = vcmp.ge.s32.totalorder %v791, %v815
    %vm837 = vcmp.ge.s32.totalorder %v792, %v815
    %vm838 = vcmp.ge.s32.totalorder %v793, %v815
    %vm839 = vcmp.ge.s32.totalorder %v794, %v815
    %vm840 = vcmp.ge.s32.totalorder %v795, %v815
    %vm841 = vcmp.ge.s32.totalorder %v796, %v815
    %vm842 = vcmp.ge.s32.totalorder %v797, %v815
    %vm843 = vcmp.ge.s32.totalorder %v798, %v815
    %vm844 = vcmp.ge.s32.totalorder %v799, %v815
    %vm845 = vcmp.ge.s32.totalorder %v800, %v815
    %vm846 = vcmp.ge.s32.totalorder %v801, %v815
    %vm847 = vcmp.ge.s32.totalorder %v802, %v815
    %vm848 = vcmp.ge.s32.totalorder %v803, %v815
    %vm849 = vcmp.ge.s32.totalorder %v804, %v815
    %vm850 = vcmp.ge.s32.totalorder %v805, %v815
    %vm851 = vcmp.ge.s32.totalorder %v806, %v815
    %vm852 = vcmp.ge.s32.totalorder %v807, %v815
    %vm853 = vcmp.ge.s32.totalorder %v808, %v815
    %vm854 = vcmp.ge.s32.totalorder %v809, %v815
    %vm855 = vcmp.ge.s32.totalorder %v810, %v815
    %v856 = vadd.s32 %v812, 1
    %v857 = vadd.s32 %v813, 1
    %v858 = vmul.u32 %v856, 160
    %v859 = vmul.u32 %v857, 160
    %vm860 = vcmp.lt.s32.totalorder %v791, %v858
    %vm861 = vcmp.lt.s32.totalorder %v792, %v858
    %vm862 = vcmp.lt.s32.totalorder %v793, %v858
    %vm863 = vcmp.lt.s32.totalorder %v794, %v858
    %vm864 = vcmp.lt.s32.totalorder %v795, %v858
    %vm865 = vcmp.lt.s32.totalorder %v796, %v858
    %vm866 = vcmp.lt.s32.totalorder %v797, %v858
    %vm867 = vcmp.lt.s32.totalorder %v798, %v858
    %vm868 = vcmp.lt.s32.totalorder %v799, %v858
    %vm869 = vcmp.lt.s32.totalorder %v800, %v858
    %vm870 = vcmp.lt.s32.totalorder %v801, %v858
    %vm871 = vcmp.lt.s32.totalorder %v802, %v858
    %vm872 = vcmp.lt.s32.totalorder %v803, %v858
    %vm873 = vcmp.lt.s32.totalorder %v804, %v858
    %vm874 = vcmp.lt.s32.totalorder %v805, %v858
    %vm875 = vcmp.lt.s32.totalorder %v806, %v858
    %vm876 = vcmp.lt.s32.totalorder %v807, %v858
    %vm877 = vcmp.lt.s32.totalorder %v808, %v858
    %vm878 = vcmp.lt.s32.totalorder %v809, %v858
    %vm879 = vcmp.lt.s32.totalorder %v810, %v858
    %vm880 = vcmp.lt.s32.totalorder %v791, %v859
    %vm881 = vcmp.lt.s32.totalorder %v792, %v859
    %vm882 = vcmp.lt.s32.totalorder %v793, %v859
    %vm883 = vcmp.lt.s32.totalorder %v794, %v859
    %vm884 = vcmp.lt.s32.totalorder %v795, %v859
    %vm885 = vcmp.lt.s32.totalorder %v796, %v859
    %vm886 = vcmp.lt.s32.totalorder %v797, %v859
    %vm887 = vcmp.lt.s32.totalorder %v798, %v859
    %vm888 = vcmp.lt.s32.totalorder %v799, %v859
    %vm889 = vcmp.lt.s32.totalorder %v800, %v859
    %vm890 = vcmp.lt.s32.totalorder %v801, %v859
    %vm891 = vcmp.lt.s32.totalorder %v802, %v859
    %vm892 = vcmp.lt.s32.totalorder %v803, %v859
    %vm893 = vcmp.lt.s32.totalorder %v804, %v859
    %vm894 = vcmp.lt.s32.totalorder %v805, %v859
    %vm895 = vcmp.lt.s32.totalorder %v806, %v859
    %vm896 = vcmp.lt.s32.totalorder %v807, %v859
    %vm897 = vcmp.lt.s32.totalorder %v808, %v859
    %vm898 = vcmp.lt.s32.totalorder %v809, %v859
    %vm899 = vcmp.lt.s32.totalorder %v810, %v859
    %vm900 = vmand %vm816, %vm860
    %vm901 = vmand %vm817, %vm861
    %vm902 = vmand %vm818, %vm862
    %vm903 = vmand %vm819, %vm863
    %vm904 = vmand %vm820, %vm864
    %vm905 = vmand %vm821, %vm865
    %vm906 = vmand %vm822, %vm866
    %vm907 = vmand %vm823, %vm867
    %vm908 = vmand %vm824, %vm868
    %vm909 = vmand %vm825, %vm869
    %vm910 = vmand %vm826, %vm870
    %vm911 = vmand %vm827, %vm871
    %vm912 = vmand %vm828, %vm872
    %vm913 = vmand %vm829, %vm873
    %vm914 = vmand %vm830, %vm874
    %vm915 = vmand %vm831, %vm875
    %vm916 = vmand %vm832, %vm876
    %vm917 = vmand %vm833, %vm877
    %vm918 = vmand %vm834, %vm878
    %vm919 = vmand %vm835, %vm879
    %vm920 = vmand %vm836, %vm880
    %vm921 = vmand %vm837, %vm881
    %vm922 = vmand %vm838, %vm882
    %vm923 = vmand %vm839, %vm883
    %vm924 = vmand %vm840, %vm884
    %vm925 = vmand %vm841, %vm885
    %vm926 = vmand %vm842, %vm886
    %vm927 = vmand %vm843, %vm887
    %vm928 = vmand %vm844, %vm888
    %vm929 = vmand %vm845, %vm889
    %vm930 = vmand %vm846, %vm890
    %vm931 = vmand %vm847, %vm891
    %vm932 = vmand %vm848, %vm892
    %vm933 = vmand %vm849, %vm893
    %vm934 = vmand %vm850, %vm894
    %vm935 = vmand %vm851, %vm895
    %vm936 = vmand %vm852, %vm896
    %vm937 = vmand %vm853, %vm897
    %vm938 = vmand %vm854, %vm898
    %vm939 = vmand %vm855, %vm899
    %v940 = vsel %vm900, 1, 0
    %v941 = vsel %vm901, 1, 0
    %v942 = vsel %vm902, 1, 0
    %v943 = vsel %vm903, 1, 0
    %v944 = vsel %vm904, 1, 0
    %v945 = vsel %vm905, 1, 0
    %v946 = vsel %vm906, 1, 0
    %v947 = vsel %vm907, 1, 0
    %v948 = vsel %vm908, 1, 0
    %v949 = vsel %vm909, 1, 0
    %v950 = vsel %vm910, 1, 0
    %v951 = vsel %vm911, 1, 0
    %v952 = vsel %vm912, 1, 0
    %v953 = vsel %vm913, 1, 0
    %v954 = vsel %vm914, 1, 0
    %v955 = vsel %vm915, 1, 0
    %v956 = vsel %vm916, 1, 0
    %v957 = vsel %vm917, 1, 0
    %v958 = vsel %vm918, 1, 0
    %v959 = vsel %vm919, 1, 0
    %v960 = vsel %vm920, 1, 0
    %v961 = vsel %vm921, 1, 0
    %v962 = vsel %vm922, 1, 0
    %v963 = vsel %vm923, 1, 0
    %v964 = vsel %vm924, 1, 0
    %v965 = vsel %vm925, 1, 0
    %v966 = vsel %vm926, 1, 0
    %v967 = vsel %vm927, 1, 0
    %v968 = vsel %vm928, 1, 0
    %v969 = vsel %vm929, 1, 0
    %v970 = vsel %vm930, 1, 0
    %v971 = vsel %vm931, 1, 0
    %v972 = vsel %vm932, 1, 0
    %v973 = vsel %vm933, 1, 0
    %v974 = vsel %vm934, 1, 0
    %v975 = vsel %vm935, 1, 0
    %v976 = vsel %vm936, 1, 0
    %v977 = vsel %vm937, 1, 0
    %v978 = vsel %vm938, 1, 0
    %v979 = vsel %vm939, 1, 0
    %v980 = vcvt.s32.f32 %v940
    %v981 = vcvt.s32.f32 %v941
    %v982 = vcvt.s32.f32 %v942
    %v983 = vcvt.s32.f32 %v943
    %v984 = vcvt.s32.f32 %v944
    %v985 = vcvt.s32.f32 %v945
    %v986 = vcvt.s32.f32 %v946
    %v987 = vcvt.s32.f32 %v947
    %v988 = vcvt.s32.f32 %v948
    %v989 = vcvt.s32.f32 %v949
    %v990 = vcvt.s32.f32 %v950
    %v991 = vcvt.s32.f32 %v951
    %v992 = vcvt.s32.f32 %v952
    %v993 = vcvt.s32.f32 %v953
    %v994 = vcvt.s32.f32 %v954
    %v995 = vcvt.s32.f32 %v955
    %v996 = vcvt.s32.f32 %v956
    %v997 = vcvt.s32.f32 %v957
    %v998 = vcvt.s32.f32 %v958
    %v999 = vcvt.s32.f32 %v959
    %v1000 = vcvt.s32.f32 %v960
    %v1001 = vcvt.s32.f32 %v961
    %v1002 = vcvt.s32.f32 %v962
    %v1003 = vcvt.s32.f32 %v963
    %v1004 = vcvt.s32.f32 %v964
    %v1005 = vcvt.s32.f32 %v965
    %v1006 = vcvt.s32.f32 %v966
    %v1007 = vcvt.s32.f32 %v967
    %v1008 = vcvt.s32.f32 %v968
    %v1009 = vcvt.s32.f32 %v969
    %v1010 = vcvt.s32.f32 %v970
    %v1011 = vcvt.s32.f32 %v971
    %v1012 = vcvt.s32.f32 %v972
    %v1013 = vcvt.s32.f32 %v973
    %v1014 = vcvt.s32.f32 %v974
    %v1015 = vcvt.s32.f32 %v975
    %v1016 = vcvt.s32.f32 %v976
    %v1017 = vcvt.s32.f32 %v977
    %v1018 = vcvt.s32.f32 %v978
    %v1019 = vcvt.s32.f32 %v979
    %vm1020 = vcmask 130048
    %v1022 = vsel %vm1020, %v714, 0
    %v1025 = vsel %vm1020, %v715, 0
    %v1028 = vsel %vm1020, %v734, 0
    %v1031 = vsel %vm1020, %v735, 0
    %v1034 = vsel %vm1020, %v772, 0
    %v1037 = vsel %vm1020, %v773, 0
    %v1040 = vsel %vm1020, %v784, 0
    %v1043 = vsel %vm1020, %v785, 0
    %v1046 = vsel %vm1020, %v718, 0
    %v1049 = vsel %vm1020, %v719, 0
    %v1052 = vsel %vm1020, %v738, 0
    %v1055 = vsel %vm1020, %v739, 0
    %v1058 = vsel %vm1020, %v776, 0
    %v1061 = vsel %vm1020, %v777, 0
    %v1064 = vsel %vm1020, %v788, 0
    %v1067 = vsel %vm1020, %v789, 0
    %1069 = vmatprep.subr.mxu0 %v981
    %1070 = vmatpush1.msra.mxu0 %v980
    %1071 = vmatprep.subr.mxu0 %v1001
    %1072 = vmatpush1.msra.mxu0 %v1000
    %1073 = vmatprep.subr.mxu0 0.0
    %1074 = vmatpush1.msra.mxu0 0.0
    %1075 = vmatprep.subr.mxu0 0.0
    %1076 = vmatpush1.msra.mxu0 0.0
    %1077 = vmatprep.subr.mxu0 0.0
    %1078 = vmatpush1.msra.mxu0 0.0
    %1079 = vmatprep.subr.mxu0 0.0
    %1080 = vmatpush1.msra.mxu0 0.0
    %1081 = vmatprep.subr.mxu0 0.0
    %1082 = vmatpush1.msra.mxu0 0.0
    %1083 = vmatprep.subr.mxu0 0.0
    %1084 = vmatpush1.msra.mxu0 0.0
    %1085 = vmatprep.subr.mxu0 0.0
    %1086 = vmatpush1.msra.mxu0 0.0
    %1087 = vmatprep.subr.mxu0 0.0
    %1088 = vmatpush1.msra.mxu0 0.0
    %1089 = vmatprep.subr.mxu0 0.0
    %1090 = vmatpush1.msra.mxu0 0.0
    %1091 = vmatprep.subr.mxu0 0.0
    %1092 = vmatpush1.msra.mxu0 0.0
    %1093 = vmatprep.subr.mxu0 0.0
    %1094 = vmatpush1.msra.mxu0 0.0
    %1095 = vmatprep.subr.mxu0 0.0
    %1096 = vmatpush1.msra.mxu0 0.0
    %1097 = vmatprep.subr.mxu0 0.0
    %1098 = vmatpush1.msra.mxu0 0.0
    %1099 = vmatprep.subr.mxu0 0.0
    %1100 = vmatpush1.msra.mxu0 0.0
    %1101 = vmatprep.subr.mxu0 0.0
    %1102 = vmatpush1.msra.mxu0 0.0
    %1103 = vmatprep.subr.mxu0 0.0
    %1104 = vmatpush1.msra.mxu0 0.0
    %1105 = vmatprep.subr.mxu0 0.0
    %1106 = vmatpush1.msra.mxu0 0.0
    %1107 = vmatprep.subr.mxu0 0.0
    %1108 = vmatpush1.msra.mxu0 0.0
    %1109 = vmatprep.subr.mxu0 0.0
    %1110 = vmatpush1.msra.mxu0 0.0
    %1111 = vmatprep.subr.mxu0 0.0
    %1112 = vmatpush1.msra.mxu0 0.0
    %1113 = vmatprep.subr.mxu0 0.0
    %1114 = vmatpush1.msra.mxu0 0.0
    %1115 = vmatprep.subr.mxu0 0.0
    %1116 = vmatpush1.msra.mxu0 0.0
    %1117 = vmatprep.subr.mxu0 0.0
    %1118 = vmatpush1.msra.mxu0 0.0
    %1119 = vmatprep.subr.mxu0 0.0
    %1120 = vmatpush1.msra.mxu0 0.0
    %1121 = vmatprep.subr.mxu0 0.0
    %1122 = vmatpush1.msra.mxu0 0.0
    %1123 = vmatprep.subr.mxu0 0.0
    %1124 = vmatpush1.msra.mxu0 0.0
    %1125 = vmatprep.subr.mxu0 0.0
    %1126 = vmatpush1.msra.mxu0 0.0
    %1127 = vmatprep.subr.mxu0 0.0
    %1128 = vmatpush1.msra.mxu0 0.0
    %1129 = vmatprep.subr.mxu0 0.0
    %1130 = vmatpush1.msra.mxu0 0.0
    %1131 = vmatprep.subr.mxu0 0.0
    %1132 = vmatpush1.msra.mxu0 0.0
    %1133 = vmatprep.mubr.f32.mxu0 0.0
    %1134 = vmatmul.mubr.f32.gmra.mrb[0].mxu0 %v1022
    %v1135 = vpop.f32.mrb[0].mxu0
    %v1136 = vadd.f32 0.0, %v1135
    %v1137 = vpop.f32.mrb[0].mxu0
    %v1138 = vadd.f32 0.0, %v1137
    %1139 = vmatprep.mubr.f32.mxu0 0.0
    %1140 = vmatmul.mubr.f32.gmra.mrb[0].mxu0 %v1025
    %v1141 = vpop.f32.mrb[0].mxu0
    %v1142 = vadd.f32 0.0, %v1141
    %v1143 = vpop.f32.mrb[0].mxu0
    %v1144 = vadd.f32 0.0, %v1143
    %1145 = vmatprep.mubr.f32.mxu0 0.0
    %1146 = vmatmul.mubr.f32.gmra.mrb[0].mxu0 %v1028
    %v1147 = vpop.f32.mrb[0].mxu0
    %v1148 = vadd.f32 0.0, %v1147
    %v1149 = vpop.f32.mrb[0].mxu0
    %v1150 = vadd.f32 0.0, %v1149
    %1151 = vmatprep.mubr.f32.mxu0 0.0
    %1152 = vmatmul.mubr.f32.gmra.mrb[0].mxu0 %v1031
    %v1153 = vpop.f32.mrb[0].mxu0
    %v1154 = vadd.f32 0.0, %v1153
    %v1155 = vpop.f32.mrb[0].mxu0
    %v1156 = vadd.f32 0.0, %v1155
    %1157 = vmatprep.mubr.f32.mxu0 0.0
    %1158 = vmatmul.mubr.f32.gmra.mrb[0].mxu0 %v1034
    %v1159 = vpop.f32.mrb[0].mxu0
    %v1160 = vadd.f32 0.0, %v1159
    %v1161 = vpop.f32.mrb[0].mxu0
    %v1162 = vadd.f32 0.0, %v1161
    %1163 = vmatprep.mubr.f32.mxu0 0.0
    %1164 = vmatmul.mubr.f32.gmra.mrb[0].mxu0 %v1037
    %v1165 = vpop.f32.mrb[0].mxu0
    %v1166 = vadd.f32 0.0, %v1165
    %v1167 = vpop.f32.mrb[0].mxu0
    %v1168 = vadd.f32 0.0, %v1167
    %1169 = vmatprep.mubr.f32.mxu0 0.0
    %1170 = vmatmul.mubr.f32.gmra.mrb[0].mxu0 %v1040
    %v1171 = vpop.f32.mrb[0].mxu0
    %v1172 = vadd.f32 0.0, %v1171
    %v1173 = vpop.f32.mrb[0].mxu0
    %v1174 = vadd.f32 0.0, %v1173
    %1175 = vmatprep.mubr.f32.mxu0 0.0
    %1176 = vmatmul.mubr.f32.gmra.mrb[0].mxu0 %v1043
    %v1177 = vpop.f32.mrb[0].mxu0
    %v1178 = vadd.f32 0.0, %v1177
    %v1179 = vpop.f32.mrb[0].mxu0
    %v1180 = vadd.f32 0.0, %v1179
    %1181 = vmatprep.mubr.f32.mxu0 0.0
    %1182 = vmatmul.mubr.f32.gmra.mrb[0].mxu0 %v1046
    %v1183 = vpop.f32.mrb[0].mxu0
    %v1184 = vadd.f32 0.0, %v1183
    %v1185 = vpop.f32.mrb[0].mxu0
    %v1186 = vadd.f32 0.0, %v1185
    %1187 = vmatprep.mubr.f32.mxu0 0.0
    %1188 = vmatmul.mubr.f32.gmra.mrb[0].mxu0 %v1049
    %v1189 = vpop.f32.mrb[0].mxu0
    %v1190 = vadd.f32 0.0, %v1189
    %v1191 = vpop.f32.mrb[0].mxu0
    %v1192 = vadd.f32 0.0, %v1191
    %1193 = vmatprep.mubr.f32.mxu0 0.0
    %1194 = vmatmul.mubr.f32.gmra.mrb[0].mxu0 %v1052
    %v1195 = vpop.f32.mrb[0].mxu0
    %v1196 = vadd.f32 0.0, %v1195
    %v1197 = vpop.f32.mrb[0].mxu0
    %v1198 = vadd.f32 0.0, %v1197
    %1199 = vmatprep.mubr.f32.mxu0 0.0
    %1200 = vmatmul.mubr.f32.gmra.mrb[0].mxu0 %v1055
    %v1201 = vpop.f32.mrb[0].mxu0
    %v1202 = vadd.f32 0.0, %v1201
    %v1203 = vpop.f32.mrb[0].mxu0
    %v1204 = vadd.f32 0.0, %v1203
    %1205 = vmatprep.mubr.f32.mxu0 0.0
    %1206 = vmatmul.mubr.f32.gmra.mrb[0].mxu0 %v1058
    %v1207 = vpop.f32.mrb[0].mxu0
    %v1208 = vadd.f32 0.0, %v1207
    %v1209 = vpop.f32.mrb[0].mxu0
    %v1210 = vadd.f32 0.0, %v1209
    %1211 = vmatprep.mubr.f32.mxu0 0.0
    %1212 = vmatmul.mubr.f32.gmra.mrb[0].mxu0 %v1061
    %v1213 = vpop.f32.mrb[0].mxu0
    %v1214 = vadd.f32 0.0, %v1213
    %v1215 = vpop.f32.mrb[0].mxu0
    %v1216 = vadd.f32 0.0, %v1215
    %1217 = vmatprep.mubr.f32.mxu0 0.0
    %1218 = vmatmul.mubr.f32.gmra.mrb[0].mxu0 %v1064
    %v1219 = vpop.f32.mrb[0].mxu0
    %v1220 = vadd.f32 0.0, %v1219
    %v1221 = vpop.f32.mrb[0].mxu0
    %v1222 = vadd.f32 0.0, %v1221
    %1223 = vmatprep.mubr.f32.mxu0 0.0
    %1224 = vmatmul.mubr.f32.gmra.mrb[0].mxu0 %v1067
    %v1225 = vpop.f32.mrb[0].mxu0
    %v1226 = vadd.f32 0.0, %v1225
    %v1227 = vpop.f32.mrb[0].mxu0
    %v1228 = vadd.f32 0.0, %v1227
    %1229 = vdwg.mxu0
    %1230 = vmatprep.subr.mxu0 %v983
    %1231 = vmatpush1.msra.mxu0 %v982
    %1232 = vmatprep.subr.mxu0 %v1003
    %1233 = vmatpush1.msra.mxu0 %v1002
    %1234 = vmatprep.subr.mxu0 0.0
    %1235 = vmatpush1.msra.mxu0 0.0
    %1236 = vmatprep.subr.mxu0 0.0
    %1237 = vmatpush1.msra.mxu0 0.0
    %1238 = vmatprep.subr.mxu0 0.0
    %1239 = vmatpush1.msra.mxu0 0.0
    %1240 = vmatprep.subr.mxu0 0.0
    %1241 = vmatpush1.msra.mxu0 0.0
    %1242 = vmatprep.subr.mxu0 0.0
    %1243 = vmatpush1.msra.mxu0 0.0
    %1244 = vmatprep.subr.mxu0 0.0
    %1245 = vmatpush1.msra.mxu0 0.0
    %1246 = vmatprep.subr.mxu0 0.0
    %1247 = vmatpush1.msra.mxu0 0.0
    %1248 = vmatprep.subr.mxu0 0.0
    %1249 = vmatpush1.msra.mxu0 0.0
    %1250 = vmatprep.subr.mxu0 0.0
    %1251 = vmatpush1.msra.mxu0 0.0
    %1252 = vmatprep.subr.mxu0 0.0
    %1253 = vmatpush1.msra.mxu0 0.0
    %1254 = vmatprep.subr.mxu0 0.0
    %1255 = vmatpush1.msra.mxu0 0.0
    %1256 = vmatprep.subr.mxu0 0.0
    %1257 = vmatpush1.msra.mxu0 0.0
    %1258 = vmatprep.subr.mxu0 0.0
    %1259 = vmatpush1.msra.mxu0 0.0
    %1260 = vmatprep.subr.mxu0 0.0
    %1261 = vmatpush1.msra.mxu0 0.0
    %1262 = vmatprep.subr.mxu0 0.0
    %1263 = vmatpush1.msra.mxu0 0.0
    %1264 = vmatprep.subr.mxu0 0.0
    %1265 = vmatpush1.msra.mxu0 0.0
    %1266 = vmatprep.subr.mxu0 0.0
    %1267 = vmatpush1.msra.mxu0 0.0
    %1268 = vmatprep.subr.mxu0 0.0
    %1269 = vmatpush1.msra.mxu0 0.0
    %1270 = vmatprep.subr.mxu0 0.0
    %1271 = vmatpush1.msra.mxu0 0.0
    %1272 = vmatprep.subr.mxu0 0.0
    %1273 = vmatpush1.msra.mxu0 0.0
    %1274 = vmatprep.subr.mxu0 0.0
    %1275 = vmatpush1.msra.mxu0 0.0
    %1276 = vmatprep.subr.mxu0 0.0
    %1277 = vmatpush1.msra.mxu0 0.0
    %1278 = vmatprep.subr.mxu0 0.0
    %1279 = vmatpush1.msra.mxu0 0.0
    %1280 = vmatprep.subr.mxu0 0.0
    %1281 = vmatpush1.msra.mxu0 0.0
    %1282 = vmatprep.subr.mxu0 0.0
    %1283 = vmatpush1.msra.mxu0 0.0
    %1284 = vmatprep.subr.mxu0 0.0
    %1285 = vmatpush1.msra.mxu0 0.0
    %1286 = vmatprep.subr.mxu0 0.0
    %1287 = vmatpush1.msra.mxu0 0.0
    %1288 = vmatprep.subr.mxu0 0.0
    %1289 = vmatpush1.msra.mxu0 0.0
    %1290 = vmatprep.subr.mxu0 0.0
    %1291 = vmatpush1.msra.mxu0 0.0
    %1292 = vmatprep.subr.mxu0 0.0
    %1293 = vmatpush1.msra.mxu0 0.0
    %1294 = vmatprep.mubr.f32.mxu0 0.0
    %1295 = vmatmul.mubr.f32.gmra.mrb[0].mxu0 %v1022
    %v1296 = vpop.f32.mrb[0].mxu0
    %v1297 = vadd.f32 0.0, %v1296
    %v1298 = vpop.f32.mrb[0].mxu0
    %v1299 = vadd.f32 0.0, %v1298
    %1300 = vmatprep.mubr.f32.mxu0 0.0
    %1301 = vmatmul.mubr.f32.gmra.mrb[0].mxu0 %v1025
    %v1302 = vpop.f32.mrb[0].mxu0
    %v1303 = vadd.f32 0.0, %v1302
    %v1304 = vpop.f32.mrb[0].mxu0
    %v1305 = vadd.f32 0.0, %v1304
    %1306 = vmatprep.mubr.f32.mxu0 0.0
    %1307 = vmatmul.mubr.f32.gmra.mrb[0].mxu0 %v1028
    %v1308 = vpop.f32.mrb[0].mxu0
    %v1309 = vadd.f32 0.0, %v1308
    %v1310 = vpop.f32.mrb[0].mxu0
    %v1311 = vadd.f32 0.0, %v1310
    %1312 = vmatprep.mubr.f32.mxu0 0.0
    %1313 = vmatmul.mubr.f32.gmra.mrb[0].mxu0 %v1031
    %v1314 = vpop.f32.mrb[0].mxu0
    %v1315 = vadd.f32 0.0, %v1314
    %v1316 = vpop.f32.mrb[0].mxu0
    %v1317 = vadd.f32 0.0, %v1316
    %1318 = vmatprep.mubr.f32.mxu0 0.0
    %1319 = vmatmul.mubr.f32.gmra.mrb[0].mxu0 %v1034
    %v1320 = vpop.f32.mrb[0].mxu0
    %v1321 = vadd.f32 0.0, %v1320
    %v1322 = vpop.f32.mrb[0].mxu0
    %v1323 = vadd.f32 0.0, %v1322
    %1324 = vmatprep.mubr.f32.mxu0 0.0
    %1325 = vmatmul.mubr.f32.gmra.mrb[0].mxu0 %v1037
    %v1326 = vpop.f32.mrb[0].mxu0
    %v1327 = vadd.f32 0.0, %v1326
    %v1328 = vpop.f32.mrb[0].mxu0
    %v1329 = vadd.f32 0.0, %v1328
    %1330 = vmatprep.mubr.f32.mxu0 0.0
    %1331 = vmatmul.mubr.f32.gmra.mrb[0].mxu0 %v1040
    %v1332 = vpop.f32.mrb[0].mxu0
    %v1333 = vadd.f32 0.0, %v1332
    %v1334 = vpop.f32.mrb[0].mxu0
    %v1335 = vadd.f32 0.0, %v1334
    %1336 = vmatprep.mubr.f32.mxu0 0.0
    %1337 = vmatmul.mubr.f32.gmra.mrb[0].mxu0 %v1043
    %v1338 = vpop.f32.mrb[0].mxu0
    %v1339 = vadd.f32 0.0, %v1338
    %v1340 = vpop.f32.mrb[0].mxu0
    %v1341 = vadd.f32 0.0, %v1340
    %1342 = vmatprep.mubr.f32.mxu0 0.0
    %1343 = vmatmul.mubr.f32.gmra.mrb[0].mxu0 %v1046
    %v1344 = vpop.f32.mrb[0].mxu0
    %v1345 = vadd.f32 0.0, %v1344
    %v1346 = vpop.f32.mrb[0].mxu0
    %v1347 = vadd.f32 0.0, %v1346
    %1348 = vmatprep.mubr.f32.mxu0 0.0
    %1349 = vmatmul.mubr.f32.gmra.mrb[0].mxu0 %v1049
    %v1350 = vpop.f32.mrb[0].mxu0
    %v1351 = vadd.f32 0.0, %v1350
    %v1352 = vpop.f32.mrb[0].mxu0
    %v1353 = vadd.f32 0.0, %v1352
    %1354 = vmatprep.mubr.f32.mxu0 0.0
    %1355 = vmatmul.mubr.f32.gmra.mrb[0].mxu0 %v1052
    %v1356 = vpop.f32.mrb[0].mxu0
    %v1357 = vadd.f32 0.0, %v1356
    %v1358 = vpop.f32.mrb[0].mxu0
    %v1359 = vadd.f32 0.0, %v1358
    %1360 = vmatprep.mubr.f32.mxu0 0.0
    %1361 = vmatmul.mubr.f32.gmra.mrb[0].mxu0 %v1055
    %v1362 = vpop.f32.mrb[0].mxu0
    %v1363 = vadd.f32 0.0, %v1362
    %v1364 = vpop.f32.mrb[0].mxu0
    %v1365 = vadd.f32 0.0, %v1364
    %1366 = vmatprep.mubr.f32.mxu0 0.0
    %1367 = vmatmul.mubr.f32.gmra.mrb[0].mxu0 %v1058
    %v1368 = vpop.f32.mrb[0].mxu0
    %v1369 = vadd.f32 0.0, %v1368
    %v1370 = vpop.f32.mrb[0].mxu0
    %v1371 = vadd.f32 0.0, %v1370
    %1372 = vmatprep.mubr.f32.mxu0 0.0
    %1373 = vmatmul.mubr.f32.gmra.mrb[0].mxu0 %v1061
    %v1374 = vpop.f32.mrb[0].mxu0
    %v1375 = vadd.f32 0.0, %v1374
    %v1376 = vpop.f32.mrb[0].mxu0
    %v1377 = vadd.f32 0.0, %v1376
    %1378 = vmatprep.mubr.f32.mxu0 0.0
    %1379 = vmatmul.mubr.f32.gmra.mrb[0].mxu0 %v1064
    %v1380 = vpop.f32.mrb[0].mxu0
    %v1381 = vadd.f32 0.0, %v1380
    %v1382 = vpop.f32.mrb[0].mxu0
    %v1383 = vadd.f32 0.0, %v1382
    %1384 = vmatprep.mubr.f32.mxu0 0.0
    %1385 = vmatmul.mubr.f32.gmra.mrb[0].mxu0 %v1067
    %v1386 = vpop.f32.mrb[0].mxu0
    %v1387 = vadd.f32 0.0, %v1386
    %v1388 = vpop.f32.mrb[0].mxu0
    %v1389 = vadd.f32 0.0, %v1388
    %1390 = vdwg.mxu0
    %1391 = vmatprep.subr.mxu0 %v985
    %1392 = vmatpush1.msra.mxu0 %v984
    %1393 = vmatprep.subr.mxu0 %v1005
    %1394 = vmatpush1.msra.mxu0 %v1004
    %1395 = vmatprep.subr.mxu0 0.0
    %1396 = vmatpush1.msra.mxu0 0.0
    %1397 = vmatprep.subr.mxu0 0.0
    %1398 = vmatpush1.msra.mxu0 0.0
    %1399 = vmatprep.subr.mxu0 0.0
    %1400 = vmatpush1.msra.mxu0 0.0
    %1401 = vmatprep.subr.mxu0 0.0
    %1402 = vmatpush1.msra.mxu0 0.0
    %1403 = vmatprep.subr.mxu0 0.0
    %1404 = vmatpush1.msra.mxu0 0.0
    %1405 = vmatprep.subr.mxu0 0.0
    %1406 = vmatpush1.msra.mxu0 0.0
    %1407 = vmatprep.subr.mxu0 0.0
    %1408 = vmatpush1.msra.mxu0 0.0
    %1409 = vmatprep.subr.mxu0 0.0
    %1410 = vmatpush1.msra.mxu0 0.0
    %1411 = vmatprep.subr.mxu0 0.0
    %1412 = vmatpush1.msra.mxu0 0.0
    %1413 = vmatprep.subr.mxu0 0.0
    %1414 = vmatpush1.msra.mxu0 0.0
    %1415 = vmatprep.subr.mxu0 0.0
    %1416 = vmatpush1.msra.mxu0 0.0
    %1417 = vmatprep.subr.mxu0 0.0
    %1418 = vmatpush1.msra.mxu0 0.0
    %1419 = vmatprep.subr.mxu0 0.0
    %1420 = vmatpush1.msra.mxu0 0.0
    %1421 = vmatprep.subr.mxu0 0.0
    %1422 = vmatpush1.msra.mxu0 0.0
    %1423 = vmatprep.subr.mxu0 0.0
    %1424 = vmatpush1.msra.mxu0 0.0
    %1425 = vmatprep.subr.mxu0 0.0
    %1426 = vmatpush1.msra.mxu0 0.0
    %1427 = vmatprep.subr.mxu0 0.0
    %1428 = vmatpush1.msra.mxu0 0.0
    %1429 = vmatprep.subr.mxu0 0.0
    %1430 = vmatpush1.msra.mxu0 0.0
    %1431 = vmatprep.subr.mxu0 0.0
    %1432 = vmatpush1.msra.mxu0 0.0
    %1433 = vmatprep.subr.mxu0 0.0
    %1434 = vmatpush1.msra.mxu0 0.0
    %1435 = vmatprep.subr.mxu0 0.0
    %1436 = vmatpush1.msra.mxu0 0.0
    %1437 = vmatprep.subr.mxu0 0.0
    %1438 = vmatpush1.msra.mxu0 0.0
    %1439 = vmatprep.subr.mxu0 0.0
    %1440 = vmatpush1.msra.mxu0 0.0
    %1441 = vmatprep.subr.mxu0 0.0
    %1442 = vmatpush1.msra.mxu0 0.0
    %1443 = vmatprep.subr.mxu0 0.0
    %1444 = vmatpush1.msra.mxu0 0.0
    %1445 = vmatprep.subr.mxu0 0.0
    %1446 = vmatpush1.msra.mxu0 0.0
    %1447 = vmatprep.subr.mxu0 0.0
    %1448 = vmatpush1.msra.mxu0 0.0
    %1449 = vmatprep.subr.mxu0 0.0
    %1450 = vmatpush1.msra.mxu0 0.0
    %1451 = vmatprep.subr.mxu0 0.0
    %1452 = vmatpush1.msra.mxu0 0.0
    %1453 = vmatprep.subr.mxu0 0.0
    %1454 = vmatpush1.msra.mxu0 0.0
    %1455 = vmatprep.mubr.f32.mxu0 0.0
    %1456 = vmatmul.mubr.f32.gmra.mrb[0].mxu0 %v1022
    %v1457 = vpop.f32.mrb[0].mxu0
    %v1458 = vadd.f32 0.0, %v1457
    %v1459 = vpop.f32.mrb[0].mxu0
    %v1460 = vadd.f32 0.0, %v1459
    %1461 = vmatprep.mubr.f32.mxu0 0.0
    %1462 = vmatmul.mubr.f32.gmra.mrb[0].mxu0 %v1025
    %v1463 = vpop.f32.mrb[0].mxu0
    %v1464 = vadd.f32 0.0, %v1463
    %v1465 = vpop.f32.mrb[0].mxu0
    %v1466 = vadd.f32 0.0, %v1465
    %1467 = vmatprep.mubr.f32.mxu0 0.0
    %1468 = vmatmul.mubr.f32.gmra.mrb[0].mxu0 %v1028
    %v1469 = vpop.f32.mrb[0].mxu0
    %v1470 = vadd.f32 0.0, %v1469
    %v1471 = vpop.f32.mrb[0].mxu0
    %v1472 = vadd.f32 0.0, %v1471
    %1473 = vmatprep.mubr.f32.mxu0 0.0
    %1474 = vmatmul.mubr.f32.gmra.mrb[0].mxu0 %v1031
    %v1475 = vpop.f32.mrb[0].mxu0
    %v1476 = vadd.f32 0.0, %v1475
    %v1477 = vpop.f32.mrb[0].mxu0
    %v1478 = vadd.f32 0.0, %v1477
    %1479 = vmatprep.mubr.f32.mxu0 0.0
    %1480 = vmatmul.mubr.f32.gmra.mrb[0].mxu0 %v1034
    %v1481 = vpop.f32.mrb[0].mxu0
    %v1482 = vadd.f32 0.0, %v1481
    %v1483 = vpop.f32.mrb[0].mxu0
    %v1484 = vadd.f32 0.0, %v1483
    %1485 = vmatprep.mubr.f32.mxu0 0.0
    %1486 = vmatmul.mubr.f32.gmra.mrb[0].mxu0 %v1037
    %v1487 = vpop.f32.mrb[0].mxu0
    %v1488 = vadd.f32 0.0, %v1487
    %v1489 = vpop.f32.mrb[0].mxu0
    %v1490 = vadd.f32 0.0, %v1489
    %1491 = vmatprep.mubr.f32.mxu0 0.0
    %1492 = vmatmul.mubr.f32.gmra.mrb[0].mxu0 %v1040
    %v1493 = vpop.f32.mrb[0].mxu0
    %v1494 = vadd.f32 0.0, %v1493
    %v1495 = vpop.f32.mrb[0].mxu0
    %v1496 = vadd.f32 0.0, %v1495
    %1497 = vmatprep.mubr.f32.mxu0 0.0
    %1498 = vmatmul.mubr.f32.gmra.mrb[0].mxu0 %v1043
    %v1499 = vpop.f32.mrb[0].mxu0
    %v1500 = vadd.f32 0.0, %v1499
    %v1501 = vpop.f32.mrb[0].mxu0
    %v1502 = vadd.f32 0.0, %v1501
    %1503 = vmatprep.mubr.f32.mxu0 0.0
    %1504 = vmatmul.mubr.f32.gmra.mrb[0].mxu0 %v1046
    %v1505 = vpop.f32.mrb[0].mxu0
    %v1506 = vadd.f32 0.0, %v1505
    %v1507 = vpop.f32.mrb[0].mxu0
    %v1508 = vadd.f32 0.0, %v1507
    %1509 = vmatprep.mubr.f32.mxu0 0.0
    %1510 = vmatmul.mubr.f32.gmra.mrb[0].mxu0 %v1049
    %v1511 = vpop.f32.mrb[0].mxu0
    %v1512 = vadd.f32 0.0, %v1511
    %v1513 = vpop.f32.mrb[0].mxu0
    %v1514 = vadd.f32 0.0, %v1513
    %1515 = vmatprep.mubr.f32.mxu0 0.0
    %1516 = vmatmul.mubr.f32.gmra.mrb[0].mxu0 %v1052
    %v1517 = vpop.f32.mrb[0].mxu0
    %v1518 = vadd.f32 0.0, %v1517
    %v1519 = vpop.f32.mrb[0].mxu0
    %v1520 = vadd.f32 0.0, %v1519
    %1521 = vmatprep.mubr.f32.mxu0 0.0
    %1522 = vmatmul.mubr.f32.gmra.mrb[0].mxu0 %v1055
    %v1523 = vpop.f32.mrb[0].mxu0
    %v1524 = vadd.f32 0.0, %v1523
    %v1525 = vpop.f32.mrb[0].mxu0
    %v1526 = vadd.f32 0.0, %v1525
    %1527 = vmatprep.mubr.f32.mxu0 0.0
    %1528 = vmatmul.mubr.f32.gmra.mrb[0].mxu0 %v1058
    %v1529 = vpop.f32.mrb[0].mxu0
    %v1530 = vadd.f32 0.0, %v1529
    %v1531 = vpop.f32.mrb[0].mxu0
    %v1532 = vadd.f32 0.0, %v1531
    %1533 = vmatprep.mubr.f32.mxu0 0.0
    %1534 = vmatmul.mubr.f32.gmra.mrb[0].mxu0 %v1061
    %v1535 = vpop.f32.mrb[0].mxu0
    %v1536 = vadd.f32 0.0, %v1535
    %v1537 = vpop.f32.mrb[0].mxu0
    %v1538 = vadd.f32 0.0, %v1537
    %1539 = vmatprep.mubr.f32.mxu0 0.0
    %1540 = vmatmul.mubr.f32.gmra.mrb[0].mxu0 %v1064
    %v1541 = vpop.f32.mrb[0].mxu0
    %v1542 = vadd.f32 0.0, %v1541
    %v1543 = vpop.f32.mrb[0].mxu0
    %v1544 = vadd.f32 0.0, %v1543
    %1545 = vmatprep.mubr.f32.mxu0 0.0
    %1546 = vmatmul.mubr.f32.gmra.mrb[0].mxu0 %v1067
    %v1547 = vpop.f32.mrb[0].mxu0
    %v1548 = vadd.f32 0.0, %v1547
    %v1549 = vpop.f32.mrb[0].mxu0
    %v1550 = vadd.f32 0.0, %v1549
    %1551 = vdwg.mxu0
    %1552 = vmatprep.subr.mxu0 %v987
    %1553 = vmatpush1.msra.mxu0 %v986
    %1554 = vmatprep.subr.mxu0 %v1007
    %1555 = vmatpush1.msra.mxu0 %v1006
    %1556 = vmatprep.subr.mxu0 0.0
    %1557 = vmatpush1.msra.mxu0 0.0
    %1558 = vmatprep.subr.mxu0 0.0
    %1559 = vmatpush1.msra.mxu0 0.0
    %1560 = vmatprep.subr.mxu0 0.0
    %1561 = vmatpush1.msra.mxu0 0.0
    %1562 = vmatprep.subr.mxu0 0.0
    %1563 = vmatpush1.msra.mxu0 0.0
    %1564 = vmatprep.subr.mxu0 0.0
    %1565 = vmatpush1.msra.mxu0 0.0
    %1566 = vmatprep.subr.mxu0 0.0
    %1567 = vmatpush1.msra.mxu0 0.0
    %1568 = vmatprep.subr.mxu0 0.0
    %1569 = vmatpush1.msra.mxu0 0.0
    %1570 = vmatprep.subr.mxu0 0.0
    %1571 = vmatpush1.msra.mxu0 0.0
    %1572 = vmatprep.subr.mxu0 0.0
    %1573 = vmatpush1.msra.mxu0 0.0
    %1574 = vmatprep.subr.mxu0 0.0
    %1575 = vmatpush1.msra.mxu0 0.0
    %1576 = vmatprep.subr.mxu0 0.0
    %1577 = vmatpush1.msra.mxu0 0.0
    %1578 = vmatprep.subr.mxu0 0.0
    %1579 = vmatpush1.msra.mxu0 0.0
    %1580 = vmatprep.subr.mxu0 0.0
    %1581 = vmatpush1.msra.mxu0 0.0
    %1582 = vmatprep.subr.mxu0 0.0
    %1583 = vmatpush1.msra.mxu0 0.0
    %1584 = vmatprep.subr.mxu0 0.0
    %1585 = vmatpush1.msra.mxu0 0.0
    %1586 = vmatprep.subr.mxu0 0.0
    %1587 = vmatpush1.msra.mxu0 0.0
    %1588 = vmatprep.subr.mxu0 0.0
    %1589 = vmatpush1.msra.mxu0 0.0
    %1590 = vmatprep.subr.mxu0 0.0
    %1591 = vmatpush1.msra.mxu0 0.0
    %1592 = vmatprep.subr.mxu0 0.0
    %1593 = vmatpush1.msra.mxu0 0.0
    %1594 = vmatprep.subr.mxu0 0.0
    %1595 = vmatpush1.msra.mxu0 0.0
    %1596 = vmatprep.subr.mxu0 0.0
    %1597 = vmatpush1.msra.mxu0 0.0
    %1598 = vmatprep.subr.mxu0 0.0
    %1599 = vmatpush1.msra.mxu0 0.0
    %1600 = vmatprep.subr.mxu0 0.0
    %1601 = vmatpush1.msra.mxu0 0.0
    %1602 = vmatprep.subr.mxu0 0.0
    %1603 = vmatpush1.msra.mxu0 0.0
    %1604 = vmatprep.subr.mxu0 0.0
    %1605 = vmatpush1.msra.mxu0 0.0
    %1606 = vmatprep.subr.mxu0 0.0
    %1607 = vmatpush1.msra.mxu0 0.0
    %1608 = vmatprep.subr.mxu0 0.0
    %1609 = vmatpush1.msra.mxu0 0.0
    %1610 = vmatprep.subr.mxu0 0.0
    %1611 = vmatpush1.msra.mxu0 0.0
    %1612 = vmatprep.subr.mxu0 0.0
    %1613 = vmatpush1.msra.mxu0 0.0
    %1614 = vmatprep.subr.mxu0 0.0
    %1615 = vmatpush1.msra.mxu0 0.0
    %1616 = vmatprep.mubr.f32.mxu0 0.0
    %1617 = vmatmul.mubr.f32.gmra.mrb[0].mxu0 %v1022
    %v1618 = vpop.f32.mrb[0].mxu0
    %v1619 = vadd.f32 0.0, %v1618
    %v1620 = vpop.f32.mrb[0].mxu0
    %v1621 = vadd.f32 0.0, %v1620
    %1622 = vmatprep.mubr.f32.mxu0 0.0
    %1623 = vmatmul.mubr.f32.gmra.mrb[0].mxu0 %v1025
    %v1624 = vpop.f32.mrb[0].mxu0
    %v1625 = vadd.f32 0.0, %v1624
    %v1626 = vpop.f32.mrb[0].mxu0
    %v1627 = vadd.f32 0.0, %v1626
    %1628 = vmatprep.mubr.f32.mxu0 0.0
    %1629 = vmatmul.mubr.f32.gmra.mrb[0].mxu0 %v1028
    %v1630 = vpop.f32.mrb[0].mxu0
    %v1631 = vadd.f32 0.0, %v1630
    %v1632 = vpop.f32.mrb[0].mxu0
    %v1633 = vadd.f32 0.0, %v1632
    %1634 = vmatprep.mubr.f32.mxu0 0.0
    %1635 = vmatmul.mubr.f32.gmra.mrb[0].mxu0 %v1031
    %v1636 = vpop.f32.mrb[0].mxu0
    %v1637 = vadd.f32 0.0, %v1636
    %v1638 = vpop.f32.mrb[0].mxu0
    %v1639 = vadd.f32 0.0, %v1638
    %1640 = vmatprep.mubr.f32.mxu0 0.0
    %1641 = vmatmul.mubr.f32.gmra.mrb[0].mxu0 %v1034
    %v1642 = vpop.f32.mrb[0].mxu0
    %v1643 = vadd.f32 0.0, %v1642
    %v1644 = vpop.f32.mrb[0].mxu0
    %v1645 = vadd.f32 0.0, %v1644
    %1646 = vmatprep.mubr.f32.mxu0 0.0
    %1647 = vmatmul.mubr.f32.gmra.mrb[0].mxu0 %v1037
    %v1648 = vpop.f32.mrb[0].mxu0
    %v1649 = vadd.f32 0.0, %v1648
    %v1650 = vpop.f32.mrb[0].mxu0
    %v1651 = vadd.f32 0.0, %v1650
    %1652 = vmatprep.mubr.f32.mxu0 0.0
    %1653 = vmatmul.mubr.f32.gmra.mrb[0].mxu0 %v1040
    %v1654 = vpop.f32.mrb[0].mxu0
    %v1655 = vadd.f32 0.0, %v1654
    %v1656 = vpop.f32.mrb[0].mxu0
    %v1657 = vadd.f32 0.0, %v1656
    %1658 = vmatprep.mubr.f32.mxu0 0.0
    %1659 = vmatmul.mubr.f32.gmra.mrb[0].mxu0 %v1043
    %v1660 = vpop.f32.mrb[0].mxu0
    %v1661 = vadd.f32 0.0, %v1660
    %v1662 = vpop.f32.mrb[0].mxu0
    %v1663 = vadd.f32 0.0, %v1662
    %1664 = vmatprep.mubr.f32.mxu0 0.0
    %1665 = vmatmul.mubr.f32.gmra.mrb[0].mxu0 %v1046
    %v1666 = vpop.f32.mrb[0].mxu0
    %v1667 = vadd.f32 0.0, %v1666
    %v1668 = vpop.f32.mrb[0].mxu0
    %v1669 = vadd.f32 0.0, %v1668
    %1670 = vmatprep.mubr.f32.mxu0 0.0
    %1671 = vmatmul.mubr.f32.gmra.mrb[0].mxu0 %v1049
    %v1672 = vpop.f32.mrb[0].mxu0
    %v1673 = vadd.f32 0.0, %v1672
    %v1674 = vpop.f32.mrb[0].mxu0
    %v1675 = vadd.f32 0.0, %v1674
    %1676 = vmatprep.mubr.f32.mxu0 0.0
    %1677 = vmatmul.mubr.f32.gmra.mrb[0].mxu0 %v1052
    %v1678 = vpop.f32.mrb[0].mxu0
    %v1679 = vadd.f32 0.0, %v1678
    %v1680 = vpop.f32.mrb[0].mxu0
    %v1681 = vadd.f32 0.0, %v1680
    %1682 = vmatprep.mubr.f32.mxu0 0.0
    %1683 = vmatmul.mubr.f32.gmra.mrb[0].mxu0 %v1055
    %v1684 = vpop.f32.mrb[0].mxu0
    %v1685 = vadd.f32 0.0, %v1684
    %v1686 = vpop.f32.mrb[0].mxu0
    %v1687 = vadd.f32 0.0, %v1686
    %1688 = vmatprep.mubr.f32.mxu0 0.0
    %1689 = vmatmul.mubr.f32.gmra.mrb[0].mxu0 %v1058
    %v1690 = vpop.f32.mrb[0].mxu0
    %v1691 = vadd.f32 0.0, %v1690
    %v1692 = vpop.f32.mrb[0].mxu0
    %v1693 = vadd.f32 0.0, %v1692
    %1694 = vmatprep.mubr.f32.mxu0 0.0
    %1695 = vmatmul.mubr.f32.gmra.mrb[0].mxu0 %v1061
    %v1696 = vpop.f32.mrb[0].mxu0
    %v1697 = vadd.f32 0.0, %v1696
    %v1698 = vpop.f32.mrb[0].mxu0
    %v1699 = vadd.f32 0.0, %v1698
    %1700 = vmatprep.mubr.f32.mxu0 0.0
    %1701 = vmatmul.mubr.f32.gmra.mrb[0].mxu0 %v1064
    %v1702 = vpop.f32.mrb[0].mxu0
    %v1703 = vadd.f32 0.0, %v1702
    %v1704 = vpop.f32.mrb[0].mxu0
    %v1705 = vadd.f32 0.0, %v1704
    %1706 = vmatprep.mubr.f32.mxu0 0.0
    %1707 = vmatmul.mubr.f32.gmra.mrb[0].mxu0 %v1067
    %v1708 = vpop.f32.mrb[0].mxu0
    %v1709 = vadd.f32 0.0, %v1708
    %v1710 = vpop.f32.mrb[0].mxu0
    %v1711 = vadd.f32 0.0, %v1710
    %1712 = vdwg.mxu0
    %1713 = vmatprep.subr.mxu0 %v989
    %1714 = vmatpush1.msra.mxu0 %v988
    %1715 = vmatprep.subr.mxu0 %v1009
    %1716 = vmatpush1.msra.mxu0 %v1008
    %1717 = vmatprep.subr.mxu0 0.0
    %1718 = vmatpush1.msra.mxu0 0.0
    %1719 = vmatprep.subr.mxu0 0.0
    %1720 = vmatpush1.msra.mxu0 0.0
    %1721 = vmatprep.subr.mxu0 0.0
    %1722 = vmatpush1.msra.mxu0 0.0
    %1723 = vmatprep.subr.mxu0 0.0
    %1724 = vmatpush1.msra.mxu0 0.0
    %1725 = vmatprep.subr.mxu0 0.0
    %1726 = vmatpush1.msra.mxu0 0.0
    %1727 = vmatprep.subr.mxu0 0.0
    %1728 = vmatpush1.msra.mxu0 0.0
    %1729 = vmatprep.subr.mxu0 0.0
    %1730 = vmatpush1.msra.mxu0 0.0
    %1731 = vmatprep.subr.mxu0 0.0
    %1732 = vmatpush1.msra.mxu0 0.0
    %1733 = vmatprep.subr.mxu0 0.0
    %1734 = vmatpush1.msra.mxu0 0.0
    %1735 = vmatprep.subr.mxu0 0.0
    %1736 = vmatpush1.msra.mxu0 0.0
    %1737 = vmatprep.subr.mxu0 0.0
    %1738 = vmatpush1.msra.mxu0 0.0
    %1739 = vmatprep.subr.mxu0 0.0
    %1740 = vmatpush1.msra.mxu0 0.0
    %1741 = vmatprep.subr.mxu0 0.0
    %1742 = vmatpush1.msra.mxu0 0.0
    %1743 = vmatprep.subr.mxu0 0.0
    %1744 = vmatpush1.msra.mxu0 0.0
    %1745 = vmatprep.subr.mxu0 0.0
    %1746 = vmatpush1.msra.mxu0 0.0
    %1747 = vmatprep.subr.mxu0 0.0
    %1748 = vmatpush1.msra.mxu0 0.0
    %1749 = vmatprep.subr.mxu0 0.0
    %1750 = vmatpush1.msra.mxu0 0.0
    %1751 = vmatprep.subr.mxu0 0.0
    %1752 = vmatpush1.msra.mxu0 0.0
    %1753 = vmatprep.subr.mxu0 0.0
    %1754 = vmatpush1.msra.mxu0 0.0
    %1755 = vmatprep.subr.mxu0 0.0
    %1756 = vmatpush1.msra.mxu0 0.0
    %1757 = vmatprep.subr.mxu0 0.0
    %1758 = vmatpush1.msra.mxu0 0.0
    %1759 = vmatprep.subr.mxu0 0.0
    %1760 = vmatpush1.msra.mxu0 0.0
    %1761 = vmatprep.subr.mxu0 0.0
    %1762 = vmatpush1.msra.mxu0 0.0
    %1763 = vmatprep.subr.mxu0 0.0
    %1764 = vmatpush1.msra.mxu0 0.0
    %1765 = vmatprep.subr.mxu0 0.0
    %1766 = vmatpush1.msra.mxu0 0.0
    %1767 = vmatprep.subr.mxu0 0.0
    %1768 = vmatpush1.msra.mxu0 0.0
    %1769 = vmatprep.subr.mxu0 0.0
    %1770 = vmatpush1.msra.mxu0 0.0
    %1771 = vmatprep.subr.mxu0 0.0
    %1772 = vmatpush1.msra.mxu0 0.0
    %1773 = vmatprep.subr.mxu0 0.0
    %1774 = vmatpush1.msra.mxu0 0.0
    %1775 = vmatprep.subr.mxu0 0.0
    %1776 = vmatpush1.msra.mxu0 0.0
    %1777 = vmatprep.mubr.f32.mxu0 0.0
    %1778 = vmatmul.mubr.f32.gmra.mrb[0].mxu0 %v1022
    %v1779 = vpop.f32.mrb[0].mxu0
    %v1780 = vadd.f32 0.0, %v1779
    %v1781 = vpop.f32.mrb[0].mxu0
    %v1782 = vadd.f32 0.0, %v1781
    %1783 = vmatprep.mubr.f32.mxu0 0.0
    %1784 = vmatmul.mubr.f32.gmra.mrb[0].mxu0 %v1025
    %v1785 = vpop.f32.mrb[0].mxu0
    %v1786 = vadd.f32 0.0, %v1785
    %v1787 = vpop.f32.mrb[0].mxu0
    %v1788 = vadd.f32 0.0, %v1787
    %1789 = vmatprep.mubr.f32.mxu0 0.0
    %1790 = vmatmul.mubr.f32.gmra.mrb[0].mxu0 %v1028
    %v1791 = vpop.f32.mrb[0].mxu0
    %v1792 = vadd.f32 0.0, %v1791
    %v1793 = vpop.f32.mrb[0].mxu0
    %v1794 = vadd.f32 0.0, %v1793
    %1795 = vmatprep.mubr.f32.mxu0 0.0
    %1796 = vmatmul.mubr.f32.gmra.mrb[0].mxu0 %v1031
    %v1797 = vpop.f32.mrb[0].mxu0
    %v1798 = vadd.f32 0.0, %v1797
    %v1799 = vpop.f32.mrb[0].mxu0
    %v1800 = vadd.f32 0.0, %v1799
    %1801 = vmatprep.mubr.f32.mxu0 0.0
    %1802 = vmatmul.mubr.f32.gmra.mrb[0].mxu0 %v1034
    %v1803 = vpop.f32.mrb[0].mxu0
    %v1804 = vadd.f32 0.0, %v1803
    %v1805 = vpop.f32.mrb[0].mxu0
    %v1806 = vadd.f32 0.0, %v1805
    %1807 = vmatprep.mubr.f32.mxu0 0.0
    %1808 = vmatmul.mubr.f32.gmra.mrb[0].mxu0 %v1037
    %v1809 = vpop.f32.mrb[0].mxu0
    %v1810 = vadd.f32 0.0, %v1809
    %v1811 = vpop.f32.mrb[0].mxu0
    %v1812 = vadd.f32 0.0, %v1811
    %1813 = vmatprep.mubr.f32.mxu0 0.0
    %1814 = vmatmul.mubr.f32.gmra.mrb[0].mxu0 %v1040
    %v1815 = vpop.f32.mrb[0].mxu0
    %v1816 = vadd.f32 0.0, %v1815
    %v1817 = vpop.f32.mrb[0].mxu0
    %v1818 = vadd.f32 0.0, %v1817
    %1819 = vmatprep.mubr.f32.mxu0 0.0
    %1820 = vmatmul.mubr.f32.gmra.mrb[0].mxu0 %v1043
    %v1821 = vpop.f32.mrb[0].mxu0
    %v1822 = vadd.f32 0.0, %v1821
    %v1823 = vpop.f32.mrb[0].mxu0
    %v1824 = vadd.f32 0.0, %v1823
    %1825 = vmatprep.mubr.f32.mxu0 0.0
    %1826 = vmatmul.mubr.f32.gmra.mrb[0].mxu0 %v1046
    %v1827 = vpop.f32.mrb[0].mxu0
    %v1828 = vadd.f32 0.0, %v1827
    %v1829 = vpop.f32.mrb[0].mxu0
    %v1830 = vadd.f32 0.0, %v1829
    %1831 = vmatprep.mubr.f32.mxu0 0.0
    %1832 = vmatmul.mubr.f32.gmra.mrb[0].mxu0 %v1049
    %v1833 = vpop.f32.mrb[0].mxu0
    %v1834 = vadd.f32 0.0, %v1833
    %v1835 = vpop.f32.mrb[0].mxu0
    %v1836 = vadd.f32 0.0, %v1835
    %1837 = vmatprep.mubr.f32.mxu0 0.0
    %1838 = vmatmul.mubr.f32.gmra.mrb[0].mxu0 %v1052
    %v1839 = vpop.f32.mrb[0].mxu0
    %v1840 = vadd.f32 0.0, %v1839
    %v1841 = vpop.f32.mrb[0].mxu0
    %v1842 = vadd.f32 0.0, %v1841
    %1843 = vmatprep.mubr.f32.mxu0 0.0
    %1844 = vmatmul.mubr.f32.gmra.mrb[0].mxu0 %v1055
    %v1845 = vpop.f32.mrb[0].mxu0
    %v1846 = vadd.f32 0.0, %v1845
    %v1847 = vpop.f32.mrb[0].mxu0
    %v1848 = vadd.f32 0.0, %v1847
    %1849 = vmatprep.mubr.f32.mxu0 0.0
    %1850 = vmatmul.mubr.f32.gmra.mrb[0].mxu0 %v1058
    %v1851 = vpop.f32.mrb[0].mxu0
    %v1852 = vadd.f32 0.0, %v1851
    %v1853 = vpop.f32.mrb[0].mxu0
    %v1854 = vadd.f32 0.0, %v1853
    %1855 = vmatprep.mubr.f32.mxu0 0.0
    %1856 = vmatmul.mubr.f32.gmra.mrb[0].mxu0 %v1061
    %v1857 = vpop.f32.mrb[0].mxu0
    %v1858 = vadd.f32 0.0, %v1857
    %v1859 = vpop.f32.mrb[0].mxu0
    %v1860 = vadd.f32 0.0, %v1859
    %1861 = vmatprep.mubr.f32.mxu0 0.0
    %1862 = vmatmul.mubr.f32.gmra.mrb[0].mxu0 %v1064
    %v1863 = vpop.f32.mrb[0].mxu0
    %v1864 = vadd.f32 0.0, %v1863
    %v1865 = vpop.f32.mrb[0].mxu0
    %v1866 = vadd.f32 0.0, %v1865
    %1867 = vmatprep.mubr.f32.mxu0 0.0
    %1868 = vmatmul.mubr.f32.gmra.mrb[0].mxu0 %v1067
    %v1869 = vpop.f32.mrb[0].mxu0
    %v1870 = vadd.f32 0.0, %v1869
    %v1871 = vpop.f32.mrb[0].mxu0
    %v1872 = vadd.f32 0.0, %v1871
    %1873 = vdwg.mxu0
    %1874 = vmatprep.subr.mxu0 %v991
    %1875 = vmatpush1.msra.mxu0 %v990
    %1876 = vmatprep.subr.mxu0 %v1011
    %1877 = vmatpush1.msra.mxu0 %v1010
    %1878 = vmatprep.subr.mxu0 0.0
    %1879 = vmatpush1.msra.mxu0 0.0
    %1880 = vmatprep.subr.mxu0 0.0
    %1881 = vmatpush1.msra.mxu0 0.0
    %1882 = vmatprep.subr.mxu0 0.0
    %1883 = vmatpush1.msra.mxu0 0.0
    %1884 = vmatprep.subr.mxu0 0.0
    %1885 = vmatpush1.msra.mxu0 0.0
    %1886 = vmatprep.subr.mxu0 0.0
    %1887 = vmatpush1.msra.mxu0 0.0
    %1888 = vmatprep.subr.mxu0 0.0
    %1889 = vmatpush1.msra.mxu0 0.0
    %1890 = vmatprep.subr.mxu0 0.0
    %1891 = vmatpush1.msra.mxu0 0.0
    %1892 = vmatprep.subr.mxu0 0.0
    %1893 = vmatpush1.msra.mxu0 0.0
    %1894 = vmatprep.subr.mxu0 0.0
    %1895 = vmatpush1.msra.mxu0 0.0
    %1896 = vmatprep.subr.mxu0 0.0
    %1897 = vmatpush1.msra.mxu0 0.0
    %1898 = vmatprep.subr.mxu0 0.0
    %1899 = vmatpush1.msra.mxu0 0.0
    %1900 = vmatprep.subr.mxu0 0.0
    %1901 = vmatpush1.msra.mxu0 0.0
    %1902 = vmatprep.subr.mxu0 0.0
    %1903 = vmatpush1.msra.mxu0 0.0
    %1904 = vmatprep.subr.mxu0 0.0
    %1905 = vmatpush1.msra.mxu0 0.0
    %1906 = vmatprep.subr.mxu0 0.0
    %1907 = vmatpush1.msra.mxu0 0.0
    %1908 = vmatprep.subr.mxu0 0.0
    %1909 = vmatpush1.msra.mxu0 0.0
    %1910 = vmatprep.subr.mxu0 0.0
    %1911 = vmatpush1.msra.mxu0 0.0
    %1912 = vmatprep.subr.mxu0 0.0
    %1913 = vmatpush1.msra.mxu0 0.0
    %1914 = vmatprep.subr.mxu0 0.0
    %1915 = vmatpush1.msra.mxu0 0.0
    %1916 = vmatprep.subr.mxu0 0.0
    %1917 = vmatpush1.msra.mxu0 0.0
    %1918 = vmatprep.subr.mxu0 0.0
    %1919 = vmatpush1.msra.mxu0 0.0
    %1920 = vmatprep.subr.mxu0 0.0
    %1921 = vmatpush1.msra.mxu0 0.0
    %1922 = vmatprep.subr.mxu0 0.0
    %1923 = vmatpush1.msra.mxu0 0.0
    %1924 = vmatprep.subr.mxu0 0.0
    %1925 = vmatpush1.msra.mxu0 0.0
    %1926 = vmatprep.subr.mxu0 0.0
    %1927 = vmatpush1.msra.mxu0 0.0
    %1928 = vmatprep.subr.mxu0 0.0
    %1929 = vmatpush1.msra.mxu0 0.0
    %1930 = vmatprep.subr.mxu0 0.0
    %1931 = vmatpush1.msra.mxu0 0.0
    %1932 = vmatprep.subr.mxu0 0.0
    %1933 = vmatpush1.msra.mxu0 0.0
    %1934 = vmatprep.subr.mxu0 0.0
    %1935 = vmatpush1.msra.mxu0 0.0
    %1936 = vmatprep.subr.mxu0 0.0
    %1937 = vmatpush1.msra.mxu0 0.0
    %1938 = vmatprep.mubr.f32.mxu0 0.0
    %1939 = vmatmul.mubr.f32.gmra.mrb[0].mxu0 %v1022
    %v1940 = vpop.f32.mrb[0].mxu0
    %v1941 = vadd.f32 0.0, %v1940
    %v1942 = vpop.f32.mrb[0].mxu0
    %v1943 = vadd.f32 0.0, %v1942
    %1944 = vmatprep.mubr.f32.mxu0 0.0
    %1945 = vmatmul.mubr.f32.gmra.mrb[0].mxu0 %v1025
    %v1946 = vpop.f32.mrb[0].mxu0
    %v1947 = vadd.f32 0.0, %v1946
    %v1948 = vpop.f32.mrb[0].mxu0
    %v1949 = vadd.f32 0.0, %v1948
    %1950 = vmatprep.mubr.f32.mxu0 0.0
    %1951 = vmatmul.mubr.f32.gmra.mrb[0].mxu0 %v1028
    %v1952 = vpop.f32.mrb[0].mxu0
    %v1953 = vadd.f32 0.0, %v1952
    %v1954 = vpop.f32.mrb[0].mxu0
    %v1955 = vadd.f32 0.0, %v1954
    %1956 = vmatprep.mubr.f32.mxu0 0.0
    %1957 = vmatmul.mubr.f32.gmra.mrb[0].mxu0 %v1031
    %v1958 = vpop.f32.mrb[0].mxu0
    %v1959 = vadd.f32 0.0, %v1958
    %v1960 = vpop.f32.mrb[0].mxu0
    %v1961 = vadd.f32 0.0, %v1960
    %1962 = vmatprep.mubr.f32.mxu0 0.0
    %1963 = vmatmul.mubr.f32.gmra.mrb[0].mxu0 %v1034
    %v1964 = vpop.f32.mrb[0].mxu0
    %v1965 = vadd.f32 0.0, %v1964
    %v1966 = vpop.f32.mrb[0].mxu0
    %v1967 = vadd.f32 0.0, %v1966
    %1968 = vmatprep.mubr.f32.mxu0 0.0
    %1969 = vmatmul.mubr.f32.gmra.mrb[0].mxu0 %v1037
    %v1970 = vpop.f32.mrb[0].mxu0
    %v1971 = vadd.f32 0.0, %v1970
    %v1972 = vpop.f32.mrb[0].mxu0
    %v1973 = vadd.f32 0.0, %v1972
    %1974 = vmatprep.mubr.f32.mxu0 0.0
    %1975 = vmatmul.mubr.f32.gmra.mrb[0].mxu0 %v1040
    %v1976 = vpop.f32.mrb[0].mxu0
    %v1977 = vadd.f32 0.0, %v1976
    %v1978 = vpop.f32.mrb[0].mxu0
    %v1979 = vadd.f32 0.0, %v1978
    %1980 = vmatprep.mubr.f32.mxu0 0.0
    %1981 = vmatmul.mubr.f32.gmra.mrb[0].mxu0 %v1043
    %v1982 = vpop.f32.mrb[0].mxu0
    %v1983 = vadd.f32 0.0, %v1982
    %v1984 = vpop.f32.mrb[0].mxu0
    %v1985 = vadd.f32 0.0, %v1984
    %1986 = vmatprep.mubr.f32.mxu0 0.0
    %1987 = vmatmul.mubr.f32.gmra.mrb[0].mxu0 %v1046
    %v1988 = vpop.f32.mrb[0].mxu0
    %v1989 = vadd.f32 0.0, %v1988
    %v1990 = vpop.f32.mrb[0].mxu0
    %v1991 = vadd.f32 0.0, %v1990
    %1992 = vmatprep.mubr.f32.mxu0 0.0
    %1993 = vmatmul.mubr.f32.gmra.mrb[0].mxu0 %v1049
    %v1994 = vpop.f32.mrb[0].mxu0
    %v1995 = vadd.f32 0.0, %v1994
    %v1996 = vpop.f32.mrb[0].mxu0
    %v1997 = vadd.f32 0.0, %v1996
    %1998 = vmatprep.mubr.f32.mxu0 0.0
    %1999 = vmatmul.mubr.f32.gmra.mrb[0].mxu0 %v1052
    %v2000 = vpop.f32.mrb[0].mxu0
    %v2001 = vadd.f32 0.0, %v2000
    %v2002 = vpop.f32.mrb[0].mxu0
    %v2003 = vadd.f32 0.0, %v2002
    %2004 = vmatprep.mubr.f32.mxu0 0.0
    %2005 = vmatmul.mubr.f32.gmra.mrb[0].mxu0 %v1055
    %v2006 = vpop.f32.mrb[0].mxu0
    %v2007 = vadd.f32 0.0, %v2006
    %v2008 = vpop.f32.mrb[0].mxu0
    %v2009 = vadd.f32 0.0, %v2008
    %2010 = vmatprep.mubr.f32.mxu0 0.0
    %2011 = vmatmul.mubr.f32.gmra.mrb[0].mxu0 %v1058
    %v2012 = vpop.f32.mrb[0].mxu0
    %v2013 = vadd.f32 0.0, %v2012
    %v2014 = vpop.f32.mrb[0].mxu0
    %v2015 = vadd.f32 0.0, %v2014
    %2016 = vmatprep.mubr.f32.mxu0 0.0
    %2017 = vmatmul.mubr.f32.gmra.mrb[0].mxu0 %v1061
    %v2018 = vpop.f32.mrb[0].mxu0
    %v2019 = vadd.f32 0.0, %v2018
    %v2020 = vpop.f32.mrb[0].mxu0
    %v2021 = vadd.f32 0.0, %v2020
    %2022 = vmatprep.mubr.f32.mxu0 0.0
    %2023 = vmatmul.mubr.f32.gmra.mrb[0].mxu0 %v1064
    %v2024 = vpop.f32.mrb[0].mxu0
    %v2025 = vadd.f32 0.0, %v2024
    %v2026 = vpop.f32.mrb[0].mxu0
    %v2027 = vadd.f32 0.0, %v2026
    %2028 = vmatprep.mubr.f32.mxu0 0.0
    %2029 = vmatmul.mubr.f32.gmra.mrb[0].mxu0 %v1067
    %v2030 = vpop.f32.mrb[0].mxu0
    %v2031 = vadd.f32 0.0, %v2030
    %v2032 = vpop.f32.mrb[0].mxu0
    %v2033 = vadd.f32 0.0, %v2032
    %2034 = vdwg.mxu0
    %2035 = vmatprep.subr.mxu0 %v993
    %2036 = vmatpush1.msra.mxu0 %v992
    %2037 = vmatprep.subr.mxu0 %v1013
    %2038 = vmatpush1.msra.mxu0 %v1012
    %2039 = vmatprep.subr.mxu0 0.0
    %2040 = vmatpush1.msra.mxu0 0.0
    %2041 = vmatprep.subr.mxu0 0.0
    %2042 = vmatpush1.msra.mxu0 0.0
    %2043 = vmatprep.subr.mxu0 0.0
    %2044 = vmatpush1.msra.mxu0 0.0
    %2045 = vmatprep.subr.mxu0 0.0
    %2046 = vmatpush1.msra.mxu0 0.0
    %2047 = vmatprep.subr.mxu0 0.0
    %2048 = vmatpush1.msra.mxu0 0.0
    %2049 = vmatprep.subr.mxu0 0.0
    %2050 = vmatpush1.msra.mxu0 0.0
    %2051 = vmatprep.subr.mxu0 0.0
    %2052 = vmatpush1.msra.mxu0 0.0
    %2053 = vmatprep.subr.mxu0 0.0
    %2054 = vmatpush1.msra.mxu0 0.0
    %2055 = vmatprep.subr.mxu0 0.0
    %2056 = vmatpush1.msra.mxu0 0.0
    %2057 = vmatprep.subr.mxu0 0.0
    %2058 = vmatpush1.msra.mxu0 0.0
    %2059 = vmatprep.subr.mxu0 0.0
    %2060 = vmatpush1.msra.mxu0 0.0
    %2061 = vmatprep.subr.mxu0 0.0
    %2062 = vmatpush1.msra.mxu0 0.0
    %2063 = vmatprep.subr.mxu0 0.0
    %2064 = vmatpush1.msra.mxu0 0.0
    %2065 = vmatprep.subr.mxu0 0.0
    %2066 = vmatpush1.msra.mxu0 0.0
    %2067 = vmatprep.subr.mxu0 0.0
    %2068 = vmatpush1.msra.mxu0 0.0
    %2069 = vmatprep.subr.mxu0 0.0
    %2070 = vmatpush1.msra.mxu0 0.0
    %2071 = vmatprep.subr.mxu0 0.0
    %2072 = vmatpush1.msra.mxu0 0.0
    %2073 = vmatprep.subr.mxu0 0.0
    %2074 = vmatpush1.msra.mxu0 0.0
    %2075 = vmatprep.subr.mxu0 0.0
    %2076 = vmatpush1.msra.mxu0 0.0
    %2077 = vmatprep.subr.mxu0 0.0
    %2078 = vmatpush1.msra.mxu0 0.0
    %2079 = vmatprep.subr.mxu0 0.0
    %2080 = vmatpush1.msra.mxu0 0.0
    %2081 = vmatprep.subr.mxu0 0.0
    %2082 = vmatpush1.msra.mxu0 0.0
    %2083 = vmatprep.subr.mxu0 0.0
    %2084 = vmatpush1.msra.mxu0 0.0
    %2085 = vmatprep.subr.mxu0 0.0
    %2086 = vmatpush1.msra.mxu0 0.0
    %2087 = vmatprep.subr.mxu0 0.0
    %2088 = vmatpush1.msra.mxu0 0.0
    %2089 = vmatprep.subr.mxu0 0.0
    %2090 = vmatpush1.msra.mxu0 0.0
    %2091 = vmatprep.subr.mxu0 0.0
    %2092 = vmatpush1.msra.mxu0 0.0
    %2093 = vmatprep.subr.mxu0 0.0
    %2094 = vmatpush1.msra.mxu0 0.0
    %2095 = vmatprep.subr.mxu0 0.0
    %2096 = vmatpush1.msra.mxu0 0.0
    %2097 = vmatprep.subr.mxu0 0.0
    %2098 = vmatpush1.msra.mxu0 0.0
    %2099 = vmatprep.mubr.f32.mxu0 0.0
    %2100 = vmatmul.mubr.f32.gmra.mrb[0].mxu0 %v1022
    %v2101 = vpop.f32.mrb[0].mxu0
    %v2102 = vadd.f32 0.0, %v2101
    %v2103 = vpop.f32.mrb[0].mxu0
    %v2104 = vadd.f32 0.0, %v2103
    %2105 = vmatprep.mubr.f32.mxu0 0.0
    %2106 = vmatmul.mubr.f32.gmra.mrb[0].mxu0 %v1025
    %v2107 = vpop.f32.mrb[0].mxu0
    %v2108 = vadd.f32 0.0, %v2107
    %v2109 = vpop.f32.mrb[0].mxu0
    %v2110 = vadd.f32 0.0, %v2109
    %2111 = vmatprep.mubr.f32.mxu0 0.0
    %2112 = vmatmul.mubr.f32.gmra.mrb[0].mxu0 %v1028
    %v2113 = vpop.f32.mrb[0].mxu0
    %v2114 = vadd.f32 0.0, %v2113
    %v2115 = vpop.f32.mrb[0].mxu0
    %v2116 = vadd.f32 0.0, %v2115
    %2117 = vmatprep.mubr.f32.mxu0 0.0
    %2118 = vmatmul.mubr.f32.gmra.mrb[0].mxu0 %v1031
    %v2119 = vpop.f32.mrb[0].mxu0
    %v2120 = vadd.f32 0.0, %v2119
    %v2121 = vpop.f32.mrb[0].mxu0
    %v2122 = vadd.f32 0.0, %v2121
    %2123 = vmatprep.mubr.f32.mxu0 0.0
    %2124 = vmatmul.mubr.f32.gmra.mrb[0].mxu0 %v1034
    %v2125 = vpop.f32.mrb[0].mxu0
    %v2126 = vadd.f32 0.0, %v2125
    %v2127 = vpop.f32.mrb[0].mxu0
    %v2128 = vadd.f32 0.0, %v2127
    %2129 = vmatprep.mubr.f32.mxu0 0.0
    %2130 = vmatmul.mubr.f32.gmra.mrb[0].mxu0 %v1037
    %v2131 = vpop.f32.mrb[0].mxu0
    %v2132 = vadd.f32 0.0, %v2131
    %v2133 = vpop.f32.mrb[0].mxu0
    %v2134 = vadd.f32 0.0, %v2133
    %2135 = vmatprep.mubr.f32.mxu0 0.0
    %2136 = vmatmul.mubr.f32.gmra.mrb[0].mxu0 %v1040
    %v2137 = vpop.f32.mrb[0].mxu0
    %v2138 = vadd.f32 0.0, %v2137
    %v2139 = vpop.f32.mrb[0].mxu0
    %v2140 = vadd.f32 0.0, %v2139
    %2141 = vmatprep.mubr.f32.mxu0 0.0
    %2142 = vmatmul.mubr.f32.gmra.mrb[0].mxu0 %v1043
    %v2143 = vpop.f32.mrb[0].mxu0
    %v2144 = vadd.f32 0.0, %v2143
    %v2145 = vpop.f32.mrb[0].mxu0
    %v2146 = vadd.f32 0.0, %v2145
    %2147 = vmatprep.mubr.f32.mxu0 0.0
    %2148 = vmatmul.mubr.f32.gmra.mrb[0].mxu0 %v1046
    %v2149 = vpop.f32.mrb[0].mxu0
    %v2150 = vadd.f32 0.0, %v2149
    %v2151 = vpop.f32.mrb[0].mxu0
    %v2152 = vadd.f32 0.0, %v2151
    %2153 = vmatprep.mubr.f32.mxu0 0.0
    %2154 = vmatmul.mubr.f32.gmra.mrb[0].mxu0 %v1049
    %v2155 = vpop.f32.mrb[0].mxu0
    %v2156 = vadd.f32 0.0, %v2155
    %v2157 = vpop.f32.mrb[0].mxu0
    %v2158 = vadd.f32 0.0, %v2157
    %2159 = vmatprep.mubr.f32.mxu0 0.0
    %2160 = vmatmul.mubr.f32.gmra.mrb[0].mxu0 %v1052
    %v2161 = vpop.f32.mrb[0].mxu0
    %v2162 = vadd.f32 0.0, %v2161
    %v2163 = vpop.f32.mrb[0].mxu0
    %v2164 = vadd.f32 0.0, %v2163
    %2165 = vmatprep.mubr.f32.mxu0 0.0
    %2166 = vmatmul.mubr.f32.gmra.mrb[0].mxu0 %v1055
    %v2167 = vpop.f32.mrb[0].mxu0
    %v2168 = vadd.f32 0.0, %v2167
    %v2169 = vpop.f32.mrb[0].mxu0
    %v2170 = vadd.f32 0.0, %v2169
    %2171 = vmatprep.mubr.f32.mxu0 0.0
    %2172 = vmatmul.mubr.f32.gmra.mrb[0].mxu0 %v1058
    %v2173 = vpop.f32.mrb[0].mxu0
    %v2174 = vadd.f32 0.0, %v2173
    %v2175 = vpop.f32.mrb[0].mxu0
    %v2176 = vadd.f32 0.0, %v2175
    %2177 = vmatprep.mubr.f32.mxu0 0.0
    %2178 = vmatmul.mubr.f32.gmra.mrb[0].mxu0 %v1061
    %v2179 = vpop.f32.mrb[0].mxu0
    %v2180 = vadd.f32 0.0, %v2179
    %v2181 = vpop.f32.mrb[0].mxu0
    %v2182 = vadd.f32 0.0, %v2181
    %2183 = vmatprep.mubr.f32.mxu0 0.0
    %2184 = vmatmul.mubr.f32.gmra.mrb[0].mxu0 %v1064
    %v2185 = vpop.f32.mrb[0].mxu0
    %v2186 = vadd.f32 0.0, %v2185
    %v2187 = vpop.f32.mrb[0].mxu0
    %v2188 = vadd.f32 0.0, %v2187
    %2189 = vmatprep.mubr.f32.mxu0 0.0
    %2190 = vmatmul.mubr.f32.gmra.mrb[0].mxu0 %v1067
    %v2191 = vpop.f32.mrb[0].mxu0
    %v2192 = vadd.f32 0.0, %v2191
    %v2193 = vpop.f32.mrb[0].mxu0
    %v2194 = vadd.f32 0.0, %v2193
    %2195 = vdwg.mxu0
    %2196 = vmatprep.subr.mxu0 %v995
    %2197 = vmatpush1.msra.mxu0 %v994
    %2198 = vmatprep.subr.mxu0 %v1015
    %2199 = vmatpush1.msra.mxu0 %v1014
    %2200 = vmatprep.subr.mxu0 0.0
    %2201 = vmatpush1.msra.mxu0 0.0
    %2202 = vmatprep.subr.mxu0 0.0
    %2203 = vmatpush1.msra.mxu0 0.0
    %2204 = vmatprep.subr.mxu0 0.0
    %2205 = vmatpush1.msra.mxu0 0.0
    %2206 = vmatprep.subr.mxu0 0.0
    %2207 = vmatpush1.msra.mxu0 0.0
    %2208 = vmatprep.subr.mxu0 0.0
    %2209 = vmatpush1.msra.mxu0 0.0
    %2210 = vmatprep.subr.mxu0 0.0
    %2211 = vmatpush1.msra.mxu0 0.0
    %2212 = vmatprep.subr.mxu0 0.0
    %2213 = vmatpush1.msra.mxu0 0.0
    %2214 = vmatprep.subr.mxu0 0.0
    %2215 = vmatpush1.msra.mxu0 0.0
    %2216 = vmatprep.subr.mxu0 0.0
    %2217 = vmatpush1.msra.mxu0 0.0
    %2218 = vmatprep.subr.mxu0 0.0
    %2219 = vmatpush1.msra.mxu0 0.0
    %2220 = vmatprep.subr.mxu0 0.0
    %2221 = vmatpush1.msra.mxu0 0.0
    %2222 = vmatprep.subr.mxu0 0.0
    %2223 = vmatpush1.msra.mxu0 0.0
    %2224 = vmatprep.subr.mxu0 0.0
    %2225 = vmatpush1.msra.mxu0 0.0
    %2226 = vmatprep.subr.mxu0 0.0
    %2227 = vmatpush1.msra.mxu0 0.0
    %2228 = vmatprep.subr.mxu0 0.0
    %2229 = vmatpush1.msra.mxu0 0.0
    %2230 = vmatprep.subr.mxu0 0.0
    %2231 = vmatpush1.msra.mxu0 0.0
    %2232 = vmatprep.subr.mxu0 0.0
    %2233 = vmatpush1.msra.mxu0 0.0
    %2234 = vmatprep.subr.mxu0 0.0
    %2235 = vmatpush1.msra.mxu0 0.0
    %2236 = vmatprep.subr.mxu0 0.0
    %2237 = vmatpush1.msra.mxu0 0.0
    %2238 = vmatprep.subr.mxu0 0.0
    %2239 = vmatpush1.msra.mxu0 0.0
    %2240 = vmatprep.subr.mxu0 0.0
    %2241 = vmatpush1.msra.mxu0 0.0
    %2242 = vmatprep.subr.mxu0 0.0
    %2243 = vmatpush1.msra.mxu0 0.0
    %2244 = vmatprep.subr.mxu0 0.0
    %2245 = vmatpush1.msra.mxu0 0.0
    %2246 = vmatprep.subr.mxu0 0.0
    %2247 = vmatpush1.msra.mxu0 0.0
    %2248 = vmatprep.subr.mxu0 0.0
    %2249 = vmatpush1.msra.mxu0 0.0
    %2250 = vmatprep.subr.mxu0 0.0
    %2251 = vmatpush1.msra.mxu0 0.0
    %2252 = vmatprep.subr.mxu0 0.0
    %2253 = vmatpush1.msra.mxu0 0.0
    %2254 = vmatprep.subr.mxu0 0.0
    %2255 = vmatpush1.msra.mxu0 0.0
    %2256 = vmatprep.subr.mxu0 0.0
    %2257 = vmatpush1.msra.mxu0 0.0
    %2258 = vmatprep.subr.mxu0 0.0
    %2259 = vmatpush1.msra.mxu0 0.0
    %2260 = vmatprep.mubr.f32.mxu0 0.0
    %2261 = vmatmul.mubr.f32.gmra.mrb[0].mxu0 %v1022
    %v2262 = vpop.f32.mrb[0].mxu0
    %v2263 = vadd.f32 0.0, %v2262
    %v2264 = vpop.f32.mrb[0].mxu0
    %v2265 = vadd.f32 0.0, %v2264
    %2266 = vmatprep.mubr.f32.mxu0 0.0
    %2267 = vmatmul.mubr.f32.gmra.mrb[0].mxu0 %v1025
    %v2268 = vpop.f32.mrb[0].mxu0
    %v2269 = vadd.f32 0.0, %v2268
    %v2270 = vpop.f32.mrb[0].mxu0
    %v2271 = vadd.f32 0.0, %v2270
    %2272 = vmatprep.mubr.f32.mxu0 0.0
    %2273 = vmatmul.mubr.f32.gmra.mrb[0].mxu0 %v1028
    %v2274 = vpop.f32.mrb[0].mxu0
    %v2275 = vadd.f32 0.0, %v2274
    %v2276 = vpop.f32.mrb[0].mxu0
    %v2277 = vadd.f32 0.0, %v2276
    %2278 = vmatprep.mubr.f32.mxu0 0.0
    %2279 = vmatmul.mubr.f32.gmra.mrb[0].mxu0 %v1031
    %v2280 = vpop.f32.mrb[0].mxu0
    %v2281 = vadd.f32 0.0, %v2280
    %v2282 = vpop.f32.mrb[0].mxu0
    %v2283 = vadd.f32 0.0, %v2282
    %2284 = vmatprep.mubr.f32.mxu0 0.0
    %2285 = vmatmul.mubr.f32.gmra.mrb[0].mxu0 %v1034
    %v2286 = vpop.f32.mrb[0].mxu0
    %v2287 = vadd.f32 0.0, %v2286
    %v2288 = vpop.f32.mrb[0].mxu0
    %v2289 = vadd.f32 0.0, %v2288
    %2290 = vmatprep.mubr.f32.mxu0 0.0
    %2291 = vmatmul.mubr.f32.gmra.mrb[0].mxu0 %v1037
    %v2292 = vpop.f32.mrb[0].mxu0
    %v2293 = vadd.f32 0.0, %v2292
    %v2294 = vpop.f32.mrb[0].mxu0
    %v2295 = vadd.f32 0.0, %v2294
    %2296 = vmatprep.mubr.f32.mxu0 0.0
    %2297 = vmatmul.mubr.f32.gmra.mrb[0].mxu0 %v1040
    %v2298 = vpop.f32.mrb[0].mxu0
    %v2299 = vadd.f32 0.0, %v2298
    %v2300 = vpop.f32.mrb[0].mxu0
    %v2301 = vadd.f32 0.0, %v2300
    %2302 = vmatprep.mubr.f32.mxu0 0.0
    %2303 = vmatmul.mubr.f32.gmra.mrb[0].mxu0 %v1043
    %v2304 = vpop.f32.mrb[0].mxu0
    %v2305 = vadd.f32 0.0, %v2304
    %v2306 = vpop.f32.mrb[0].mxu0
    %v2307 = vadd.f32 0.0, %v2306
    %2308 = vmatprep.mubr.f32.mxu0 0.0
    %2309 = vmatmul.mubr.f32.gmra.mrb[0].mxu0 %v1046
    %v2310 = vpop.f32.mrb[0].mxu0
    %v2311 = vadd.f32 0.0, %v2310
    %v2312 = vpop.f32.mrb[0].mxu0
    %v2313 = vadd.f32 0.0, %v2312
    %2314 = vmatprep.mubr.f32.mxu0 0.0
    %2315 = vmatmul.mubr.f32.gmra.mrb[0].mxu0 %v1049
    %v2316 = vpop.f32.mrb[0].mxu0
    %v2317 = vadd.f32 0.0, %v2316
    %v2318 = vpop.f32.mrb[0].mxu0
    %v2319 = vadd.f32 0.0, %v2318
    %2320 = vmatprep.mubr.f32.mxu0 0.0
    %2321 = vmatmul.mubr.f32.gmra.mrb[0].mxu0 %v1052
    %v2322 = vpop.f32.mrb[0].mxu0
    %v2323 = vadd.f32 0.0, %v2322
    %v2324 = vpop.f32.mrb[0].mxu0
    %v2325 = vadd.f32 0.0, %v2324
    %2326 = vmatprep.mubr.f32.mxu0 0.0
    %2327 = vmatmul.mubr.f32.gmra.mrb[0].mxu0 %v1055
    %v2328 = vpop.f32.mrb[0].mxu0
    %v2329 = vadd.f32 0.0, %v2328
    %v2330 = vpop.f32.mrb[0].mxu0
    %v2331 = vadd.f32 0.0, %v2330
    %2332 = vmatprep.mubr.f32.mxu0 0.0
    %2333 = vmatmul.mubr.f32.gmra.mrb[0].mxu0 %v1058
    %v2334 = vpop.f32.mrb[0].mxu0
    %v2335 = vadd.f32 0.0, %v2334
    %v2336 = vpop.f32.mrb[0].mxu0
    %v2337 = vadd.f32 0.0, %v2336
    %2338 = vmatprep.mubr.f32.mxu0 0.0
    %2339 = vmatmul.mubr.f32.gmra.mrb[0].mxu0 %v1061
    %v2340 = vpop.f32.mrb[0].mxu0
    %v2341 = vadd.f32 0.0, %v2340
    %v2342 = vpop.f32.mrb[0].mxu0
    %v2343 = vadd.f32 0.0, %v2342
    %2344 = vmatprep.mubr.f32.mxu0 0.0
    %2345 = vmatmul.mubr.f32.gmra.mrb[0].mxu0 %v1064
    %v2346 = vpop.f32.mrb[0].mxu0
    %v2347 = vadd.f32 0.0, %v2346
    %v2348 = vpop.f32.mrb[0].mxu0
    %v2349 = vadd.f32 0.0, %v2348
    %2350 = vmatprep.mubr.f32.mxu0 0.0
    %2351 = vmatmul.mubr.f32.gmra.mrb[0].mxu0 %v1067
    %v2352 = vpop.f32.mrb[0].mxu0
    %v2353 = vadd.f32 0.0, %v2352
    %v2354 = vpop.f32.mrb[0].mxu0
    %v2355 = vadd.f32 0.0, %v2354
    %2356 = vdwg.mxu0
    %2357 = vmatprep.subr.mxu0 %v997
    %2358 = vmatpush1.msra.mxu0 %v996
    %2359 = vmatprep.subr.mxu0 %v1017
    %2360 = vmatpush1.msra.mxu0 %v1016
    %2361 = vmatprep.subr.mxu0 0.0
    %2362 = vmatpush1.msra.mxu0 0.0
    %2363 = vmatprep.subr.mxu0 0.0
    %2364 = vmatpush1.msra.mxu0 0.0
    %2365 = vmatprep.subr.mxu0 0.0
    %2366 = vmatpush1.msra.mxu0 0.0
    %2367 = vmatprep.subr.mxu0 0.0
    %2368 = vmatpush1.msra.mxu0 0.0
    %2369 = vmatprep.subr.mxu0 0.0
    %2370 = vmatpush1.msra.mxu0 0.0
    %2371 = vmatprep.subr.mxu0 0.0
    %2372 = vmatpush1.msra.mxu0 0.0
    %2373 = vmatprep.subr.mxu0 0.0
    %2374 = vmatpush1.msra.mxu0 0.0
    %2375 = vmatprep.subr.mxu0 0.0
    %2376 = vmatpush1.msra.mxu0 0.0
    %2377 = vmatprep.subr.mxu0 0.0
    %2378 = vmatpush1.msra.mxu0 0.0
    %2379 = vmatprep.subr.mxu0 0.0
    %2380 = vmatpush1.msra.mxu0 0.0
    %2381 = vmatprep.subr.mxu0 0.0
    %2382 = vmatpush1.msra.mxu0 0.0
    %2383 = vmatprep.subr.mxu0 0.0
    %2384 = vmatpush1.msra.mxu0 0.0
    %2385 = vmatprep.subr.mxu0 0.0
    %2386 = vmatpush1.msra.mxu0 0.0
    %2387 = vmatprep.subr.mxu0 0.0
    %2388 = vmatpush1.msra.mxu0 0.0
    %2389 = vmatprep.subr.mxu0 0.0
    %2390 = vmatpush1.msra.mxu0 0.0
    %2391 = vmatprep.subr.mxu0 0.0
    %2392 = vmatpush1.msra.mxu0 0.0
    %2393 = vmatprep.subr.mxu0 0.0
    %2394 = vmatpush1.msra.mxu0 0.0
    %2395 = vmatprep.subr.mxu0 0.0
    %2396 = vmatpush1.msra.mxu0 0.0
    %2397 = vmatprep.subr.mxu0 0.0
    %2398 = vmatpush1.msra.mxu0 0.0
    %2399 = vmatprep.subr.mxu0 0.0
    %2400 = vmatpush1.msra.mxu0 0.0
    %2401 = vmatprep.subr.mxu0 0.0
    %2402 = vmatpush1.msra.mxu0 0.0
    %2403 = vmatprep.subr.mxu0 0.0
    %2404 = vmatpush1.msra.mxu0 0.0
    %2405 = vmatprep.subr.mxu0 0.0
    %2406 = vmatpush1.msra.mxu0 0.0
    %2407 = vmatprep.subr.mxu0 0.0
    %2408 = vmatpush1.msra.mxu0 0.0
    %2409 = vmatprep.subr.mxu0 0.0
    %2410 = vmatpush1.msra.mxu0 0.0
    %2411 = vmatprep.subr.mxu0 0.0
    %2412 = vmatpush1.msra.mxu0 0.0
    %2413 = vmatprep.subr.mxu0 0.0
    %2414 = vmatpush1.msra.mxu0 0.0
    %2415 = vmatprep.subr.mxu0 0.0
    %2416 = vmatpush1.msra.mxu0 0.0
    %2417 = vmatprep.subr.mxu0 0.0
    %2418 = vmatpush1.msra.mxu0 0.0
    %2419 = vmatprep.subr.mxu0 0.0
    %2420 = vmatpush1.msra.mxu0 0.0
    %2421 = vmatprep.mubr.f32.mxu0 0.0
    %2422 = vmatmul.mubr.f32.gmra.mrb[0].mxu0 %v1022
    %v2423 = vpop.f32.mrb[0].mxu0
    %v2424 = vadd.f32 0.0, %v2423
    %v2425 = vpop.f32.mrb[0].mxu0
    %v2426 = vadd.f32 0.0, %v2425
    %2427 = vmatprep.mubr.f32.mxu0 0.0
    %2428 = vmatmul.mubr.f32.gmra.mrb[0].mxu0 %v1025
    %v2429 = vpop.f32.mrb[0].mxu0
    %v2430 = vadd.f32 0.0, %v2429
    %v2431 = vpop.f32.mrb[0].mxu0
    %v2432 = vadd.f32 0.0, %v2431
    %2433 = vmatprep.mubr.f32.mxu0 0.0
    %2434 = vmatmul.mubr.f32.gmra.mrb[0].mxu0 %v1028
    %v2435 = vpop.f32.mrb[0].mxu0
    %v2436 = vadd.f32 0.0, %v2435
    %v2437 = vpop.f32.mrb[0].mxu0
    %v2438 = vadd.f32 0.0, %v2437
    %2439 = vmatprep.mubr.f32.mxu0 0.0
    %2440 = vmatmul.mubr.f32.gmra.mrb[0].mxu0 %v1031
    %v2441 = vpop.f32.mrb[0].mxu0
    %v2442 = vadd.f32 0.0, %v2441
    %v2443 = vpop.f32.mrb[0].mxu0
    %v2444 = vadd.f32 0.0, %v2443
    %2445 = vmatprep.mubr.f32.mxu0 0.0
    %2446 = vmatmul.mubr.f32.gmra.mrb[0].mxu0 %v1034
    %v2447 = vpop.f32.mrb[0].mxu0
    %v2448 = vadd.f32 0.0, %v2447
    %v2449 = vpop.f32.mrb[0].mxu0
    %v2450 = vadd.f32 0.0, %v2449
    %2451 = vmatprep.mubr.f32.mxu0 0.0
    %2452 = vmatmul.mubr.f32.gmra.mrb[0].mxu0 %v1037
    %v2453 = vpop.f32.mrb[0].mxu0
    %v2454 = vadd.f32 0.0, %v2453
    %v2455 = vpop.f32.mrb[0].mxu0
    %v2456 = vadd.f32 0.0, %v2455
    %2457 = vmatprep.mubr.f32.mxu0 0.0
    %2458 = vmatmul.mubr.f32.gmra.mrb[0].mxu0 %v1040
    %v2459 = vpop.f32.mrb[0].mxu0
    %v2460 = vadd.f32 0.0, %v2459
    %v2461 = vpop.f32.mrb[0].mxu0
    %v2462 = vadd.f32 0.0, %v2461
    %2463 = vmatprep.mubr.f32.mxu0 0.0
    %2464 = vmatmul.mubr.f32.gmra.mrb[0].mxu0 %v1043
    %v2465 = vpop.f32.mrb[0].mxu0
    %v2466 = vadd.f32 0.0, %v2465
    %v2467 = vpop.f32.mrb[0].mxu0
    %v2468 = vadd.f32 0.0, %v2467
    %2469 = vmatprep.mubr.f32.mxu0 0.0
    %2470 = vmatmul.mubr.f32.gmra.mrb[0].mxu0 %v1046
    %v2471 = vpop.f32.mrb[0].mxu0
    %v2472 = vadd.f32 0.0, %v2471
    %v2473 = vpop.f32.mrb[0].mxu0
    %v2474 = vadd.f32 0.0, %v2473
    %2475 = vmatprep.mubr.f32.mxu0 0.0
    %2476 = vmatmul.mubr.f32.gmra.mrb[0].mxu0 %v1049
    %v2477 = vpop.f32.mrb[0].mxu0
    %v2478 = vadd.f32 0.0, %v2477
    %v2479 = vpop.f32.mrb[0].mxu0
    %v2480 = vadd.f32 0.0, %v2479
    %2481 = vmatprep.mubr.f32.mxu0 0.0
    %2482 = vmatmul.mubr.f32.gmra.mrb[0].mxu0 %v1052
    %v2483 = vpop.f32.mrb[0].mxu0
    %v2484 = vadd.f32 0.0, %v2483
    %v2485 = vpop.f32.mrb[0].mxu0
    %v2486 = vadd.f32 0.0, %v2485
    %2487 = vmatprep.mubr.f32.mxu0 0.0
    %2488 = vmatmul.mubr.f32.gmra.mrb[0].mxu0 %v1055
    %v2489 = vpop.f32.mrb[0].mxu0
    %v2490 = vadd.f32 0.0, %v2489
    %v2491 = vpop.f32.mrb[0].mxu0
    %v2492 = vadd.f32 0.0, %v2491
    %2493 = vmatprep.mubr.f32.mxu0 0.0
    %2494 = vmatmul.mubr.f32.gmra.mrb[0].mxu0 %v1058
    %v2495 = vpop.f32.mrb[0].mxu0
    %v2496 = vadd.f32 0.0, %v2495
    %v2497 = vpop.f32.mrb[0].mxu0
    %v2498 = vadd.f32 0.0, %v2497
    %2499 = vmatprep.mubr.f32.mxu0 0.0
    %2500 = vmatmul.mubr.f32.gmra.mrb[0].mxu0 %v1061
    %v2501 = vpop.f32.mrb[0].mxu0
    %v2502 = vadd.f32 0.0, %v2501
    %v2503 = vpop.f32.mrb[0].mxu0
    %v2504 = vadd.f32 0.0, %v2503
    %2505 = vmatprep.mubr.f32.mxu0 0.0
    %2506 = vmatmul.mubr.f32.gmra.mrb[0].mxu0 %v1064
    %v2507 = vpop.f32.mrb[0].mxu0
    %v2508 = vadd.f32 0.0, %v2507
    %v2509 = vpop.f32.mrb[0].mxu0
    %v2510 = vadd.f32 0.0, %v2509
    %2511 = vmatprep.mubr.f32.mxu0 0.0
    %2512 = vmatmul.mubr.f32.gmra.mrb[0].mxu0 %v1067
    %v2513 = vpop.f32.mrb[0].mxu0
    %v2514 = vadd.f32 0.0, %v2513
    %v2515 = vpop.f32.mrb[0].mxu0
    %v2516 = vadd.f32 0.0, %v2515
    %2517 = vdwg.mxu0
    %2518 = vmatprep.subr.mxu0 %v999
    %2519 = vmatpush1.msra.mxu0 %v998
    %2520 = vmatprep.subr.mxu0 %v1019
    %2521 = vmatpush1.msra.mxu0 %v1018
    %2522 = vmatprep.subr.mxu0 0.0
    %2523 = vmatpush1.msra.mxu0 0.0
    %2524 = vmatprep.subr.mxu0 0.0
    %2525 = vmatpush1.msra.mxu0 0.0
    %2526 = vmatprep.subr.mxu0 0.0
    %2527 = vmatpush1.msra.mxu0 0.0
    %2528 = vmatprep.subr.mxu0 0.0
    %2529 = vmatpush1.msra.mxu0 0.0
    %2530 = vmatprep.subr.mxu0 0.0
    %2531 = vmatpush1.msra.mxu0 0.0
    %2532 = vmatprep.subr.mxu0 0.0
    %2533 = vmatpush1.msra.mxu0 0.0
    %2534 = vmatprep.subr.mxu0 0.0
    %2535 = vmatpush1.msra.mxu0 0.0
    %2536 = vmatprep.subr.mxu0 0.0
    %2537 = vmatpush1.msra.mxu0 0.0
    %2538 = vmatprep.subr.mxu0 0.0
    %2539 = vmatpush1.msra.mxu0 0.0
    %2540 = vmatprep.subr.mxu0 0.0
    %2541 = vmatpush1.msra.mxu0 0.0
    %2542 = vmatprep.subr.mxu0 0.0
    %2543 = vmatpush1.msra.mxu0 0.0
    %2544 = vmatprep.subr.mxu0 0.0
    %2545 = vmatpush1.msra.mxu0 0.0
    %2546 = vmatprep.subr.mxu0 0.0
    %2547 = vmatpush1.msra.mxu0 0.0
    %2548 = vmatprep.subr.mxu0 0.0
    %2549 = vmatpush1.msra.mxu0 0.0
    %2550 = vmatprep.subr.mxu0 0.0
    %2551 = vmatpush1.msra.mxu0 0.0
    %2552 = vmatprep.subr.mxu0 0.0
    %2553 = vmatpush1.msra.mxu0 0.0
    %2554 = vmatprep.subr.mxu0 0.0
    %2555 = vmatpush1.msra.mxu0 0.0
    %2556 = vmatprep.subr.mxu0 0.0
    %2557 = vmatpush1.msra.mxu0 0.0
    %2558 = vmatprep.subr.mxu0 0.0
    %2559 = vmatpush1.msra.mxu0 0.0
    %2560 = vmatprep.subr.mxu0 0.0
    %2561 = vmatpush1.msra.mxu0 0.0
    %2562 = vmatprep.subr.mxu0 0.0
    %2563 = vmatpush1.msra.mxu0 0.0
    %2564 = vmatprep.subr.mxu0 0.0
    %2565 = vmatpush1.msra.mxu0 0.0
    %2566 = vmatprep.subr.mxu0 0.0
    %2567 = vmatpush1.msra.mxu0 0.0
    %2568 = vmatprep.subr.mxu0 0.0
    %2569 = vmatpush1.msra.mxu0 0.0
    %2570 = vmatprep.subr.mxu0 0.0
    %2571 = vmatpush1.msra.mxu0 0.0
    %2572 = vmatprep.subr.mxu0 0.0
    %2573 = vmatpush1.msra.mxu0 0.0
    %2574 = vmatprep.subr.mxu0 0.0
    %2575 = vmatpush1.msra.mxu0 0.0
    %2576 = vmatprep.subr.mxu0 0.0
    %2577 = vmatpush1.msra.mxu0 0.0
    %2578 = vmatprep.subr.mxu0 0.0
    %2579 = vmatpush1.msra.mxu0 0.0
    %2580 = vmatprep.subr.mxu0 0.0
    %2581 = vmatpush1.msra.mxu0 0.0
    %2582 = vmatprep.mubr.f32.mxu0 0.0
    %2583 = vmatmul.mubr.f32.gmra.mrb[0].mxu0 %v1022
    %v2584 = vpop.f32.mrb[0].mxu0
    %v2585 = vadd.f32 0.0, %v2584
    %v2586 = vpop.f32.mrb[0].mxu0
    %v2587 = vadd.f32 0.0, %v2586
    %2588 = vmatprep.mubr.f32.mxu0 0.0
    %2589 = vmatmul.mubr.f32.gmra.mrb[0].mxu0 %v1025
    %v2590 = vpop.f32.mrb[0].mxu0
    %v2591 = vadd.f32 0.0, %v2590
    %v2592 = vpop.f32.mrb[0].mxu0
    %v2593 = vadd.f32 0.0, %v2592
    %2594 = vmatprep.mubr.f32.mxu0 0.0
    %2595 = vmatmul.mubr.f32.gmra.mrb[0].mxu0 %v1028
    %v2596 = vpop.f32.mrb[0].mxu0
    %v2597 = vadd.f32 0.0, %v2596
    %v2598 = vpop.f32.mrb[0].mxu0
    %v2599 = vadd.f32 0.0, %v2598
    %2600 = vmatprep.mubr.f32.mxu0 0.0
    %2601 = vmatmul.mubr.f32.gmra.mrb[0].mxu0 %v1031
    %v2602 = vpop.f32.mrb[0].mxu0
    %v2603 = vadd.f32 0.0, %v2602
    %v2604 = vpop.f32.mrb[0].mxu0
    %v2605 = vadd.f32 0.0, %v2604
    %2606 = vmatprep.mubr.f32.mxu0 0.0
    %2607 = vmatmul.mubr.f32.gmra.mrb[0].mxu0 %v1034
    %v2608 = vpop.f32.mrb[0].mxu0
    %v2609 = vadd.f32 0.0, %v2608
    %v2610 = vpop.f32.mrb[0].mxu0
    %v2611 = vadd.f32 0.0, %v2610
    %2612 = vmatprep.mubr.f32.mxu0 0.0
    %2613 = vmatmul.mubr.f32.gmra.mrb[0].mxu0 %v1037
    %v2614 = vpop.f32.mrb[0].mxu0
    %v2615 = vadd.f32 0.0, %v2614
    %v2616 = vpop.f32.mrb[0].mxu0
    %v2617 = vadd.f32 0.0, %v2616
    %2618 = vmatprep.mubr.f32.mxu0 0.0
    %2619 = vmatmul.mubr.f32.gmra.mrb[0].mxu0 %v1040
    %v2620 = vpop.f32.mrb[0].mxu0
    %v2621 = vadd.f32 0.0, %v2620
    %v2622 = vpop.f32.mrb[0].mxu0
    %v2623 = vadd.f32 0.0, %v2622
    %2624 = vmatprep.mubr.f32.mxu0 0.0
    %2625 = vmatmul.mubr.f32.gmra.mrb[0].mxu0 %v1043
    %v2626 = vpop.f32.mrb[0].mxu0
    %v2627 = vadd.f32 0.0, %v2626
    %v2628 = vpop.f32.mrb[0].mxu0
    %v2629 = vadd.f32 0.0, %v2628
    %2630 = vmatprep.mubr.f32.mxu0 0.0
    %2631 = vmatmul.mubr.f32.gmra.mrb[0].mxu0 %v1046
    %v2632 = vpop.f32.mrb[0].mxu0
    %v2633 = vadd.f32 0.0, %v2632
    %v2634 = vpop.f32.mrb[0].mxu0
    %v2635 = vadd.f32 0.0, %v2634
    %2636 = vmatprep.mubr.f32.mxu0 0.0
    %2637 = vmatmul.mubr.f32.gmra.mrb[0].mxu0 %v1049
    %v2638 = vpop.f32.mrb[0].mxu0
    %v2639 = vadd.f32 0.0, %v2638
    %v2640 = vpop.f32.mrb[0].mxu0
    %v2641 = vadd.f32 0.0, %v2640
    %2642 = vmatprep.mubr.f32.mxu0 0.0
    %2643 = vmatmul.mubr.f32.gmra.mrb[0].mxu0 %v1052
    %v2644 = vpop.f32.mrb[0].mxu0
    %v2645 = vadd.f32 0.0, %v2644
    %v2646 = vpop.f32.mrb[0].mxu0
    %v2647 = vadd.f32 0.0, %v2646
    %2648 = vmatprep.mubr.f32.mxu0 0.0
    %2649 = vmatmul.mubr.f32.gmra.mrb[0].mxu0 %v1055
    %v2650 = vpop.f32.mrb[0].mxu0
    %v2651 = vadd.f32 0.0, %v2650
    %v2652 = vpop.f32.mrb[0].mxu0
    %v2653 = vadd.f32 0.0, %v2652
    %2654 = vmatprep.mubr.f32.mxu0 0.0
    %2655 = vmatmul.mubr.f32.gmra.mrb[0].mxu0 %v1058
    %v2656 = vpop.f32.mrb[0].mxu0
    %v2657 = vadd.f32 0.0, %v2656
    %v2658 = vpop.f32.mrb[0].mxu0
    %v2659 = vadd.f32 0.0, %v2658
    %2660 = vmatprep.mubr.f32.mxu0 0.0
    %2661 = vmatmul.mubr.f32.gmra.mrb[0].mxu0 %v1061
    %v2662 = vpop.f32.mrb[0].mxu0
    %v2663 = vadd.f32 0.0, %v2662
    %v2664 = vpop.f32.mrb[0].mxu0
    %v2665 = vadd.f32 0.0, %v2664
    %2666 = vmatprep.mubr.f32.mxu0 0.0
    %2667 = vmatmul.mubr.f32.gmra.mrb[0].mxu0 %v1064
    %v2668 = vpop.f32.mrb[0].mxu0
    %v2669 = vadd.f32 0.0, %v2668
    %v2670 = vpop.f32.mrb[0].mxu0
    %v2671 = vadd.f32 0.0, %v2670
    %2672 = vmatprep.mubr.f32.mxu0 0.0
    %2673 = vmatmul.mubr.f32.gmra.mrb[0].mxu0 %v1067
    %v2674 = vpop.f32.mrb[0].mxu0
    %v2675 = vadd.f32 0.0, %v2674
    %v2676 = vpop.f32.mrb[0].mxu0
    %v2677 = vadd.f32 0.0, %v2676
    %2678 = vdwg.mxu0
    %v2679 = vld [vmem:[%s4] sm:$0xff]
    %v2680 = vld [vmem:[%s4 + $0x8] sm:$0xff]
    %v2681 = vld [vmem:[%s4 + $0x10] sm:$0xf]
    %v2682 = vcvt.s32.f32 %v2679
    %v2683 = vcvt.s32.f32 %v2680
    %v2684 = vcvt.s32.f32 %v2681
    %v2688 = vlaneseq
    %v2689 = vshrl.u32 %v2688, 7
    %v2690 = vsub.s32 0, %v2689
    %v2691 = vrot.slane %v2682, %v2690
    %v2692 = vlaneseq
    %v2693 = vshrl.u32 %v2692, 7
    %v2694 = vsub.s32 1, %v2693
    %v2695 = vrot.slane %v2682, %v2694
    %v2696 = vlaneseq
    %v2697 = vshrl.u32 %v2696, 7
    %v2698 = vsub.s32 2, %v2697
    %v2699 = vrot.slane %v2682, %v2698
    %v2700 = vlaneseq
    %v2701 = vshrl.u32 %v2700, 7
    %v2702 = vsub.s32 3, %v2701
    %v2703 = vrot.slane %v2682, %v2702
    %v2704 = vlaneseq
    %v2705 = vshrl.u32 %v2704, 7
    %v2706 = vsub.s32 4, %v2705
    %v2707 = vrot.slane %v2682, %v2706
    %v2708 = vlaneseq
    %v2709 = vshrl.u32 %v2708, 7
    %v2710 = vsub.s32 5, %v2709
    %v2711 = vrot.slane %v2682, %v2710
    %v2712 = vlaneseq
    %v2713 = vshrl.u32 %v2712, 7
    %v2714 = vsub.s32 6, %v2713
    %v2715 = vrot.slane %v2682, %v2714
    %v2716 = vlaneseq
    %v2717 = vshrl.u32 %v2716, 7
    %v2718 = vsub.s32 7, %v2717
    %v2719 = vrot.slane %v2682, %v2718
    %v2720 = vlaneseq
    %v2721 = vshrl.u32 %v2720, 7
    %v2722 = vsub.s32 0, %v2721
    %v2723 = vrot.slane %v2683, %v2722
    %v2724 = vlaneseq
    %v2725 = vshrl.u32 %v2724, 7
    %v2726 = vsub.s32 1, %v2725
    %v2727 = vrot.slane %v2683, %v2726
    %v2728 = vlaneseq
    %v2729 = vshrl.u32 %v2728, 7
    %v2730 = vsub.s32 2, %v2729
    %v2731 = vrot.slane %v2683, %v2730
    %v2732 = vlaneseq
    %v2733 = vshrl.u32 %v2732, 7
    %v2734 = vsub.s32 3, %v2733
    %v2735 = vrot.slane %v2683, %v2734
    %v2736 = vlaneseq
    %v2737 = vshrl.u32 %v2736, 7
    %v2738 = vsub.s32 4, %v2737
    %v2739 = vrot.slane %v2683, %v2738
    %v2740 = vlaneseq
    %v2741 = vshrl.u32 %v2740, 7
    %v2742 = vsub.s32 5, %v2741
    %v2743 = vrot.slane %v2683, %v2742
    %v2744 = vlaneseq
    %v2745 = vshrl.u32 %v2744, 7
    %v2746 = vsub.s32 6, %v2745
    %v2747 = vrot.slane %v2683, %v2746
    %v2748 = vlaneseq
    %v2749 = vshrl.u32 %v2748, 7
    %v2750 = vsub.s32 7, %v2749
    %v2751 = vrot.slane %v2683, %v2750
    %v2752 = vlaneseq
    %v2753 = vshrl.u32 %v2752, 7
    %v2754 = vsub.s32 0, %v2753
    %v2755 = vrot.slane %v2684, %v2754
    %v2756 = vlaneseq
    %v2757 = vshrl.u32 %v2756, 7
    %v2758 = vsub.s32 1, %v2757
    %v2759 = vrot.slane %v2684, %v2758
    %v2760 = vlaneseq
    %v2761 = vshrl.u32 %v2760, 7
    %v2762 = vsub.s32 2, %v2761
    %v2763 = vrot.slane %v2684, %v2762
    %v2764 = vlaneseq
    %v2765 = vshrl.u32 %v2764, 7
    %v2766 = vsub.s32 3, %v2765
    %v2767 = vrot.slane %v2684, %v2766
    %vm2788 = vcmp.eq.f32.partialorder %v1136, %v2691
    %vm2789 = vcmp.eq.f32.partialorder %v1138, %v2695
    %vm2790 = vcmp.eq.f32.partialorder %v1297, %v2699
    %vm2791 = vcmp.eq.f32.partialorder %v1299, %v2703
    %vm2792 = vcmp.eq.f32.partialorder %v1458, %v2707
    %vm2793 = vcmp.eq.f32.partialorder %v1460, %v2711
    %vm2794 = vcmp.eq.f32.partialorder %v1619, %v2715
    %vm2795 = vcmp.eq.f32.partialorder %v1621, %v2719
    %vm2796 = vcmp.eq.f32.partialorder %v1780, %v2723
    %vm2797 = vcmp.eq.f32.partialorder %v1782, %v2727
    %vm2798 = vcmp.eq.f32.partialorder %v1941, %v2731
    %vm2799 = vcmp.eq.f32.partialorder %v1943, %v2735
    %vm2800 = vcmp.eq.f32.partialorder %v2102, %v2739
    %vm2801 = vcmp.eq.f32.partialorder %v2104, %v2743
    %vm2802 = vcmp.eq.f32.partialorder %v2263, %v2747
    %vm2803 = vcmp.eq.f32.partialorder %v2265, %v2751
    %vm2804 = vcmp.eq.f32.partialorder %v2424, %v2755
    %vm2805 = vcmp.eq.f32.partialorder %v2426, %v2759
    %vm2806 = vcmp.eq.f32.partialorder %v2585, %v2763
    %vm2807 = vcmp.eq.f32.partialorder %v2587, %v2767
    %vm2808 = vcmp.eq.f32.partialorder %v1142, %v2691
    %vm2809 = vcmp.eq.f32.partialorder %v1144, %v2695
    %vm2810 = vcmp.eq.f32.partialorder %v1303, %v2699
    %vm2811 = vcmp.eq.f32.partialorder %v1305, %v2703
    %vm2812 = vcmp.eq.f32.partialorder %v1464, %v2707
    %vm2813 = vcmp.eq.f32.partialorder %v1466, %v2711
    %vm2814 = vcmp.eq.f32.partialorder %v1625, %v2715
    %vm2815 = vcmp.eq.f32.partialorder %v1627, %v2719
    %vm2816 = vcmp.eq.f32.partialorder %v1786, %v2723
    %vm2817 = vcmp.eq.f32.partialorder %v1788, %v2727
    %vm2818 = vcmp.eq.f32.partialorder %v1947, %v2731
    %vm2819 = vcmp.eq.f32.partialorder %v1949, %v2735
    %vm2820 = vcmp.eq.f32.partialorder %v2108, %v2739
    %vm2821 = vcmp.eq.f32.partialorder %v2110, %v2743
    %vm2822 = vcmp.eq.f32.partialorder %v2269, %v2747
    %vm2823 = vcmp.eq.f32.partialorder %v2271, %v2751
    %vm2824 = vcmp.eq.f32.partialorder %v2430, %v2755
    %vm2825 = vcmp.eq.f32.partialorder %v2432, %v2759
    %vm2826 = vcmp.eq.f32.partialorder %v2591, %v2763
    %vm2827 = vcmp.eq.f32.partialorder %v2593, %v2767
    %v2828 = vsel %vm2788, %v1184, 0.0
    %v2829 = vsel %vm2789, %v1186, 0.0
    %v2830 = vsel %vm2790, %v1345, 0.0
    %v2831 = vsel %vm2791, %v1347, 0.0
    %v2832 = vsel %vm2792, %v1506, 0.0
    %v2833 = vsel %vm2793, %v1508, 0.0
    %v2834 = vsel %vm2794, %v1667, 0.0
    %v2835 = vsel %vm2795, %v1669, 0.0
    %v2836 = vsel %vm2796, %v1828, 0.0
    %v2837 = vsel %vm2797, %v1830, 0.0
    %v2838 = vsel %vm2798, %v1989, 0.0
    %v2839 = vsel %vm2799, %v1991, 0.0
    %v2840 = vsel %vm2800, %v2150, 0.0
    %v2841 = vsel %vm2801, %v2152, 0.0
    %v2842 = vsel %vm2802, %v2311, 0.0
    %v2843 = vsel %vm2803, %v2313, 0.0
    %v2844 = vsel %vm2804, %v2472, 0.0
    %v2845 = vsel %vm2805, %v2474, 0.0
    %v2846 = vsel %vm2806, %v2633, 0.0
    %v2847 = vsel %vm2807, %v2635, 0.0
    %v2848 = vsel %vm2808, %v1190, 0.0
    %v2849 = vsel %vm2809, %v1192, 0.0
    %v2850 = vsel %vm2810, %v1351, 0.0
    %v2851 = vsel %vm2811, %v1353, 0.0
    %v2852 = vsel %vm2812, %v1512, 0.0
    %v2853 = vsel %vm2813, %v1514, 0.0
    %v2854 = vsel %vm2814, %v1673, 0.0
    %v2855 = vsel %vm2815, %v1675, 0.0
    %v2856 = vsel %vm2816, %v1834, 0.0
    %v2857 = vsel %vm2817, %v1836, 0.0
    %v2858 = vsel %vm2818, %v1995, 0.0
    %v2859 = vsel %vm2819, %v1997, 0.0
    %v2860 = vsel %vm2820, %v2156, 0.0
    %v2861 = vsel %vm2821, %v2158, 0.0
    %v2862 = vsel %vm2822, %v2317, 0.0
    %v2863 = vsel %vm2823, %v2319, 0.0
    %v2864 = vsel %vm2824, %v2478, 0.0
    %v2865 = vsel %vm2825, %v2480, 0.0
    %v2866 = vsel %vm2826, %v2639, 0.0
    %v2867 = vsel %vm2827, %v2641, 0.0
    %v2868 = vadd.f32 %v2828, 0.0
    %v2869 = vadd.f32 %v2829, 0.0
    %v2870 = vadd.f32 %v2830, 0.0
    %v2871 = vadd.f32 %v2831, 0.0
    %v2872 = vadd.f32 %v2832, 0.0
    %v2873 = vadd.f32 %v2833, 0.0
    %v2874 = vadd.f32 %v2834, 0.0
    %v2875 = vadd.f32 %v2835, 0.0
    %v2876 = vadd.f32 %v2836, 0.0
    %v2877 = vadd.f32 %v2837, 0.0
    %v2878 = vadd.f32 %v2838, 0.0
    %v2879 = vadd.f32 %v2839, 0.0
    %v2880 = vadd.f32 %v2840, 0.0
    %v2881 = vadd.f32 %v2841, 0.0
    %v2882 = vadd.f32 %v2842, 0.0
    %v2883 = vadd.f32 %v2843, 0.0
    %v2884 = vadd.f32 %v2844, 0.0
    %v2885 = vadd.f32 %v2845, 0.0
    %v2886 = vadd.f32 %v2846, 0.0
    %v2887 = vadd.f32 %v2847, 0.0
    %v2888 = vadd.f32 %v2848, 0.0
    %v2889 = vadd.f32 %v2849, 0.0
    %v2890 = vadd.f32 %v2850, 0.0
    %v2891 = vadd.f32 %v2851, 0.0
    %v2892 = vadd.f32 %v2852, 0.0
    %v2893 = vadd.f32 %v2853, 0.0
    %v2894 = vadd.f32 %v2854, 0.0
    %v2895 = vadd.f32 %v2855, 0.0
    %v2896 = vadd.f32 %v2856, 0.0
    %v2897 = vadd.f32 %v2857, 0.0
    %v2898 = vadd.f32 %v2858, 0.0
    %v2899 = vadd.f32 %v2859, 0.0
    %v2900 = vadd.f32 %v2860, 0.0
    %v2901 = vadd.f32 %v2861, 0.0
    %v2902 = vadd.f32 %v2862, 0.0
    %v2903 = vadd.f32 %v2863, 0.0
    %v2904 = vadd.f32 %v2864, 0.0
    %v2905 = vadd.f32 %v2865, 0.0
    %v2906 = vadd.f32 %v2866, 0.0
    %v2907 = vadd.f32 %v2867, 0.0
    %vm2908 = vcmp.eq.f32.partialorder %v1148, %v2691
    %vm2909 = vcmp.eq.f32.partialorder %v1150, %v2695
    %vm2910 = vcmp.eq.f32.partialorder %v1309, %v2699
    %vm2911 = vcmp.eq.f32.partialorder %v1311, %v2703
    %vm2912 = vcmp.eq.f32.partialorder %v1470, %v2707
    %vm2913 = vcmp.eq.f32.partialorder %v1472, %v2711
    %vm2914 = vcmp.eq.f32.partialorder %v1631, %v2715
    %vm2915 = vcmp.eq.f32.partialorder %v1633, %v2719
    %vm2916 = vcmp.eq.f32.partialorder %v1792, %v2723
    %vm2917 = vcmp.eq.f32.partialorder %v1794, %v2727
    %vm2918 = vcmp.eq.f32.partialorder %v1953, %v2731
    %vm2919 = vcmp.eq.f32.partialorder %v1955, %v2735
    %vm2920 = vcmp.eq.f32.partialorder %v2114, %v2739
    %vm2921 = vcmp.eq.f32.partialorder %v2116, %v2743
    %vm2922 = vcmp.eq.f32.partialorder %v2275, %v2747
    %vm2923 = vcmp.eq.f32.partialorder %v2277, %v2751
    %vm2924 = vcmp.eq.f32.partialorder %v2436, %v2755
    %vm2925 = vcmp.eq.f32.partialorder %v2438, %v2759
    %vm2926 = vcmp.eq.f32.partialorder %v2597, %v2763
    %vm2927 = vcmp.eq.f32.partialorder %v2599, %v2767
    %vm2928 = vcmp.eq.f32.partialorder %v1154, %v2691
    %vm2929 = vcmp.eq.f32.partialorder %v1156, %v2695
    %vm2930 = vcmp.eq.f32.partialorder %v1315, %v2699
    %vm2931 = vcmp.eq.f32.partialorder %v1317, %v2703
    %vm2932 = vcmp.eq.f32.partialorder %v1476, %v2707
    %vm2933 = vcmp.eq.f32.partialorder %v1478, %v2711
    %vm2934 = vcmp.eq.f32.partialorder %v1637, %v2715
    %vm2935 = vcmp.eq.f32.partialorder %v1639, %v2719
    %vm2936 = vcmp.eq.f32.partialorder %v1798, %v2723
    %vm2937 = vcmp.eq.f32.partialorder %v1800, %v2727
    %vm2938 = vcmp.eq.f32.partialorder %v1959, %v2731
    %vm2939 = vcmp.eq.f32.partialorder %v1961, %v2735
    %vm2940 = vcmp.eq.f32.partialorder %v2120, %v2739
    %vm2941 = vcmp.eq.f32.partialorder %v2122, %v2743
    %vm2942 = vcmp.eq.f32.partialorder %v2281, %v2747
    %vm2943 = vcmp.eq.f32.partialorder %v2283, %v2751
    %vm2944 = vcmp.eq.f32.partialorder %v2442, %v2755
    %vm2945 = vcmp.eq.f32.partialorder %v2444, %v2759
    %vm2946 = vcmp.eq.f32.partialorder %v2603, %v2763
    %vm2947 = vcmp.eq.f32.partialorder %v2605, %v2767
    %v2948 = vsel %vm2908, %v1196, 0.0
    %v2949 = vsel %vm2909, %v1198, 0.0
    %v2950 = vsel %vm2910, %v1357, 0.0
    %v2951 = vsel %vm2911, %v1359, 0.0
    %v2952 = vsel %vm2912, %v1518, 0.0
    %v2953 = vsel %vm2913, %v1520, 0.0
    %v2954 = vsel %vm2914, %v1679, 0.0
    %v2955 = vsel %vm2915, %v1681, 0.0
    %v2956 = vsel %vm2916, %v1840, 0.0
    %v2957 = vsel %vm2917, %v1842, 0.0
    %v2958 = vsel %vm2918, %v2001, 0.0
    %v2959 = vsel %vm2919, %v2003, 0.0
    %v2960 = vsel %vm2920, %v2162, 0.0
    %v2961 = vsel %vm2921, %v2164, 0.0
    %v2962 = vsel %vm2922, %v2323, 0.0
    %v2963 = vsel %vm2923, %v2325, 0.0
    %v2964 = vsel %vm2924, %v2484, 0.0
    %v2965 = vsel %vm2925, %v2486, 0.0
    %v2966 = vsel %vm2926, %v2645, 0.0
    %v2967 = vsel %vm2927, %v2647, 0.0
    %v2968 = vsel %vm2928, %v1202, 0.0
    %v2969 = vsel %vm2929, %v1204, 0.0
    %v2970 = vsel %vm2930, %v1363, 0.0
    %v2971 = vsel %vm2931, %v1365, 0.0
    %v2972 = vsel %vm2932, %v1524, 0.0
    %v2973 = vsel %vm2933, %v1526, 0.0
    %v2974 = vsel %vm2934, %v1685, 0.0
    %v2975 = vsel %vm2935, %v1687, 0.0
    %v2976 = vsel %vm2936, %v1846, 0.0
    %v2977 = vsel %vm2937, %v1848, 0.0
    %v2978 = vsel %vm2938, %v2007, 0.0
    %v2979 = vsel %vm2939, %v2009, 0.0
    %v2980 = vsel %vm2940, %v2168, 0.0
    %v2981 = vsel %vm2941, %v2170, 0.0
    %v2982 = vsel %vm2942, %v2329, 0.0
    %v2983 = vsel %vm2943, %v2331, 0.0
    %v2984 = vsel %vm2944, %v2490, 0.0
    %v2985 = vsel %vm2945, %v2492, 0.0
    %v2986 = vsel %vm2946, %v2651, 0.0
    %v2987 = vsel %vm2947, %v2653, 0.0
    %v2988 = vadd.f32 %v2868, %v2948
    %v2989 = vadd.f32 %v2869, %v2949
    %v2990 = vadd.f32 %v2870, %v2950
    %v2991 = vadd.f32 %v2871, %v2951
    %v2992 = vadd.f32 %v2872, %v2952
    %v2993 = vadd.f32 %v2873, %v2953
    %v2994 = vadd.f32 %v2874, %v2954
    %v2995 = vadd.f32 %v2875, %v2955
    %v2996 = vadd.f32 %v2876, %v2956
    %v2997 = vadd.f32 %v2877, %v2957
    %v2998 = vadd.f32 %v2878, %v2958
    %v2999 = vadd.f32 %v2879, %v2959
    %v3000 = vadd.f32 %v2880, %v2960
    %v3001 = vadd.f32 %v2881, %v2961
    %v3002 = vadd.f32 %v2882, %v2962
    %v3003 = vadd.f32 %v2883, %v2963
    %v3004 = vadd.f32 %v2884, %v2964
    %v3005 = vadd.f32 %v2885, %v2965
    %v3006 = vadd.f32 %v2886, %v2966
    %v3007 = vadd.f32 %v2887, %v2967
    %v3008 = vadd.f32 %v2888, %v2968
    %v3009 = vadd.f32 %v2889, %v2969
    %v3010 = vadd.f32 %v2890, %v2970
    %v3011 = vadd.f32 %v2891, %v2971
    %v3012 = vadd.f32 %v2892, %v2972
    %v3013 = vadd.f32 %v2893, %v2973
    %v3014 = vadd.f32 %v2894, %v2974
    %v3015 = vadd.f32 %v2895, %v2975
    %v3016 = vadd.f32 %v2896, %v2976
    %v3017 = vadd.f32 %v2897, %v2977
    %v3018 = vadd.f32 %v2898, %v2978
    %v3019 = vadd.f32 %v2899, %v2979
    %v3020 = vadd.f32 %v2900, %v2980
    %v3021 = vadd.f32 %v2901, %v2981
    %v3022 = vadd.f32 %v2902, %v2982
    %v3023 = vadd.f32 %v2903, %v2983
    %v3024 = vadd.f32 %v2904, %v2984
    %v3025 = vadd.f32 %v2905, %v2985
    %v3026 = vadd.f32 %v2906, %v2986
    %v3027 = vadd.f32 %v2907, %v2987
    %vm3028 = vcmp.eq.f32.partialorder %v1160, %v2691
    %vm3029 = vcmp.eq.f32.partialorder %v1162, %v2695
    %vm3030 = vcmp.eq.f32.partialorder %v1321, %v2699
    %vm3031 = vcmp.eq.f32.partialorder %v1323, %v2703
    %vm3032 = vcmp.eq.f32.partialorder %v1482, %v2707
    %vm3033 = vcmp.eq.f32.partialorder %v1484, %v2711
    %vm3034 = vcmp.eq.f32.partialorder %v1643, %v2715
    %vm3035 = vcmp.eq.f32.partialorder %v1645, %v2719
    %vm3036 = vcmp.eq.f32.partialorder %v1804, %v2723
    %vm3037 = vcmp.eq.f32.partialorder %v1806, %v2727
    %vm3038 = vcmp.eq.f32.partialorder %v1965, %v2731
    %vm3039 = vcmp.eq.f32.partialorder %v1967, %v2735
    %vm3040 = vcmp.eq.f32.partialorder %v2126, %v2739
    %vm3041 = vcmp.eq.f32.partialorder %v2128, %v2743
    %vm3042 = vcmp.eq.f32.partialorder %v2287, %v2747
    %vm3043 = vcmp.eq.f32.partialorder %v2289, %v2751
    %vm3044 = vcmp.eq.f32.partialorder %v2448, %v2755
    %vm3045 = vcmp.eq.f32.partialorder %v2450, %v2759
    %vm3046 = vcmp.eq.f32.partialorder %v2609, %v2763
    %vm3047 = vcmp.eq.f32.partialorder %v2611, %v2767
    %vm3048 = vcmp.eq.f32.partialorder %v1166, %v2691
    %vm3049 = vcmp.eq.f32.partialorder %v1168, %v2695
    %vm3050 = vcmp.eq.f32.partialorder %v1327, %v2699
    %vm3051 = vcmp.eq.f32.partialorder %v1329, %v2703
    %vm3052 = vcmp.eq.f32.partialorder %v1488, %v2707
    %vm3053 = vcmp.eq.f32.partialorder %v1490, %v2711
    %vm3054 = vcmp.eq.f32.partialorder %v1649, %v2715
    %vm3055 = vcmp.eq.f32.partialorder %v1651, %v2719
    %vm3056 = vcmp.eq.f32.partialorder %v1810, %v2723
    %vm3057 = vcmp.eq.f32.partialorder %v1812, %v2727
    %vm3058 = vcmp.eq.f32.partialorder %v1971, %v2731
    %vm3059 = vcmp.eq.f32.partialorder %v1973, %v2735
    %vm3060 = vcmp.eq.f32.partialorder %v2132, %v2739
    %vm3061 = vcmp.eq.f32.partialorder %v2134, %v2743
    %vm3062 = vcmp.eq.f32.partialorder %v2293, %v2747
    %vm3063 = vcmp.eq.f32.partialorder %v2295, %v2751
    %vm3064 = vcmp.eq.f32.partialorder %v2454, %v2755
    %vm3065 = vcmp.eq.f32.partialorder %v2456, %v2759
    %vm3066 = vcmp.eq.f32.partialorder %v2615, %v2763
    %vm3067 = vcmp.eq.f32.partialorder %v2617, %v2767
    %v3068 = vsel %vm3028, %v1208, 0.0
    %v3069 = vsel %vm3029, %v1210, 0.0
    %v3070 = vsel %vm3030, %v1369, 0.0
    %v3071 = vsel %vm3031, %v1371, 0.0
    %v3072 = vsel %vm3032, %v1530, 0.0
    %v3073 = vsel %vm3033, %v1532, 0.0
    %v3074 = vsel %vm3034, %v1691, 0.0
    %v3075 = vsel %vm3035, %v1693, 0.0
    %v3076 = vsel %vm3036, %v1852, 0.0
    %v3077 = vsel %vm3037, %v1854, 0.0
    %v3078 = vsel %vm3038, %v2013, 0.0
    %v3079 = vsel %vm3039, %v2015, 0.0
    %v3080 = vsel %vm3040, %v2174, 0.0
    %v3081 = vsel %vm3041, %v2176, 0.0
    %v3082 = vsel %vm3042, %v2335, 0.0
    %v3083 = vsel %vm3043, %v2337, 0.0
    %v3084 = vsel %vm3044, %v2496, 0.0
    %v3085 = vsel %vm3045, %v2498, 0.0
    %v3086 = vsel %vm3046, %v2657, 0.0
    %v3087 = vsel %vm3047, %v2659, 0.0
    %v3088 = vsel %vm3048, %v1214, 0.0
    %v3089 = vsel %vm3049, %v1216, 0.0
    %v3090 = vsel %vm3050, %v1375, 0.0
    %v3091 = vsel %vm3051, %v1377, 0.0
    %v3092 = vsel %vm3052, %v1536, 0.0
    %v3093 = vsel %vm3053, %v1538, 0.0
    %v3094 = vsel %vm3054, %v1697, 0.0
    %v3095 = vsel %vm3055, %v1699, 0.0
    %v3096 = vsel %vm3056, %v1858, 0.0
    %v3097 = vsel %vm3057, %v1860, 0.0
    %v3098 = vsel %vm3058, %v2019, 0.0
    %v3099 = vsel %vm3059, %v2021, 0.0
    %v3100 = vsel %vm3060, %v2180, 0.0
    %v3101 = vsel %vm3061, %v2182, 0.0
    %v3102 = vsel %vm3062, %v2341, 0.0
    %v3103 = vsel %vm3063, %v2343, 0.0
    %v3104 = vsel %vm3064, %v2502, 0.0
    %v3105 = vsel %vm3065, %v2504, 0.0
    %v3106 = vsel %vm3066, %v2663, 0.0
    %v3107 = vsel %vm3067, %v2665, 0.0
    %v3108 = vadd.f32 %v2988, %v3068
    %v3109 = vadd.f32 %v2989, %v3069
    %v3110 = vadd.f32 %v2990, %v3070
    %v3111 = vadd.f32 %v2991, %v3071
    %v3112 = vadd.f32 %v2992, %v3072
    %v3113 = vadd.f32 %v2993, %v3073
    %v3114 = vadd.f32 %v2994, %v3074
    %v3115 = vadd.f32 %v2995, %v3075
    %v3116 = vadd.f32 %v2996, %v3076
    %v3117 = vadd.f32 %v2997, %v3077
    %v3118 = vadd.f32 %v2998, %v3078
    %v3119 = vadd.f32 %v2999, %v3079
    %v3120 = vadd.f32 %v3000, %v3080
    %v3121 = vadd.f32 %v3001, %v3081
    %v3122 = vadd.f32 %v3002, %v3082
    %v3123 = vadd.f32 %v3003, %v3083
    %v3124 = vadd.f32 %v3004, %v3084
    %v3125 = vadd.f32 %v3005, %v3085
    %v3126 = vadd.f32 %v3006, %v3086
    %v3127 = vadd.f32 %v3007, %v3087
    %v3128 = vadd.f32 %v3008, %v3088
    %v3129 = vadd.f32 %v3009, %v3089
    %v3130 = vadd.f32 %v3010, %v3090
    %v3131 = vadd.f32 %v3011, %v3091
    %v3132 = vadd.f32 %v3012, %v3092
    %v3133 = vadd.f32 %v3013, %v3093
    %v3134 = vadd.f32 %v3014, %v3094
    %v3135 = vadd.f32 %v3015, %v3095
    %v3136 = vadd.f32 %v3016, %v3096
    %v3137 = vadd.f32 %v3017, %v3097
    %v3138 = vadd.f32 %v3018, %v3098
    %v3139 = vadd.f32 %v3019, %v3099
    %v3140 = vadd.f32 %v3020, %v3100
    %v3141 = vadd.f32 %v3021, %v3101
    %v3142 = vadd.f32 %v3022, %v3102
    %v3143 = vadd.f32 %v3023, %v3103
    %v3144 = vadd.f32 %v3024, %v3104
    %v3145 = vadd.f32 %v3025, %v3105
    %v3146 = vadd.f32 %v3026, %v3106
    %v3147 = vadd.f32 %v3027, %v3107
    %vm3148 = vcmp.eq.f32.partialorder %v1172, %v2691
    %vm3149 = vcmp.eq.f32.partialorder %v1174, %v2695
    %vm3150 = vcmp.eq.f32.partialorder %v1333, %v2699
    %vm3151 = vcmp.eq.f32.partialorder %v1335, %v2703
    %vm3152 = vcmp.eq.f32.partialorder %v1494, %v2707
    %vm3153 = vcmp.eq.f32.partialorder %v1496, %v2711
    %vm3154 = vcmp.eq.f32.partialorder %v1655, %v2715
    %vm3155 = vcmp.eq.f32.partialorder %v1657, %v2719
    %vm3156 = vcmp.eq.f32.partialorder %v1816, %v2723
    %vm3157 = vcmp.eq.f32.partialorder %v1818, %v2727
    %vm3158 = vcmp.eq.f32.partialorder %v1977, %v2731
    %vm3159 = vcmp.eq.f32.partialorder %v1979, %v2735
    %vm3160 = vcmp.eq.f32.partialorder %v2138, %v2739
    %vm3161 = vcmp.eq.f32.partialorder %v2140, %v2743
    %vm3162 = vcmp.eq.f32.partialorder %v2299, %v2747
    %vm3163 = vcmp.eq.f32.partialorder %v2301, %v2751
    %vm3164 = vcmp.eq.f32.partialorder %v2460, %v2755
    %vm3165 = vcmp.eq.f32.partialorder %v2462, %v2759
    %vm3166 = vcmp.eq.f32.partialorder %v2621, %v2763
    %vm3167 = vcmp.eq.f32.partialorder %v2623, %v2767
    %vm3168 = vcmp.eq.f32.partialorder %v1178, %v2691
    %vm3169 = vcmp.eq.f32.partialorder %v1180, %v2695
    %vm3170 = vcmp.eq.f32.partialorder %v1339, %v2699
    %vm3171 = vcmp.eq.f32.partialorder %v1341, %v2703
    %vm3172 = vcmp.eq.f32.partialorder %v1500, %v2707
    %vm3173 = vcmp.eq.f32.partialorder %v1502, %v2711
    %vm3174 = vcmp.eq.f32.partialorder %v1661, %v2715
    %vm3175 = vcmp.eq.f32.partialorder %v1663, %v2719
    %vm3176 = vcmp.eq.f32.partialorder %v1822, %v2723
    %vm3177 = vcmp.eq.f32.partialorder %v1824, %v2727
    %vm3178 = vcmp.eq.f32.partialorder %v1983, %v2731
    %vm3179 = vcmp.eq.f32.partialorder %v1985, %v2735
    %vm3180 = vcmp.eq.f32.partialorder %v2144, %v2739
    %vm3181 = vcmp.eq.f32.partialorder %v2146, %v2743
    %vm3182 = vcmp.eq.f32.partialorder %v2305, %v2747
    %vm3183 = vcmp.eq.f32.partialorder %v2307, %v2751
    %vm3184 = vcmp.eq.f32.partialorder %v2466, %v2755
    %vm3185 = vcmp.eq.f32.partialorder %v2468, %v2759
    %vm3186 = vcmp.eq.f32.partialorder %v2627, %v2763
    %vm3187 = vcmp.eq.f32.partialorder %v2629, %v2767
    %v3188 = vsel %vm3148, %v1220, 0.0
    %v3189 = vsel %vm3149, %v1222, 0.0
    %v3190 = vsel %vm3150, %v1381, 0.0
    %v3191 = vsel %vm3151, %v1383, 0.0
    %v3192 = vsel %vm3152, %v1542, 0.0
    %v3193 = vsel %vm3153, %v1544, 0.0
    %v3194 = vsel %vm3154, %v1703, 0.0
    %v3195 = vsel %vm3155, %v1705, 0.0
    %v3196 = vsel %vm3156, %v1864, 0.0
    %v3197 = vsel %vm3157, %v1866, 0.0
    %v3198 = vsel %vm3158, %v2025, 0.0
    %v3199 = vsel %vm3159, %v2027, 0.0
    %v3200 = vsel %vm3160, %v2186, 0.0
    %v3201 = vsel %vm3161, %v2188, 0.0
    %v3202 = vsel %vm3162, %v2347, 0.0
    %v3203 = vsel %vm3163, %v2349, 0.0
    %v3204 = vsel %vm3164, %v2508, 0.0
    %v3205 = vsel %vm3165, %v2510, 0.0
    %v3206 = vsel %vm3166, %v2669, 0.0
    %v3207 = vsel %vm3167, %v2671, 0.0
    %v3208 = vsel %vm3168, %v1226, 0.0
    %v3209 = vsel %vm3169, %v1228, 0.0
    %v3210 = vsel %vm3170, %v1387, 0.0
    %v3211 = vsel %vm3171, %v1389, 0.0
    %v3212 = vsel %vm3172, %v1548, 0.0
    %v3213 = vsel %vm3173, %v1550, 0.0
    %v3214 = vsel %vm3174, %v1709, 0.0
    %v3215 = vsel %vm3175, %v1711, 0.0
    %v3216 = vsel %vm3176, %v1870, 0.0
    %v3217 = vsel %vm3177, %v1872, 0.0
    %v3218 = vsel %vm3178, %v2031, 0.0
    %v3219 = vsel %vm3179, %v2033, 0.0
    %v3220 = vsel %vm3180, %v2192, 0.0
    %v3221 = vsel %vm3181, %v2194, 0.0
    %v3222 = vsel %vm3182, %v2353, 0.0
    %v3223 = vsel %vm3183, %v2355, 0.0
    %v3224 = vsel %vm3184, %v2514, 0.0
    %v3225 = vsel %vm3185, %v2516, 0.0
    %v3226 = vsel %vm3186, %v2675, 0.0
    %v3227 = vsel %vm3187, %v2677, 0.0
    %v3228 = vadd.f32 %v3108, %v3188
    %v3229 = vadd.f32 %v3109, %v3189
    %v3230 = vadd.f32 %v3110, %v3190
    %v3231 = vadd.f32 %v3111, %v3191
    %v3232 = vadd.f32 %v3112, %v3192
    %v3233 = vadd.f32 %v3113, %v3193
    %v3234 = vadd.f32 %v3114, %v3194
    %v3235 = vadd.f32 %v3115, %v3195
    %v3236 = vadd.f32 %v3116, %v3196
    %v3237 = vadd.f32 %v3117, %v3197
    %v3238 = vadd.f32 %v3118, %v3198
    %v3239 = vadd.f32 %v3119, %v3199
    %v3240 = vadd.f32 %v3120, %v3200
    %v3241 = vadd.f32 %v3121, %v3201
    %v3242 = vadd.f32 %v3122, %v3202
    %v3243 = vadd.f32 %v3123, %v3203
    %v3244 = vadd.f32 %v3124, %v3204
    %v3245 = vadd.f32 %v3125, %v3205
    %v3246 = vadd.f32 %v3126, %v3206
    %v3247 = vadd.f32 %v3127, %v3207
    %v3248 = vadd.f32 %v3128, %v3208
    %v3249 = vadd.f32 %v3129, %v3209
    %v3250 = vadd.f32 %v3130, %v3210
    %v3251 = vadd.f32 %v3131, %v3211
    %v3252 = vadd.f32 %v3132, %v3212
    %v3253 = vadd.f32 %v3133, %v3213
    %v3254 = vadd.f32 %v3134, %v3214
    %v3255 = vadd.f32 %v3135, %v3215
    %v3256 = vadd.f32 %v3136, %v3216
    %v3257 = vadd.f32 %v3137, %v3217
    %v3258 = vadd.f32 %v3138, %v3218
    %v3259 = vadd.f32 %v3139, %v3219
    %v3260 = vadd.f32 %v3140, %v3220
    %v3261 = vadd.f32 %v3141, %v3221
    %v3262 = vadd.f32 %v3142, %v3222
    %v3263 = vadd.f32 %v3143, %v3223
    %v3264 = vadd.f32 %v3144, %v3224
    %v3265 = vadd.f32 %v3145, %v3225
    %v3266 = vadd.f32 %v3146, %v3226
    %v3267 = vadd.f32 %v3147, %v3227
    %3268 = vmatprep.subr.mxu0 0.0
    %3269 = vmatpush1.msra.mxu0 %v616
    %3270 = vmatprep.subr.mxu0 0.0
    %3271 = vmatpush1.msra.mxu0 %v617
    %3272 = vmatprep.subr.mxu0 0.0
    %3273 = vmatpush1.msra.mxu0 %v618
    %3274 = vmatprep.subr.mxu0 0.0
    %3275 = vmatpush1.msra.mxu0 %v619
    %3276 = vmatprep.subr.mxu0 0.0
    %3277 = vmatpush1.msra.mxu0 %v620
    %3278 = vmatprep.subr.mxu0 0.0
    %3279 = vmatpush1.msra.mxu0 %v621
    %3280 = vmatprep.subr.mxu0 0.0
    %3281 = vmatpush1.msra.mxu0 %v622
    %3282 = vmatprep.subr.mxu0 0.0
    %3283 = vmatpush1.msra.mxu0 %v623
    %3284 = vmatprep.subr.mxu0 0.0
    %3285 = vmatpush1.msra.mxu0 %v624
    %3286 = vmatprep.subr.mxu0 0.0
    %3287 = vmatpush1.msra.mxu0 %v625
    %3288 = vmatprep.subr.mxu0 0.0
    %3289 = vmatpush1.msra.mxu0 %v626
    %3290 = vmatprep.subr.mxu0 0.0
    %3291 = vmatpush1.msra.mxu0 %v627
    %3292 = vmatprep.subr.mxu0 0.0
    %3293 = vmatpush1.msra.mxu0 %v628
    %3294 = vmatprep.subr.mxu0 0.0
    %3295 = vmatpush1.msra.mxu0 %v629
    %3296 = vmatprep.subr.mxu0 0.0
    %3297 = vmatpush1.msra.mxu0 %v630
    %3298 = vmatprep.subr.mxu0 0.0
    %3299 = vmatpush1.msra.mxu0 %v631
    %3300 = vmatprep.subr.mxu0 0.0
    %3301 = vmatpush1.msra.mxu0 %v632
    %3302 = vmatprep.subr.mxu0 0.0
    %3303 = vmatpush1.msra.mxu0 %v633
    %3304 = vmatprep.subr.mxu0 0.0
    %3305 = vmatpush1.msra.mxu0 %v634
    %3306 = vmatprep.subr.mxu0 0.0
    %3307 = vmatpush1.msra.mxu0 %v635
    %3308 = vmatprep.subr.mxu0 0.0
    %3309 = vmatpush1.msra.mxu0 %v616
    %3310 = vmatprep.subr.mxu0 0.0
    %3311 = vmatpush1.msra.mxu0 %v617
    %3312 = vmatprep.subr.mxu0 0.0
    %3313 = vmatpush1.msra.mxu0 %v618
    %3314 = vmatprep.subr.mxu0 0.0
    %3315 = vmatpush1.msra.mxu0 %v619
    %3316 = vmatprep.subr.mxu0 0.0
    %3317 = vmatpush1.msra.mxu0 %v620
    %3318 = vmatprep.subr.mxu0 0.0
    %3319 = vmatpush1.msra.mxu0 %v621
    %3320 = vmatprep.subr.mxu0 0.0
    %3321 = vmatpush1.msra.mxu0 %v622
    %3322 = vmatprep.subr.mxu0 0.0
    %3323 = vmatpush1.msra.mxu0 %v623
    %3324 = vmatprep.subr.mxu0 0.0
    %3325 = vmatpush1.msra.mxu0 %v624
    %3326 = vmatprep.subr.mxu0 0.0
    %3327 = vmatpush1.msra.mxu0 %v625
    %3328 = vmatprep.subr.mxu0 0.0
    %3329 = vmatpush1.msra.mxu0 %v626
    %3330 = vmatprep.subr.mxu0 0.0
    %3331 = vmatpush1.msra.mxu0 %v627
    %3332 = vmatprep.mubr.f32.mxu0 %v3229
    %3333 = vmatmul.mubr.f32.gmra.mrb[0].mxu0 %v3228
    %v3334 = vpop.f32.mrb[0].mxu0
    %v3335 = vadd.f32 0.0, %v3334
    %v3336 = vpop.f32.mrb[0].mxu0
    %3337 = vmatprep.mubr.f32.mxu0 %v3249
    %3338 = vmatmul.mubr.f32.gmra.mrb[0].mxu0 %v3248
    %v3339 = vpop.f32.mrb[0].mxu0
    %v3340 = vadd.f32 0.0, %v3339
    %v3341 = vpop.f32.mrb[0].mxu0
    %3342 = vdwg.mxu0
    %3343 = vmatprep.subr.mxu0 0.0
    %3344 = vmatpush1.msra.mxu0 %v628
    %3345 = vmatprep.subr.mxu0 0.0
    %3346 = vmatpush1.msra.mxu0 %v629
    %3347 = vmatprep.subr.mxu0 0.0
    %3348 = vmatpush1.msra.mxu0 %v630
    %3349 = vmatprep.subr.mxu0 0.0
    %3350 = vmatpush1.msra.mxu0 %v631
    %3351 = vmatprep.subr.mxu0 0.0
    %3352 = vmatpush1.msra.mxu0 %v632
    %3353 = vmatprep.subr.mxu0 0.0
    %3354 = vmatpush1.msra.mxu0 %v633
    %3355 = vmatprep.subr.mxu0 0.0
    %3356 = vmatpush1.msra.mxu0 %v634
    %3357 = vmatprep.subr.mxu0 0.0
    %3358 = vmatpush1.msra.mxu0 %v635
    %3359 = vmatprep.subr.mxu0 0.0
    %3360 = vmatpush1.msra.mxu0 %v616
    %3361 = vmatprep.subr.mxu0 0.0
    %3362 = vmatpush1.msra.mxu0 %v617
    %3363 = vmatprep.subr.mxu0 0.0
    %3364 = vmatpush1.msra.mxu0 %v618
    %3365 = vmatprep.subr.mxu0 0.0
    %3366 = vmatpush1.msra.mxu0 %v619
    %3367 = vmatprep.subr.mxu0 0.0
    %3368 = vmatpush1.msra.mxu0 %v620
    %3369 = vmatprep.subr.mxu0 0.0
    %3370 = vmatpush1.msra.mxu0 %v621
    %3371 = vmatprep.subr.mxu0 0.0
    %3372 = vmatpush1.msra.mxu0 %v622
    %3373 = vmatprep.subr.mxu0 0.0
    %3374 = vmatpush1.msra.mxu0 %v623
    %3375 = vmatprep.subr.mxu0 0.0
    %3376 = vmatpush1.msra.mxu0 %v624
    %3377 = vmatprep.subr.mxu0 0.0
    %3378 = vmatpush1.msra.mxu0 %v625
    %3379 = vmatprep.subr.mxu0 0.0
    %3380 = vmatpush1.msra.mxu0 %v626
    %3381 = vmatprep.subr.mxu0 0.0
    %3382 = vmatpush1.msra.mxu0 %v627
    %3383 = vmatprep.subr.mxu0 0.0
    %3384 = vmatpush1.msra.mxu0 %v628
    %3385 = vmatprep.subr.mxu0 0.0
    %3386 = vmatpush1.msra.mxu0 %v629
    %3387 = vmatprep.subr.mxu0 0.0
    %3388 = vmatpush1.msra.mxu0 %v630
    %3389 = vmatprep.subr.mxu0 0.0
    %3390 = vmatpush1.msra.mxu0 %v631
    %3391 = vmatprep.subr.mxu0 0.0
    %3392 = vmatpush1.msra.mxu0 %v632
    %3393 = vmatprep.subr.mxu0 0.0
    %3394 = vmatpush1.msra.mxu0 %v633
    %3395 = vmatprep.subr.mxu0 0.0
    %3396 = vmatpush1.msra.mxu0 %v634
    %3397 = vmatprep.subr.mxu0 0.0
    %3398 = vmatpush1.msra.mxu0 %v635
    %3399 = vmatprep.subr.mxu0 0.0
    %3400 = vmatpush1.msra.mxu0 %v616
    %3401 = vmatprep.subr.mxu0 0.0
    %3402 = vmatpush1.msra.mxu0 %v617
    %3403 = vmatprep.subr.mxu0 0.0
    %3404 = vmatpush1.msra.mxu0 %v618
    %3405 = vmatprep.subr.mxu0 0.0
    %3406 = vmatpush1.msra.mxu0 %v619
    %3407 = vmatprep.mubr.f32.mxu0 %v3231
    %3408 = vmatmul.mubr.f32.gmra.mrb[0].mxu0 %v3230
    %v3409 = vpop.f32.mrb[0].mxu0
    %v3410 = vadd.f32 %v3335, %v3409
    %v3411 = vpop.f32.mrb[0].mxu0
    %3412 = vmatprep.mubr.f32.mxu0 %v3251
    %3413 = vmatmul.mubr.f32.gmra.mrb[0].mxu0 %v3250
    %v3414 = vpop.f32.mrb[0].mxu0
    %v3415 = vadd.f32 %v3340, %v3414
    %v3416 = vpop.f32.mrb[0].mxu0
    %3417 = vdwg.mxu0
    %3418 = vmatprep.subr.mxu0 0.0
    %3419 = vmatpush1.msra.mxu0 %v620
    %3420 = vmatprep.subr.mxu0 0.0
    %3421 = vmatpush1.msra.mxu0 %v621
    %3422 = vmatprep.subr.mxu0 0.0
    %3423 = vmatpush1.msra.mxu0 %v622
    %3424 = vmatprep.subr.mxu0 0.0
    %3425 = vmatpush1.msra.mxu0 %v623
    %3426 = vmatprep.subr.mxu0 0.0
    %3427 = vmatpush1.msra.mxu0 %v624
    %3428 = vmatprep.subr.mxu0 0.0
    %3429 = vmatpush1.msra.mxu0 %v625
    %3430 = vmatprep.subr.mxu0 0.0
    %3431 = vmatpush1.msra.mxu0 %v626
    %3432 = vmatprep.subr.mxu0 0.0
    %3433 = vmatpush1.msra.mxu0 %v627
    %3434 = vmatprep.subr.mxu0 0.0
    %3435 = vmatpush1.msra.mxu0 %v628
    %3436 = vmatprep.subr.mxu0 0.0
    %3437 = vmatpush1.msra.mxu0 %v629
    %3438 = vmatprep.subr.mxu0 0.0
    %3439 = vmatpush1.msra.mxu0 %v630
    %3440 = vmatprep.subr.mxu0 0.0
    %3441 = vmatpush1.msra.mxu0 %v631
    %3442 = vmatprep.subr.mxu0 0.0
    %3443 = vmatpush1.msra.mxu0 %v632
    %3444 = vmatprep.subr.mxu0 0.0
    %3445 = vmatpush1.msra.mxu0 %v633
    %3446 = vmatprep.subr.mxu0 0.0
    %3447 = vmatpush1.msra.mxu0 %v634
    %3448 = vmatprep.subr.mxu0 0.0
    %3449 = vmatpush1.msra.mxu0 %v635
    %3450 = vmatprep.subr.mxu0 0.0
    %3451 = vmatpush1.msra.mxu0 0.0
    %3452 = vmatprep.subr.mxu0 0.0
    %3453 = vmatpush1.msra.mxu0 0.0
    %3454 = vmatprep.subr.mxu0 0.0
    %3455 = vmatpush1.msra.mxu0 0.0
    %3456 = vmatprep.subr.mxu0 0.0
    %3457 = vmatpush1.msra.mxu0 0.0
    %3458 = vmatprep.subr.mxu0 0.0
    %3459 = vmatpush1.msra.mxu0 0.0
    %3460 = vmatprep.subr.mxu0 0.0
    %3461 = vmatpush1.msra.mxu0 0.0
    %3462 = vmatprep.subr.mxu0 0.0
    %3463 = vmatpush1.msra.mxu0 0.0
    %3464 = vmatprep.subr.mxu0 0.0
    %3465 = vmatpush1.msra.mxu0 0.0
    %3466 = vmatprep.subr.mxu0 0.0
    %3467 = vmatpush1.msra.mxu0 0.0
    %3468 = vmatprep.subr.mxu0 0.0
    %3469 = vmatpush1.msra.mxu0 0.0
    %3470 = vmatprep.subr.mxu0 0.0
    %3471 = vmatpush1.msra.mxu0 0.0
    %3472 = vmatprep.subr.mxu0 0.0
    %3473 = vmatpush1.msra.mxu0 0.0
    %3474 = vmatprep.subr.mxu0 0.0
    %3475 = vmatpush1.msra.mxu0 0.0
    %3476 = vmatprep.subr.mxu0 0.0
    %3477 = vmatpush1.msra.mxu0 0.0
    %3478 = vmatprep.subr.mxu0 0.0
    %3479 = vmatpush1.msra.mxu0 0.0
    %3480 = vmatprep.subr.mxu0 0.0
    %3481 = vmatpush1.msra.mxu0 0.0
    %3482 = vmatprep.mubr.f32.mxu0 0.0
    %3483 = vmatmul.mubr.f32.gmra.mrb[0].mxu0 %v3232
    %v3484 = vpop.f32.mrb[0].mxu0
    %v3485 = vadd.f32 %v3410, %v3484
    %v3486 = vpop.f32.mrb[0].mxu0
    %3487 = vmatprep.mubr.f32.mxu0 0.0
    %3488 = vmatmul.mubr.f32.gmra.mrb[0].mxu0 %v3252
    %v3489 = vpop.f32.mrb[0].mxu0
    %v3490 = vadd.f32 %v3415, %v3489
    %v3491 = vpop.f32.mrb[0].mxu0
    %3492 = vdwg.mxu0
    %vm3493 = vcmp.ge.s32.totalorder %v791, 0
    %vm3494 = vcmp.lt.s32.totalorder %v791, 8
    %vm3495 = vmand %vm3493, %vm3494
    %v3496 = vsel %vm3495, 1, 0
    %v3497 = vcvt.s32.f32 %v3496
    %v3498 = vmul.f32 %v3485, %v3497
    %v3499 = vmul.f32 %v3490, %v3497
    %v3500 = vadd.f32 %v3498, 0.0
    %v3501 = vadd.f32 %v3499, 0.0
    %3502 = vmatprep.subr.mxu0 0.0
    %3503 = vmatpush1.msra.mxu0 %v616
    %3504 = vmatprep.subr.mxu0 0.0
    %3505 = vmatpush1.msra.mxu0 %v617
    %3506 = vmatprep.subr.mxu0 0.0
    %3507 = vmatpush1.msra.mxu0 %v618
    %3508 = vmatprep.subr.mxu0 0.0
    %3509 = vmatpush1.msra.mxu0 %v619
    %3510 = vmatprep.subr.mxu0 0.0
    %3511 = vmatpush1.msra.mxu0 %v620
    %3512 = vmatprep.subr.mxu0 0.0
    %3513 = vmatpush1.msra.mxu0 %v621
    %3514 = vmatprep.subr.mxu0 0.0
    %3515 = vmatpush1.msra.mxu0 %v622
    %3516 = vmatprep.subr.mxu0 0.0
    %3517 = vmatpush1.msra.mxu0 %v623
    %3518 = vmatprep.subr.mxu0 0.0
    %3519 = vmatpush1.msra.mxu0 %v624
    %3520 = vmatprep.subr.mxu0 0.0
    %3521 = vmatpush1.msra.mxu0 %v625
    %3522 = vmatprep.subr.mxu0 0.0
    %3523 = vmatpush1.msra.mxu0 %v626
    %3524 = vmatprep.subr.mxu0 0.0
    %3525 = vmatpush1.msra.mxu0 %v627
    %3526 = vmatprep.subr.mxu0 0.0
    %3527 = vmatpush1.msra.mxu0 %v628
    %3528 = vmatprep.subr.mxu0 0.0
    %3529 = vmatpush1.msra.mxu0 %v629
    %3530 = vmatprep.subr.mxu0 0.0
    %3531 = vmatpush1.msra.mxu0 %v630
    %3532 = vmatprep.subr.mxu0 0.0
    %3533 = vmatpush1.msra.mxu0 %v631
    %3534 = vmatprep.subr.mxu0 0.0
    %3535 = vmatpush1.msra.mxu0 %v632
    %3536 = vmatprep.subr.mxu0 0.0
    %3537 = vmatpush1.msra.mxu0 %v633
    %3538 = vmatprep.subr.mxu0 0.0
    %3539 = vmatpush1.msra.mxu0 %v634
    %3540 = vmatprep.subr.mxu0 0.0
    %3541 = vmatpush1.msra.mxu0 %v635
    %3542 = vmatprep.subr.mxu0 0.0
    %3543 = vmatpush1.msra.mxu0 %v616
    %3544 = vmatprep.subr.mxu0 0.0
    %3545 = vmatpush1.msra.mxu0 %v617
    %3546 = vmatprep.subr.mxu0 0.0
    %3547 = vmatpush1.msra.mxu0 %v618
    %3548 = vmatprep.subr.mxu0 0.0
    %3549 = vmatpush1.msra.mxu0 %v619
    %3550 = vmatprep.subr.mxu0 0.0
    %3551 = vmatpush1.msra.mxu0 %v620
    %3552 = vmatprep.subr.mxu0 0.0
    %3553 = vmatpush1.msra.mxu0 %v621
    %3554 = vmatprep.subr.mxu0 0.0
    %3555 = vmatpush1.msra.mxu0 %v622
    %3556 = vmatprep.subr.mxu0 0.0
    %3557 = vmatpush1.msra.mxu0 %v623
    %3558 = vmatprep.subr.mxu0 0.0
    %3559 = vmatpush1.msra.mxu0 %v624
    %3560 = vmatprep.subr.mxu0 0.0
    %3561 = vmatpush1.msra.mxu0 %v625
    %3562 = vmatprep.subr.mxu0 0.0
    %3563 = vmatpush1.msra.mxu0 %v626
    %3564 = vmatprep.subr.mxu0 0.0
    %3565 = vmatpush1.msra.mxu0 %v627
    %3566 = vmatprep.mubr.f32.mxu0 %v3234
    %3567 = vmatmul.mubr.f32.gmra.mrb[0].mxu0 %v3233
    %v3568 = vpop.f32.mrb[0].mxu0
    %v3569 = vadd.f32 0.0, %v3568
    %v3570 = vpop.f32.mrb[0].mxu0
    %3571 = vmatprep.mubr.f32.mxu0 %v3254
    %3572 = vmatmul.mubr.f32.gmra.mrb[0].mxu0 %v3253
    %v3573 = vpop.f32.mrb[0].mxu0
    %v3574 = vadd.f32 0.0, %v3573
    %v3575 = vpop.f32.mrb[0].mxu0
    %3576 = vdwg.mxu0
    %3577 = vmatprep.subr.mxu0 0.0
    %3578 = vmatpush1.msra.mxu0 %v628
    %3579 = vmatprep.subr.mxu0 0.0
    %3580 = vmatpush1.msra.mxu0 %v629
    %3581 = vmatprep.subr.mxu0 0.0
    %3582 = vmatpush1.msra.mxu0 %v630
    %3583 = vmatprep.subr.mxu0 0.0
    %3584 = vmatpush1.msra.mxu0 %v631
    %3585 = vmatprep.subr.mxu0 0.0
    %3586 = vmatpush1.msra.mxu0 %v632
    %3587 = vmatprep.subr.mxu0 0.0
    %3588 = vmatpush1.msra.mxu0 %v633
    %3589 = vmatprep.subr.mxu0 0.0
    %3590 = vmatpush1.msra.mxu0 %v634
    %3591 = vmatprep.subr.mxu0 0.0
    %3592 = vmatpush1.msra.mxu0 %v635
    %3593 = vmatprep.subr.mxu0 0.0
    %3594 = vmatpush1.msra.mxu0 %v616
    %3595 = vmatprep.subr.mxu0 0.0
    %3596 = vmatpush1.msra.mxu0 %v617
    %3597 = vmatprep.subr.mxu0 0.0
    %3598 = vmatpush1.msra.mxu0 %v618
    %3599 = vmatprep.subr.mxu0 0.0
    %3600 = vmatpush1.msra.mxu0 %v619
    %3601 = vmatprep.subr.mxu0 0.0
    %3602 = vmatpush1.msra.mxu0 %v620
    %3603 = vmatprep.subr.mxu0 0.0
    %3604 = vmatpush1.msra.mxu0 %v621
    %3605 = vmatprep.subr.mxu0 0.0
    %3606 = vmatpush1.msra.mxu0 %v622
    %3607 = vmatprep.subr.mxu0 0.0
    %3608 = vmatpush1.msra.mxu0 %v623
    %3609 = vmatprep.subr.mxu0 0.0
    %3610 = vmatpush1.msra.mxu0 %v624
    %3611 = vmatprep.subr.mxu0 0.0
    %3612 = vmatpush1.msra.mxu0 %v625
    %3613 = vmatprep.subr.mxu0 0.0
    %3614 = vmatpush1.msra.mxu0 %v626
    %3615 = vmatprep.subr.mxu0 0.0
    %3616 = vmatpush1.msra.mxu0 %v627
    %3617 = vmatprep.subr.mxu0 0.0
    %3618 = vmatpush1.msra.mxu0 %v628
    %3619 = vmatprep.subr.mxu0 0.0
    %3620 = vmatpush1.msra.mxu0 %v629
    %3621 = vmatprep.subr.mxu0 0.0
    %3622 = vmatpush1.msra.mxu0 %v630
    %3623 = vmatprep.subr.mxu0 0.0
    %3624 = vmatpush1.msra.mxu0 %v631
    %3625 = vmatprep.subr.mxu0 0.0
    %3626 = vmatpush1.msra.mxu0 %v632
    %3627 = vmatprep.subr.mxu0 0.0
    %3628 = vmatpush1.msra.mxu0 %v633
    %3629 = vmatprep.subr.mxu0 0.0
    %3630 = vmatpush1.msra.mxu0 %v634
    %3631 = vmatprep.subr.mxu0 0.0
    %3632 = vmatpush1.msra.mxu0 %v635
    %3633 = vmatprep.subr.mxu0 0.0
    %3634 = vmatpush1.msra.mxu0 %v616
    %3635 = vmatprep.subr.mxu0 0.0
    %3636 = vmatpush1.msra.mxu0 %v617
    %3637 = vmatprep.subr.mxu0 0.0
    %3638 = vmatpush1.msra.mxu0 %v618
    %3639 = vmatprep.subr.mxu0 0.0
    %3640 = vmatpush1.msra.mxu0 %v619
    %3641 = vmatprep.mubr.f32.mxu0 %v3236
    %3642 = vmatmul.mubr.f32.gmra.mrb[0].mxu0 %v3235
    %v3643 = vpop.f32.mrb[0].mxu0
    %v3644 = vadd.f32 %v3569, %v3643
    %v3645 = vpop.f32.mrb[0].mxu0
    %3646 = vmatprep.mubr.f32.mxu0 %v3256
    %3647 = vmatmul.mubr.f32.gmra.mrb[0].mxu0 %v3255
    %v3648 = vpop.f32.mrb[0].mxu0
    %v3649 = vadd.f32 %v3574, %v3648
    %v3650 = vpop.f32.mrb[0].mxu0
    %3651 = vdwg.mxu0
    %3652 = vmatprep.subr.mxu0 0.0
    %3653 = vmatpush1.msra.mxu0 %v620
    %3654 = vmatprep.subr.mxu0 0.0
    %3655 = vmatpush1.msra.mxu0 %v621
    %3656 = vmatprep.subr.mxu0 0.0
    %3657 = vmatpush1.msra.mxu0 %v622
    %3658 = vmatprep.subr.mxu0 0.0
    %3659 = vmatpush1.msra.mxu0 %v623
    %3660 = vmatprep.subr.mxu0 0.0
    %3661 = vmatpush1.msra.mxu0 %v624
    %3662 = vmatprep.subr.mxu0 0.0
    %3663 = vmatpush1.msra.mxu0 %v625
    %3664 = vmatprep.subr.mxu0 0.0
    %3665 = vmatpush1.msra.mxu0 %v626
    %3666 = vmatprep.subr.mxu0 0.0
    %3667 = vmatpush1.msra.mxu0 %v627
    %3668 = vmatprep.subr.mxu0 0.0
    %3669 = vmatpush1.msra.mxu0 %v628
    %3670 = vmatprep.subr.mxu0 0.0
    %3671 = vmatpush1.msra.mxu0 %v629
    %3672 = vmatprep.subr.mxu0 0.0
    %3673 = vmatpush1.msra.mxu0 %v630
    %3674 = vmatprep.subr.mxu0 0.0
    %3675 = vmatpush1.msra.mxu0 %v631
    %3676 = vmatprep.subr.mxu0 0.0
    %3677 = vmatpush1.msra.mxu0 %v632
    %3678 = vmatprep.subr.mxu0 0.0
    %3679 = vmatpush1.msra.mxu0 %v633
    %3680 = vmatprep.subr.mxu0 0.0
    %3681 = vmatpush1.msra.mxu0 %v634
    %3682 = vmatprep.subr.mxu0 0.0
    %3683 = vmatpush1.msra.mxu0 %v635
    %3684 = vmatprep.subr.mxu0 0.0
    %3685 = vmatpush1.msra.mxu0 0.0
    %3686 = vmatprep.subr.mxu0 0.0
    %3687 = vmatpush1.msra.mxu0 0.0
    %3688 = vmatprep.subr.mxu0 0.0
    %3689 = vmatpush1.msra.mxu0 0.0
    %3690 = vmatprep.subr.mxu0 0.0
    %3691 = vmatpush1.msra.mxu0 0.0
    %3692 = vmatprep.subr.mxu0 0.0
    %3693 = vmatpush1.msra.mxu0 0.0
    %3694 = vmatprep.subr.mxu0 0.0
    %3695 = vmatpush1.msra.mxu0 0.0
    %3696 = vmatprep.subr.mxu0 0.0
    %3697 = vmatpush1.msra.mxu0 0.0
    %3698 = vmatprep.subr.mxu0 0.0
    %3699 = vmatpush1.msra.mxu0 0.0
    %3700 = vmatprep.subr.mxu0 0.0
    %3701 = vmatpush1.msra.mxu0 0.0
    %3702 = vmatprep.subr.mxu0 0.0
    %3703 = vmatpush1.msra.mxu0 0.0
    %3704 = vmatprep.subr.mxu0 0.0
    %3705 = vmatpush1.msra.mxu0 0.0
    %3706 = vmatprep.subr.mxu0 0.0
    %3707 = vmatpush1.msra.mxu0 0.0
    %3708 = vmatprep.subr.mxu0 0.0
    %3709 = vmatpush1.msra.mxu0 0.0
    %3710 = vmatprep.subr.mxu0 0.0
    %3711 = vmatpush1.msra.mxu0 0.0
    %3712 = vmatprep.subr.mxu0 0.0
    %3713 = vmatpush1.msra.mxu0 0.0
    %3714 = vmatprep.subr.mxu0 0.0
    %3715 = vmatpush1.msra.mxu0 0.0
    %3716 = vmatprep.mubr.f32.mxu0 0.0
    %3717 = vmatmul.mubr.f32.gmra.mrb[0].mxu0 %v3237
    %v3718 = vpop.f32.mrb[0].mxu0
    %v3719 = vadd.f32 %v3644, %v3718
    %v3720 = vpop.f32.mrb[0].mxu0
    %3721 = vmatprep.mubr.f32.mxu0 0.0
    %3722 = vmatmul.mubr.f32.gmra.mrb[0].mxu0 %v3257
    %v3723 = vpop.f32.mrb[0].mxu0
    %v3724 = vadd.f32 %v3649, %v3723
    %v3725 = vpop.f32.mrb[0].mxu0
    %3726 = vdwg.mxu0
    %vm3727 = vcmp.ge.s32.totalorder %v791, 8
    %vm3728 = vcmp.lt.s32.totalorder %v791, 16
    %vm3729 = vmand %vm3727, %vm3728
    %v3730 = vsel %vm3729, 1, 0
    %v3731 = vcvt.s32.f32 %v3730
    %v3732 = vmul.f32 %v3719, %v3731
    %v3733 = vmul.f32 %v3724, %v3731
    %v3734 = vadd.f32 %v3500, %v3732
    %v3735 = vadd.f32 %v3501, %v3733
    %3736 = vmatprep.subr.mxu0 0.0
    %3737 = vmatpush1.msra.mxu0 %v616
    %3738 = vmatprep.subr.mxu0 0.0
    %3739 = vmatpush1.msra.mxu0 %v617
    %3740 = vmatprep.subr.mxu0 0.0
    %3741 = vmatpush1.msra.mxu0 %v618
    %3742 = vmatprep.subr.mxu0 0.0
    %3743 = vmatpush1.msra.mxu0 %v619
    %3744 = vmatprep.subr.mxu0 0.0
    %3745 = vmatpush1.msra.mxu0 %v620
    %3746 = vmatprep.subr.mxu0 0.0
    %3747 = vmatpush1.msra.mxu0 %v621
    %3748 = vmatprep.subr.mxu0 0.0
    %3749 = vmatpush1.msra.mxu0 %v622
    %3750 = vmatprep.subr.mxu0 0.0
    %3751 = vmatpush1.msra.mxu0 %v623
    %3752 = vmatprep.subr.mxu0 0.0
    %3753 = vmatpush1.msra.mxu0 %v624
    %3754 = vmatprep.subr.mxu0 0.0
    %3755 = vmatpush1.msra.mxu0 %v625
    %3756 = vmatprep.subr.mxu0 0.0
    %3757 = vmatpush1.msra.mxu0 %v626
    %3758 = vmatprep.subr.mxu0 0.0
    %3759 = vmatpush1.msra.mxu0 %v627
    %3760 = vmatprep.subr.mxu0 0.0
    %3761 = vmatpush1.msra.mxu0 %v628
    %3762 = vmatprep.subr.mxu0 0.0
    %3763 = vmatpush1.msra.mxu0 %v629
    %3764 = vmatprep.subr.mxu0 0.0
    %3765 = vmatpush1.msra.mxu0 %v630
    %3766 = vmatprep.subr.mxu0 0.0
    %3767 = vmatpush1.msra.mxu0 %v631
    %3768 = vmatprep.subr.mxu0 0.0
    %3769 = vmatpush1.msra.mxu0 %v632
    %3770 = vmatprep.subr.mxu0 0.0
    %3771 = vmatpush1.msra.mxu0 %v633
    %3772 = vmatprep.subr.mxu0 0.0
    %3773 = vmatpush1.msra.mxu0 %v634
    %3774 = vmatprep.subr.mxu0 0.0
    %3775 = vmatpush1.msra.mxu0 %v635
    %3776 = vmatprep.subr.mxu0 0.0
    %3777 = vmatpush1.msra.mxu0 %v616
    %3778 = vmatprep.subr.mxu0 0.0
    %3779 = vmatpush1.msra.mxu0 %v617
    %3780 = vmatprep.subr.mxu0 0.0
    %3781 = vmatpush1.msra.mxu0 %v618
    %3782 = vmatprep.subr.mxu0 0.0
    %3783 = vmatpush1.msra.mxu0 %v619
    %3784 = vmatprep.subr.mxu0 0.0
    %3785 = vmatpush1.msra.mxu0 %v620
    %3786 = vmatprep.subr.mxu0 0.0
    %3787 = vmatpush1.msra.mxu0 %v621
    %3788 = vmatprep.subr.mxu0 0.0
    %3789 = vmatpush1.msra.mxu0 %v622
    %3790 = vmatprep.subr.mxu0 0.0
    %3791 = vmatpush1.msra.mxu0 %v623
    %3792 = vmatprep.subr.mxu0 0.0
    %3793 = vmatpush1.msra.mxu0 %v624
    %3794 = vmatprep.subr.mxu0 0.0
    %3795 = vmatpush1.msra.mxu0 %v625
    %3796 = vmatprep.subr.mxu0 0.0
    %3797 = vmatpush1.msra.mxu0 %v626
    %3798 = vmatprep.subr.mxu0 0.0
    %3799 = vmatpush1.msra.mxu0 %v627
    %3800 = vmatprep.mubr.f32.mxu0 %v3239
    %3801 = vmatmul.mubr.f32.gmra.mrb[0].mxu0 %v3238
    %v3802 = vpop.f32.mrb[0].mxu0
    %v3803 = vadd.f32 0.0, %v3802
    %v3804 = vpop.f32.mrb[0].mxu0
    %3805 = vmatprep.mubr.f32.mxu0 %v3259
    %3806 = vmatmul.mubr.f32.gmra.mrb[0].mxu0 %v3258
    %v3807 = vpop.f32.mrb[0].mxu0
    %v3808 = vadd.f32 0.0, %v3807
    %v3809 = vpop.f32.mrb[0].mxu0
    %3810 = vdwg.mxu0
    %3811 = vmatprep.subr.mxu0 0.0
    %3812 = vmatpush1.msra.mxu0 %v628
    %3813 = vmatprep.subr.mxu0 0.0
    %3814 = vmatpush1.msra.mxu0 %v629
    %3815 = vmatprep.subr.mxu0 0.0
    %3816 = vmatpush1.msra.mxu0 %v630
    %3817 = vmatprep.subr.mxu0 0.0
    %3818 = vmatpush1.msra.mxu0 %v631
    %3819 = vmatprep.subr.mxu0 0.0
    %3820 = vmatpush1.msra.mxu0 %v632
    %3821 = vmatprep.subr.mxu0 0.0
    %3822 = vmatpush1.msra.mxu0 %v633
    %3823 = vmatprep.subr.mxu0 0.0
    %3824 = vmatpush1.msra.mxu0 %v634
    %3825 = vmatprep.subr.mxu0 0.0
    %3826 = vmatpush1.msra.mxu0 %v635
    %3827 = vmatprep.subr.mxu0 0.0
    %3828 = vmatpush1.msra.mxu0 %v616
    %3829 = vmatprep.subr.mxu0 0.0
    %3830 = vmatpush1.msra.mxu0 %v617
    %3831 = vmatprep.subr.mxu0 0.0
    %3832 = vmatpush1.msra.mxu0 %v618
    %3833 = vmatprep.subr.mxu0 0.0
    %3834 = vmatpush1.msra.mxu0 %v619
    %3835 = vmatprep.subr.mxu0 0.0
    %3836 = vmatpush1.msra.mxu0 %v620
    %3837 = vmatprep.subr.mxu0 0.0
    %3838 = vmatpush1.msra.mxu0 %v621
    %3839 = vmatprep.subr.mxu0 0.0
    %3840 = vmatpush1.msra.mxu0 %v622
    %3841 = vmatprep.subr.mxu0 0.0
    %3842 = vmatpush1.msra.mxu0 %v623
    %3843 = vmatprep.subr.mxu0 0.0
    %3844 = vmatpush1.msra.mxu0 %v624
    %3845 = vmatprep.subr.mxu0 0.0
    %3846 = vmatpush1.msra.mxu0 %v625
    %3847 = vmatprep.subr.mxu0 0.0
    %3848 = vmatpush1.msra.mxu0 %v626
    %3849 = vmatprep.subr.mxu0 0.0
    %3850 = vmatpush1.msra.mxu0 %v627
    %3851 = vmatprep.subr.mxu0 0.0
    %3852 = vmatpush1.msra.mxu0 %v628
    %3853 = vmatprep.subr.mxu0 0.0
    %3854 = vmatpush1.msra.mxu0 %v629
    %3855 = vmatprep.subr.mxu0 0.0
    %3856 = vmatpush1.msra.mxu0 %v630
    %3857 = vmatprep.subr.mxu0 0.0
    %3858 = vmatpush1.msra.mxu0 %v631
    %3859 = vmatprep.subr.mxu0 0.0
    %3860 = vmatpush1.msra.mxu0 %v632
    %3861 = vmatprep.subr.mxu0 0.0
    %3862 = vmatpush1.msra.mxu0 %v633
    %3863 = vmatprep.subr.mxu0 0.0
    %3864 = vmatpush1.msra.mxu0 %v634
    %3865 = vmatprep.subr.mxu0 0.0
    %3866 = vmatpush1.msra.mxu0 %v635
    %3867 = vmatprep.subr.mxu0 0.0
    %3868 = vmatpush1.msra.mxu0 %v616
    %3869 = vmatprep.subr.mxu0 0.0
    %3870 = vmatpush1.msra.mxu0 %v617
    %3871 = vmatprep.subr.mxu0 0.0
    %3872 = vmatpush1.msra.mxu0 %v618
    %3873 = vmatprep.subr.mxu0 0.0
    %3874 = vmatpush1.msra.mxu0 %v619
    %3875 = vmatprep.mubr.f32.mxu0 %v3241
    %3876 = vmatmul.mubr.f32.gmra.mrb[0].mxu0 %v3240
    %v3877 = vpop.f32.mrb[0].mxu0
    %v3878 = vadd.f32 %v3803, %v3877
    %v3879 = vpop.f32.mrb[0].mxu0
    %3880 = vmatprep.mubr.f32.mxu0 %v3261
    %3881 = vmatmul.mubr.f32.gmra.mrb[0].mxu0 %v3260
    %v3882 = vpop.f32.mrb[0].mxu0
    %v3883 = vadd.f32 %v3808, %v3882
    %v3884 = vpop.f32.mrb[0].mxu0
    %3885 = vdwg.mxu0
    %3886 = vmatprep.subr.mxu0 0.0
    %3887 = vmatpush1.msra.mxu0 %v620
    %3888 = vmatprep.subr.mxu0 0.0
    %3889 = vmatpush1.msra.mxu0 %v621
    %3890 = vmatprep.subr.mxu0 0.0
    %3891 = vmatpush1.msra.mxu0 %v622
    %3892 = vmatprep.subr.mxu0 0.0
    %3893 = vmatpush1.msra.mxu0 %v623
    %3894 = vmatprep.subr.mxu0 0.0
    %3895 = vmatpush1.msra.mxu0 %v624
    %3896 = vmatprep.subr.mxu0 0.0
    %3897 = vmatpush1.msra.mxu0 %v625
    %3898 = vmatprep.subr.mxu0 0.0
    %3899 = vmatpush1.msra.mxu0 %v626
    %3900 = vmatprep.subr.mxu0 0.0
    %3901 = vmatpush1.msra.mxu0 %v627
    %3902 = vmatprep.subr.mxu0 0.0
    %3903 = vmatpush1.msra.mxu0 %v628
    %3904 = vmatprep.subr.mxu0 0.0
    %3905 = vmatpush1.msra.mxu0 %v629
    %3906 = vmatprep.subr.mxu0 0.0
    %3907 = vmatpush1.msra.mxu0 %v630
    %3908 = vmatprep.subr.mxu0 0.0
    %3909 = vmatpush1.msra.mxu0 %v631
    %3910 = vmatprep.subr.mxu0 0.0
    %3911 = vmatpush1.msra.mxu0 %v632
    %3912 = vmatprep.subr.mxu0 0.0
    %3913 = vmatpush1.msra.mxu0 %v633
    %3914 = vmatprep.subr.mxu0 0.0
    %3915 = vmatpush1.msra.mxu0 %v634
    %3916 = vmatprep.subr.mxu0 0.0
    %3917 = vmatpush1.msra.mxu0 %v635
    %3918 = vmatprep.subr.mxu0 0.0
    %3919 = vmatpush1.msra.mxu0 0.0
    %3920 = vmatprep.subr.mxu0 0.0
    %3921 = vmatpush1.msra.mxu0 0.0
    %3922 = vmatprep.subr.mxu0 0.0
    %3923 = vmatpush1.msra.mxu0 0.0
    %3924 = vmatprep.subr.mxu0 0.0
    %3925 = vmatpush1.msra.mxu0 0.0
    %3926 = vmatprep.subr.mxu0 0.0
    %3927 = vmatpush1.msra.mxu0 0.0
    %3928 = vmatprep.subr.mxu0 0.0
    %3929 = vmatpush1.msra.mxu0 0.0
    %3930 = vmatprep.subr.mxu0 0.0
    %3931 = vmatpush1.msra.mxu0 0.0
    %3932 = vmatprep.subr.mxu0 0.0
    %3933 = vmatpush1.msra.mxu0 0.0
    %3934 = vmatprep.subr.mxu0 0.0
    %3935 = vmatpush1.msra.mxu0 0.0
    %3936 = vmatprep.subr.mxu0 0.0
    %3937 = vmatpush1.msra.mxu0 0.0
    %3938 = vmatprep.subr.mxu0 0.0
    %3939 = vmatpush1.msra.mxu0 0.0
    %3940 = vmatprep.subr.mxu0 0.0
    %3941 = vmatpush1.msra.mxu0 0.0
    %3942 = vmatprep.subr.mxu0 0.0
    %3943 = vmatpush1.msra.mxu0 0.0
    %3944 = vmatprep.subr.mxu0 0.0
    %3945 = vmatpush1.msra.mxu0 0.0
    %3946 = vmatprep.subr.mxu0 0.0
    %3947 = vmatpush1.msra.mxu0 0.0
    %3948 = vmatprep.subr.mxu0 0.0
    %3949 = vmatpush1.msra.mxu0 0.0
    %3950 = vmatprep.mubr.f32.mxu0 0.0
    %3951 = vmatmul.mubr.f32.gmra.mrb[0].mxu0 %v3242
    %v3952 = vpop.f32.mrb[0].mxu0
    %v3953 = vadd.f32 %v3878, %v3952
    %v3954 = vpop.f32.mrb[0].mxu0
    %3955 = vmatprep.mubr.f32.mxu0 0.0
    %3956 = vmatmul.mubr.f32.gmra.mrb[0].mxu0 %v3262
    %v3957 = vpop.f32.mrb[0].mxu0
    %v3958 = vadd.f32 %v3883, %v3957
    %v3959 = vpop.f32.mrb[0].mxu0
    %3960 = vdwg.mxu0
    %vm3961 = vcmp.ge.s32.totalorder %v791, 16
    %vm3962 = vcmp.lt.s32.totalorder %v791, 24
    %vm3963 = vmand %vm3961, %vm3962
    %v3964 = vsel %vm3963, 1, 0
    %v3965 = vcvt.s32.f32 %v3964
    %v3966 = vmul.f32 %v3953, %v3965
    %v3967 = vmul.f32 %v3958, %v3965
    %v3968 = vadd.f32 %v3734, %v3966
    %v3969 = vadd.f32 %v3735, %v3967
    %3970 = vmatprep.subr.mxu0 0.0
    %3971 = vmatpush1.msra.mxu0 %v616
    %3972 = vmatprep.subr.mxu0 0.0
    %3973 = vmatpush1.msra.mxu0 %v617
    %3974 = vmatprep.subr.mxu0 0.0
    %3975 = vmatpush1.msra.mxu0 %v618
    %3976 = vmatprep.subr.mxu0 0.0
    %3977 = vmatpush1.msra.mxu0 %v619
    %3978 = vmatprep.subr.mxu0 0.0
    %3979 = vmatpush1.msra.mxu0 %v620
    %3980 = vmatprep.subr.mxu0 0.0
    %3981 = vmatpush1.msra.mxu0 %v621
    %3982 = vmatprep.subr.mxu0 0.0
    %3983 = vmatpush1.msra.mxu0 %v622
    %3984 = vmatprep.subr.mxu0 0.0
    %3985 = vmatpush1.msra.mxu0 %v623
    %3986 = vmatprep.subr.mxu0 0.0
    %3987 = vmatpush1.msra.mxu0 %v624
    %3988 = vmatprep.subr.mxu0 0.0
    %3989 = vmatpush1.msra.mxu0 %v625
    %3990 = vmatprep.subr.mxu0 0.0
    %3991 = vmatpush1.msra.mxu0 %v626
    %3992 = vmatprep.subr.mxu0 0.0
    %3993 = vmatpush1.msra.mxu0 %v627
    %3994 = vmatprep.subr.mxu0 0.0
    %3995 = vmatpush1.msra.mxu0 %v628
    %3996 = vmatprep.subr.mxu0 0.0
    %3997 = vmatpush1.msra.mxu0 %v629
    %3998 = vmatprep.subr.mxu0 0.0
    %3999 = vmatpush1.msra.mxu0 %v630
    %4000 = vmatprep.subr.mxu0 0.0
    %4001 = vmatpush1.msra.mxu0 %v631
    %4002 = vmatprep.subr.mxu0 0.0
    %4003 = vmatpush1.msra.mxu0 %v632
    %4004 = vmatprep.subr.mxu0 0.0
    %4005 = vmatpush1.msra.mxu0 %v633
    %4006 = vmatprep.subr.mxu0 0.0
    %4007 = vmatpush1.msra.mxu0 %v634
    %4008 = vmatprep.subr.mxu0 0.0
    %4009 = vmatpush1.msra.mxu0 %v635
    %4010 = vmatprep.subr.mxu0 0.0
    %4011 = vmatpush1.msra.mxu0 %v616
    %4012 = vmatprep.subr.mxu0 0.0
    %4013 = vmatpush1.msra.mxu0 %v617
    %4014 = vmatprep.subr.mxu0 0.0
    %4015 = vmatpush1.msra.mxu0 %v618
    %4016 = vmatprep.subr.mxu0 0.0
    %4017 = vmatpush1.msra.mxu0 %v619
    %4018 = vmatprep.subr.mxu0 0.0
    %4019 = vmatpush1.msra.mxu0 %v620
    %4020 = vmatprep.subr.mxu0 0.0
    %4021 = vmatpush1.msra.mxu0 %v621
    %4022 = vmatprep.subr.mxu0 0.0
    %4023 = vmatpush1.msra.mxu0 %v622
    %4024 = vmatprep.subr.mxu0 0.0
    %4025 = vmatpush1.msra.mxu0 %v623
    %4026 = vmatprep.subr.mxu0 0.0
    %4027 = vmatpush1.msra.mxu0 %v624
    %4028 = vmatprep.subr.mxu0 0.0
    %4029 = vmatpush1.msra.mxu0 %v625
    %4030 = vmatprep.subr.mxu0 0.0
    %4031 = vmatpush1.msra.mxu0 %v626
    %4032 = vmatprep.subr.mxu0 0.0
    %4033 = vmatpush1.msra.mxu0 %v627
    %4034 = vmatprep.mubr.f32.mxu0 %v3244
    %4035 = vmatmul.mubr.f32.gmra.mrb[0].mxu0 %v3243
    %v4036 = vpop.f32.mrb[0].mxu0
    %v4037 = vadd.f32 0.0, %v4036
    %v4038 = vpop.f32.mrb[0].mxu0
    %4039 = vmatprep.mubr.f32.mxu0 %v3264
    %4040 = vmatmul.mubr.f32.gmra.mrb[0].mxu0 %v3263
    %v4041 = vpop.f32.mrb[0].mxu0
    %v4042 = vadd.f32 0.0, %v4041
    %v4043 = vpop.f32.mrb[0].mxu0
    %4044 = vdwg.mxu0
    %4045 = vmatprep.subr.mxu0 0.0
    %4046 = vmatpush1.msra.mxu0 %v628
    %4047 = vmatprep.subr.mxu0 0.0
    %4048 = vmatpush1.msra.mxu0 %v629
    %4049 = vmatprep.subr.mxu0 0.0
    %4050 = vmatpush1.msra.mxu0 %v630
    %4051 = vmatprep.subr.mxu0 0.0
    %4052 = vmatpush1.msra.mxu0 %v631
    %4053 = vmatprep.subr.mxu0 0.0
    %4054 = vmatpush1.msra.mxu0 %v632
    %4055 = vmatprep.subr.mxu0 0.0
    %4056 = vmatpush1.msra.mxu0 %v633
    %4057 = vmatprep.subr.mxu0 0.0
    %4058 = vmatpush1.msra.mxu0 %v634
    %4059 = vmatprep.subr.mxu0 0.0
    %4060 = vmatpush1.msra.mxu0 %v635
    %4061 = vmatprep.subr.mxu0 0.0
    %4062 = vmatpush1.msra.mxu0 %v616
    %4063 = vmatprep.subr.mxu0 0.0
    %4064 = vmatpush1.msra.mxu0 %v617
    %4065 = vmatprep.subr.mxu0 0.0
    %4066 = vmatpush1.msra.mxu0 %v618
    %4067 = vmatprep.subr.mxu0 0.0
    %4068 = vmatpush1.msra.mxu0 %v619
    %4069 = vmatprep.subr.mxu0 0.0
    %4070 = vmatpush1.msra.mxu0 %v620
    %4071 = vmatprep.subr.mxu0 0.0
    %4072 = vmatpush1.msra.mxu0 %v621
    %4073 = vmatprep.subr.mxu0 0.0
    %4074 = vmatpush1.msra.mxu0 %v622
    %4075 = vmatprep.subr.mxu0 0.0
    %4076 = vmatpush1.msra.mxu0 %v623
    %4077 = vmatprep.subr.mxu0 0.0
    %4078 = vmatpush1.msra.mxu0 %v624
    %4079 = vmatprep.subr.mxu0 0.0
    %4080 = vmatpush1.msra.mxu0 %v625
    %4081 = vmatprep.subr.mxu0 0.0
    %4082 = vmatpush1.msra.mxu0 %v626
    %4083 = vmatprep.subr.mxu0 0.0
    %4084 = vmatpush1.msra.mxu0 %v627
    %4085 = vmatprep.subr.mxu0 0.0
    %4086 = vmatpush1.msra.mxu0 %v628
    %4087 = vmatprep.subr.mxu0 0.0
    %4088 = vmatpush1.msra.mxu0 %v629
    %4089 = vmatprep.subr.mxu0 0.0
    %4090 = vmatpush1.msra.mxu0 %v630
    %4091 = vmatprep.subr.mxu0 0.0
    %4092 = vmatpush1.msra.mxu0 %v631
    %4093 = vmatprep.subr.mxu0 0.0
    %4094 = vmatpush1.msra.mxu0 %v632
    %4095 = vmatprep.subr.mxu0 0.0
    %4096 = vmatpush1.msra.mxu0 %v633
    %4097 = vmatprep.subr.mxu0 0.0
    %4098 = vmatpush1.msra.mxu0 %v634
    %4099 = vmatprep.subr.mxu0 0.0
    %4100 = vmatpush1.msra.mxu0 %v635
    %4101 = vmatprep.subr.mxu0 0.0
    %4102 = vmatpush1.msra.mxu0 %v616
    %4103 = vmatprep.subr.mxu0 0.0
    %4104 = vmatpush1.msra.mxu0 %v617
    %4105 = vmatprep.subr.mxu0 0.0
    %4106 = vmatpush1.msra.mxu0 %v618
    %4107 = vmatprep.subr.mxu0 0.0
    %4108 = vmatpush1.msra.mxu0 %v619
    %4109 = vmatprep.mubr.f32.mxu0 %v3246
    %4110 = vmatmul.mubr.f32.gmra.mrb[0].mxu0 %v3245
    %v4111 = vpop.f32.mrb[0].mxu0
    %v4112 = vadd.f32 %v4037, %v4111
    %v4113 = vpop.f32.mrb[0].mxu0
    %4114 = vmatprep.mubr.f32.mxu0 %v3266
    %4115 = vmatmul.mubr.f32.gmra.mrb[0].mxu0 %v3265
    %v4116 = vpop.f32.mrb[0].mxu0
    %v4117 = vadd.f32 %v4042, %v4116
    %v4118 = vpop.f32.mrb[0].mxu0
    %4119 = vdwg.mxu0
    %4120 = vmatprep.subr.mxu0 0.0
    %4121 = vmatpush1.msra.mxu0 %v620
    %4122 = vmatprep.subr.mxu0 0.0
    %4123 = vmatpush1.msra.mxu0 %v621
    %4124 = vmatprep.subr.mxu0 0.0
    %4125 = vmatpush1.msra.mxu0 %v622
    %4126 = vmatprep.subr.mxu0 0.0
    %4127 = vmatpush1.msra.mxu0 %v623
    %4128 = vmatprep.subr.mxu0 0.0
    %4129 = vmatpush1.msra.mxu0 %v624
    %4130 = vmatprep.subr.mxu0 0.0
    %4131 = vmatpush1.msra.mxu0 %v625
    %4132 = vmatprep.subr.mxu0 0.0
    %4133 = vmatpush1.msra.mxu0 %v626
    %4134 = vmatprep.subr.mxu0 0.0
    %4135 = vmatpush1.msra.mxu0 %v627
    %4136 = vmatprep.subr.mxu0 0.0
    %4137 = vmatpush1.msra.mxu0 %v628
    %4138 = vmatprep.subr.mxu0 0.0
    %4139 = vmatpush1.msra.mxu0 %v629
    %4140 = vmatprep.subr.mxu0 0.0
    %4141 = vmatpush1.msra.mxu0 %v630
    %4142 = vmatprep.subr.mxu0 0.0
    %4143 = vmatpush1.msra.mxu0 %v631
    %4144 = vmatprep.subr.mxu0 0.0
    %4145 = vmatpush1.msra.mxu0 %v632
    %4146 = vmatprep.subr.mxu0 0.0
    %4147 = vmatpush1.msra.mxu0 %v633
    %4148 = vmatprep.subr.mxu0 0.0
    %4149 = vmatpush1.msra.mxu0 %v634
    %4150 = vmatprep.subr.mxu0 0.0
    %4151 = vmatpush1.msra.mxu0 %v635
    %4152 = vmatprep.subr.mxu0 0.0
    %4153 = vmatpush1.msra.mxu0 0.0
    %4154 = vmatprep.subr.mxu0 0.0
    %4155 = vmatpush1.msra.mxu0 0.0
    %4156 = vmatprep.subr.mxu0 0.0
    %4157 = vmatpush1.msra.mxu0 0.0
    %4158 = vmatprep.subr.mxu0 0.0
    %4159 = vmatpush1.msra.mxu0 0.0
    %4160 = vmatprep.subr.mxu0 0.0
    %4161 = vmatpush1.msra.mxu0 0.0
    %4162 = vmatprep.subr.mxu0 0.0
    %4163 = vmatpush1.msra.mxu0 0.0
    %4164 = vmatprep.subr.mxu0 0.0
    %4165 = vmatpush1.msra.mxu0 0.0
    %4166 = vmatprep.subr.mxu0 0.0
    %4167 = vmatpush1.msra.mxu0 0.0
    %4168 = vmatprep.subr.mxu0 0.0
    %4169 = vmatpush1.msra.mxu0 0.0
    %4170 = vmatprep.subr.mxu0 0.0
    %4171 = vmatpush1.msra.mxu0 0.0
    %4172 = vmatprep.subr.mxu0 0.0
    %4173 = vmatpush1.msra.mxu0 0.0
    %4174 = vmatprep.subr.mxu0 0.0
    %4175 = vmatpush1.msra.mxu0 0.0
    %4176 = vmatprep.subr.mxu0 0.0
    %4177 = vmatpush1.msra.mxu0 0.0
    %4178 = vmatprep.subr.mxu0 0.0
    %4179 = vmatpush1.msra.mxu0 0.0
    %4180 = vmatprep.subr.mxu0 0.0
    %4181 = vmatpush1.msra.mxu0 0.0
    %4182 = vmatprep.subr.mxu0 0.0
    %4183 = vmatpush1.msra.mxu0 0.0
    %4184 = vmatprep.mubr.f32.mxu0 0.0
    %4185 = vmatmul.mubr.f32.gmra.mrb[0].mxu0 %v3247
    %v4186 = vpop.f32.mrb[0].mxu0
    %v4187 = vadd.f32 %v4112, %v4186
    %v4188 = vpop.f32.mrb[0].mxu0
    %4189 = vmatprep.mubr.f32.mxu0 0.0
    %4190 = vmatmul.mubr.f32.gmra.mrb[0].mxu0 %v3267
    %v4191 = vpop.f32.mrb[0].mxu0
    %v4192 = vadd.f32 %v4117, %v4191
    %v4193 = vpop.f32.mrb[0].mxu0
    %4194 = vdwg.mxu0
    %vm4195 = vcmp.ge.s32.totalorder %v791, 24
    %vm4196 = vcmp.lt.s32.totalorder %v791, 32
    %vm4197 = vmand %vm4195, %vm4196
    %v4198 = vsel %vm4197, 1, 0
    %v4199 = vcvt.s32.f32 %v4198
    %v4200 = vmul.f32 %v4187, %v4199
    %v4201 = vmul.f32 %v4192, %v4199
    %v4202 = vadd.f32 %v3968, %v4200
    %v4203 = vadd.f32 %v3969, %v4201
    %v4204 = vlaneseq
    %v4205 = vshrl.u32 %v4204, 7
    %v4206 = vsub.s32 0, %v4205
    %v4207 = vrot.slane %v57, %v4206
    %vm4208 = vcmask 261120
    %v4210 = vsel %vm4208, %v4202, 0
    %v4213 = vsel %vm4208, %v4203, 0
    %4215 = vmatprep.subr.mxu0 0.0
    %4216 = vmatpush1.msra.mxu0 %v53
    %4217 = vmatprep.subr.mxu0 0.0
    %4218 = vmatpush1.msra.mxu0 %v54
    %4219 = vmatprep.subr.mxu0 0.0
    %4220 = vmatpush1.msra.mxu0 %v55
    %4221 = vmatprep.subr.mxu0 0.0
    %4222 = vmatpush1.msra.mxu0 %v56
    %4223 = vmatprep.subr.mxu0 0.0
    %4224 = vmatpush1.msra.mxu0 0.0
    %4225 = vmatprep.subr.mxu0 0.0
    %4226 = vmatpush1.msra.mxu0 0.0
    %4227 = vmatprep.subr.mxu0 0.0
    %4228 = vmatpush1.msra.mxu0 0.0
    %4229 = vmatprep.subr.mxu0 0.0
    %4230 = vmatpush1.msra.mxu0 0.0
    %4231 = vmatprep.subr.mxu0 0.0
    %4232 = vmatpush1.msra.mxu0 0.0
    %4233 = vmatprep.subr.mxu0 0.0
    %4234 = vmatpush1.msra.mxu0 0.0
    %4235 = vmatprep.subr.mxu0 0.0
    %4236 = vmatpush1.msra.mxu0 0.0
    %4237 = vmatprep.subr.mxu0 0.0
    %4238 = vmatpush1.msra.mxu0 0.0
    %4239 = vmatprep.subr.mxu0 0.0
    %4240 = vmatpush1.msra.mxu0 0.0
    %4241 = vmatprep.subr.mxu0 0.0
    %4242 = vmatpush1.msra.mxu0 0.0
    %4243 = vmatprep.subr.mxu0 0.0
    %4244 = vmatpush1.msra.mxu0 0.0
    %4245 = vmatprep.subr.mxu0 0.0
    %4246 = vmatpush1.msra.mxu0 0.0
    %4247 = vmatprep.subr.mxu0 0.0
    %4248 = vmatpush1.msra.mxu0 0.0
    %4249 = vmatprep.subr.mxu0 0.0
    %4250 = vmatpush1.msra.mxu0 0.0
    %4251 = vmatprep.subr.mxu0 0.0
    %4252 = vmatpush1.msra.mxu0 0.0
    %4253 = vmatprep.subr.mxu0 0.0
    %4254 = vmatpush1.msra.mxu0 0.0
    %4255 = vmatprep.subr.mxu0 0.0
    %4256 = vmatpush1.msra.mxu0 0.0
    %4257 = vmatprep.subr.mxu0 0.0
    %4258 = vmatpush1.msra.mxu0 0.0
    %4259 = vmatprep.subr.mxu0 0.0
    %4260 = vmatpush1.msra.mxu0 0.0
    %4261 = vmatprep.subr.mxu0 0.0
    %4262 = vmatpush1.msra.mxu0 0.0
    %4263 = vmatprep.subr.mxu0 0.0
    %4264 = vmatpush1.msra.mxu0 0.0
    %4265 = vmatprep.subr.mxu0 0.0
    %4266 = vmatpush1.msra.mxu0 0.0
    %4267 = vmatprep.subr.mxu0 0.0
    %4268 = vmatpush1.msra.mxu0 0.0
    %4269 = vmatprep.subr.mxu0 0.0
    %4270 = vmatpush1.msra.mxu0 0.0
    %4271 = vmatprep.subr.mxu0 0.0
    %4272 = vmatpush1.msra.mxu0 0.0
    %4273 = vmatprep.subr.mxu0 0.0
    %4274 = vmatpush1.msra.mxu0 0.0
    %4275 = vmatprep.subr.mxu0 0.0
    %4276 = vmatpush1.msra.mxu0 0.0
    %4277 = vmatprep.subr.mxu0 0.0
    %4278 = vmatpush1.msra.mxu0 0.0
    %4279 = vmatprep.mubr.f32.mxu0 0.0
    %4280 = vmatmul.mubr.f32.gmra.mrb[0].mxu0 %v4210
    %v4281 = vpop.f32.mrb[0].mxu0
    %v4282 = vadd.f32 %v4207, %v4281
    %v4283 = vpop.f32.mrb[0].mxu0
    %4284 = vmatprep.mubr.f32.mxu0 0.0
    %4285 = vmatmul.mubr.f32.gmra.mrb[0].mxu0 %v4213
    %v4286 = vpop.f32.mrb[0].mxu0
    %v4287 = vadd.f32 %v4207, %v4286
    %v4288 = vpop.f32.mrb[0].mxu0
    %4289 = vdwg.mxu0
    %4290 = vst.msk [vmem:[#allocation2] sm:$0xff] %vm4208, %v4282
    %4291 = vst.msk [vmem:[#allocation2 + $0x8] sm:$0xff] %vm4208, %v4287
    // Predicated region
    $region22: #{tpu_custom_call.1} parent=1 // pred_check
      _
    $region23: #{tpu_custom_call.1} parent=1 // pred_check_branch
      %4293 = sbr.rel (0) target = $region25
    $region24: #{tpu_custom_call.1} parent=1 // pred_region
      %s4295 = ssub.s32 256, 256
      %4296 = vsyncadd [#allocation3], %s4295
      %s4297 = sshll.u32 [#allocation2], 4
      %s4298 = int_to_ptr.vmem [resolvable:$true] %s4297
      %4303 = dma.vmem_to_hbm [thread:$0]  %s4298, 256, %s5, [#allocation3], 128, 128, 8
    $region25: #{tpu_custom_call.1} parent=1 // pred_fallthru
      _
    // Predicated region
    $region26: #{tpu_custom_call.1} parent=1 // pred_check
      _
    $region27: #{tpu_custom_call.1} parent=1 // pred_check_branch
      %4305 = sbr.rel (0) target = $region29
    $region28: #{tpu_custom_call.1} parent=1 // pred_region
      %4306 = dma.done [#allocation3], 256
    $region29: #{tpu_custom_call.1} parent=1 // pred_fallthru
      _
    %4307 = vsyncpa [#allocation3], 1

</llo_original>
